<compile_context>
chip_gen: v6e
topology: v6e:2x2x1
jax: 0.10.0
libtpu: 0.0.40
codegen_flags: <defaults>
</compile_context>

<pallas_src>
import math

import jax
import jax.numpy as jnp
from jax import lax
from jax.experimental import pallas as pl
from jax.experimental.pallas import tpu as pltpu

# ---------------- config (small, consistent with the module) ----------------
BATCH = 2
SEQ = 8            # query_len == key_len (self-attention)
D_MODEL = 32
NUM_HEADS = 4
D_HEAD = D_MODEL // NUM_HEADS
NUM_BUCKETS = 32
BIDIRECTIONAL = True   # autoregressive=False


# ---------------- relative position bias (plain-JAX glue) ----------------
def _relative_position_bucket(relative_position, bidirectional=True,
                              num_buckets=32, max_distance=128):
    relative_buckets = jnp.zeros_like(relative_position)
    if bidirectional:
        num_buckets //= 2
        relative_buckets = relative_buckets + (relative_position > 0).astype(jnp.int32) * num_buckets
        relative_position = jnp.abs(relative_position)
    else:
        relative_position = -jnp.minimum(relative_position, jnp.zeros_like(relative_position))
    max_exact = num_buckets // 2
    is_small = relative_position < max_exact
    # Guard log(0) for relative_position == 0 (value is discarded by the where below,
    # but the int cast of -inf is implementation-defined).
    safe_rp = jnp.maximum(relative_position, 1)
    rp_if_large = max_exact + (
        jnp.log(safe_rp.astype(jnp.float32) / max_exact)
        / math.log(max_distance / max_exact)
        * (num_buckets - max_exact)
    ).astype(jnp.int32)
    rp_if_large = jnp.minimum(rp_if_large, jnp.full_like(rp_if_large, num_buckets - 1))
    relative_buckets = relative_buckets + jnp.where(is_small, relative_position, rp_if_large)
    return relative_buckets


def compute_bias(rel_bias_table, query_length, key_length):
    """rel_bias_table: (num_buckets, num_heads) -> (1, H, Lq, Lk)."""
    context_position = jnp.arange(query_length, dtype=jnp.int32)[:, None]
    memory_position = jnp.arange(key_length, dtype=jnp.int32)[None, :]
    relative_position = memory_position - context_position
    buckets = _relative_position_bucket(
        relative_position, bidirectional=BIDIRECTIONAL, num_buckets=NUM_BUCKETS)
    values = rel_bias_table[buckets]                 # (Lq, Lk, H)
    values = jnp.transpose(values, (2, 0, 1))[None]  # (1, H, Lq, Lk)
    return values


# ---------------- Pallas kernel: whole batch in one invocation ----------------
def t5_attention_kernel(x_ref, wq_ref, wk_ref, wv_ref, wo_ref, bm_ref,
                        ctx_ref, prob_ref):
    # x_ref:  (B*L, D)
    # wq/wk/wv_ref: (H, D, d_head)   wo_ref: (H, d_head, D)
    # bm_ref: (B*H*L, L)  (position bias + attention mask, pre-fused & pre-flattened)
    x = x_ref[...]  # (B*L, D)

    # Per-head projections: leading-axis weight indexing, no lane slicing of a fused result.
    qs = [jnp.dot(x, wq_ref[h], preferred_element_type=jnp.float32) for h in range(NUM_HEADS)]
    ks = [jnp.dot(x, wk_ref[h], preferred_element_type=jnp.float32) for h in range(NUM_HEADS)]
    vs = [jnp.dot(x, wv_ref[h], preferred_element_type=jnp.float32) for h in range(NUM_HEADS)]

    # Raw scores for every (b, h), stacked along sublanes -> (B*H*L, L).
    # NOTE: no 1/sqrt(d_head) scaling -- matches the reference forward exactly.
    contract_last = (((1,), (1,)), ((), ()))   # q @ k^T without materializing k^T
    score_rows = []
    for b in range(BATCH):          # small static loops (B=2, H=4)
        lo, hi = b * SEQ, (b + 1) * SEQ
        for h in range(NUM_HEADS):
            score_rows.append(
                lax.dot_general(qs[h][lo:hi], ks[h][lo:hi], contract_last,
                                preferred_element_type=jnp.float32))    # (L, L)
    scores = jnp.concatenate(score_rows, axis=0) + bm_ref[...]          # (B*H*L, L)

    # One batched softmax over all (b, h) tiles: single max / exp / sum / reciprocal.
    m = jnp.max(scores, axis=-1, keepdims=True)
    p = jnp.exp(scores - m)
    p = p * pl.reciprocal(jnp.sum(p, axis=-1, keepdims=True), approx=True)
    prob_ref[...] = p               # single coalesced store, already in output layout

    # Context + output projection, accumulated per head (sublane-indexed slices only).
    ctx_rows = []
    for b in range(BATCH):
        lo, hi = b * SEQ, (b + 1) * SEQ
        acc = jnp.zeros((SEQ, D_MODEL), jnp.float32)
        for h in range(NUM_HEADS):
            r0 = (b * NUM_HEADS + h) * SEQ
            ph = p[r0:r0 + SEQ]                                          # (L, L)
            ctx_h = jnp.dot(ph, vs[h][lo:hi], preferred_element_type=jnp.float32)  # (L, dh)
            acc = acc + jnp.dot(ctx_h, wo_ref[h], preferred_element_type=jnp.float32)
        ctx_rows.append(acc)

    ctx_ref[...] = jnp.concatenate(ctx_rows, axis=0)     # (B*L, D), single store


def t5_attention(x, wq, wk, wv, wo, position_bias, attention_mask):
    """x: (B, L, D); weights: (D, D) input-major (y = x @ W); bias: (1,H,L,L); mask: (B,1,L,L)."""
    B, L, D = x.shape
    H, dh = NUM_HEADS, D_HEAD

    # Layout plumbing done once in the wrapper (free-ish XLA reshapes/transposes).
    x2d = x.reshape(B * L, D)
    wq3 = wq.reshape(D, H, dh).transpose(1, 0, 2)   # (H, D, dh)
    wk3 = wk.reshape(D, H, dh).transpose(1, 0, 2)
    wv3 = wv.reshape(D, H, dh).transpose(1, 0, 2)
    wo3 = wo.reshape(H, dh, D)                      # (H, dh, D)
    # Pre-fuse and pre-flatten bias+mask to the kernel's (B*H*L, L) score layout.
    bias_mask = (position_bias + attention_mask).astype(jnp.float32).reshape(B * H * L, L)

    def full(shape):
        return pl.BlockSpec(shape, lambda i, _s=shape: (0,) * len(_s))

    ctx2d, prob2d = pl.pallas_call(
        t5_attention_kernel,
        out_shape=(
            jax.ShapeDtypeStruct((B * L, D), jnp.float32),        # context, flattened
            jax.ShapeDtypeStruct((B * H * L, L), jnp.float32),    # attn_prob, flattened
        ),
        grid_spec=pltpu.PrefetchScalarGridSpec(
            num_scalar_prefetch=0,
            grid=(1,),                                            # collapsed: one step does everything
            in_specs=[
                full((B * L, D)),          # x
                full((H, D, dh)),          # wq
                full((H, D, dh)),          # wk
                full((H, D, dh)),          # wv
                full((H, dh, D)),          # wo
                full((B * H * L, L)),      # fused position_bias + attention_mask
            ],
            out_specs=[
                full((B * L, D)),
                full((B * H * L, L)),
            ],
        ),
        compiler_params=pltpu.CompilerParams(dimension_semantics=("arbitrary",)),
    )(x2d, wq3, wk3, wv3, wo3, bias_mask)

    ctx = ctx2d.reshape(B, L, D)
    attn_prob = prob2d.reshape(B, H, L, L)
    return ctx, attn_prob


# ---------------- pure-JAX reference for verification ----------------
def t5_attention_ref(x, wq, wk, wv, wo, position_bias, attention_mask):
    B, L, D = x.shape
    q = (x @ wq).reshape(B, L, NUM_HEADS, D_HEAD).transpose(0, 2, 1, 3)
    k = (x @ wk).reshape(B, L, NUM_HEADS, D_HEAD).transpose(0, 2, 1, 3)
    v = (x @ wv).reshape(B, L, NUM_HEADS, D_HEAD).transpose(0, 2, 1, 3)
    scores = jnp.einsum("bhqd,bhkd->bhqk", q, k)
    scores = scores + (position_bias + attention_mask)
    p = jax.nn.softmax(scores, axis=-1)
    ctx = jnp.einsum("bhqk,bhkd->bhqd", p, v)
    ctx = ctx.transpose(0, 2, 1, 3).reshape(B, L, D)
    return ctx @ wo, p


if __name__ == "__main__":
    key = jax.random.PRNGKey(0)
    kx, kq, kk, kv, ko, kb, km = jax.random.split(key, 7)

    x = jax.random.normal(kx, (BATCH, SEQ, D_MODEL), dtype=jnp.float32)
    wq = 0.05 * jax.random.normal(kq, (D_MODEL, D_MODEL), dtype=jnp.float32)
    wk = 0.05 * jax.random.normal(kk, (D_MODEL, D_MODEL), dtype=jnp.float32)
    wv = 0.05 * jax.random.normal(kv, (D_MODEL, D_MODEL), dtype=jnp.float32)
    wo = 0.05 * jax.random.normal(ko, (D_MODEL, D_MODEL), dtype=jnp.float32)
    rel_bias_table = 0.1 * jax.random.normal(kb, (NUM_BUCKETS, NUM_HEADS), dtype=jnp.float32)
    attention_mask = 0.1 * jax.random.normal(km, (BATCH, 1, SEQ, SEQ), dtype=jnp.float32)

    position_bias = compute_bias(rel_bias_table, SEQ, SEQ)  # (1, H, L, L)

    ctx, attn_prob = t5_attention(x, wq, wk, wv, wo, position_bias, attention_mask)
    jax.block_until_ready((ctx, attn_prob))

    ctx_ref, prob_ref = t5_attention_ref(x, wq, wk, wv, wo, position_bias, attention_mask)
    # Tolerances widened slightly to accommodate the EUP approx reciprocal in the softmax.
    assert jnp.allclose(ctx, ctx_ref, atol=2e-3, rtol=2e-3), "context mismatch"
    assert jnp.allclose(attn_prob, prob_ref, atol=2e-3, rtol=2e-3), "attn_prob mismatch"

    print("KERNEL_OK")
</pallas_src>

<mosaic_0001>
module attributes {stable_mosaic.version = 11 : i64} {
  func.func @t5_attention_kernel(%arg0: i32, %arg1: memref<16x32xf32, #tpu.memory_space<vmem>>, %arg2: memref<4x32x8xf32, #tpu.memory_space<vmem>>, %arg3: memref<4x32x8xf32, #tpu.memory_space<vmem>>, %arg4: memref<4x32x8xf32, #tpu.memory_space<vmem>>, %arg5: memref<4x8x32xf32, #tpu.memory_space<vmem>>, %arg6: memref<64x8xf32, #tpu.memory_space<vmem>>, %arg7: memref<16x32xf32, #tpu.memory_space<vmem>>, %arg8: memref<64x8xf32, #tpu.memory_space<vmem>>) attributes {dimension_semantics = [#tpu.dimension_semantics<arbitrary>], iteration_bounds = array<i64: 1>, scalar_prefetch = 0 : i64, scratch_operands = 0 : i64, tpu.core_type = #tpu.core_type<tc>, window_params = [{pipeline_mode = #tpu.pipeline_mode<synchronous>, transform_indices = @transform_0, window_bounds = array<i64: 16, 32>}, {pipeline_mode = #tpu.pipeline_mode<synchronous>, transform_indices = @transform_1, window_bounds = array<i64: 4, 32, 8>}, {pipeline_mode = #tpu.pipeline_mode<synchronous>, transform_indices = @transform_2, window_bounds = array<i64: 4, 32, 8>}, {pipeline_mode = #tpu.pipeline_mode<synchronous>, transform_indices = @transform_3, window_bounds = array<i64: 4, 32, 8>}, {pipeline_mode = #tpu.pipeline_mode<synchronous>, transform_indices = @transform_4, window_bounds = array<i64: 4, 8, 32>}, {pipeline_mode = #tpu.pipeline_mode<synchronous>, transform_indices = @transform_5, window_bounds = array<i64: 64, 8>}, {pipeline_mode = #tpu.pipeline_mode<synchronous>, transform_indices = @transform_6, window_bounds = array<i64: 16, 32>}, {pipeline_mode = #tpu.pipeline_mode<synchronous>, transform_indices = @transform_7, window_bounds = array<i64: 64, 8>}]} {
    %c0 = arith.constant 0 : index
    %c0_0 = arith.constant 0 : index
    %0 = vector.load %arg1[%c0, %c0_0] : memref<16x32xf32, #tpu.memory_space<vmem>>, vector<16x32xf32>
    %c0_1 = arith.constant 0 : index
    %c0_2 = arith.constant 0 : index
    %c0_3 = arith.constant 0 : index
    %1 = vector.load %arg2[%c0_1, %c0_2, %c0_3] : memref<4x32x8xf32, #tpu.memory_space<vmem>>, vector<1x32x8xf32>
    %2 = vector.shape_cast %1 : vector<1x32x8xf32> to vector<32x8xf32>
    %cst = arith.constant dense<0.000000e+00> : vector<16x8xf32>
    %3 = tpu.matmul %0, %2, %cst {dimension_numbers = #tpu.dot_dimension_numbers<[1], [0], [0], [1], [0, 0, 1, 1], [], []>} : vector<16x32xf32>, vector<32x8xf32>, vector<16x8xf32> -> vector<16x8xf32>
    %c1 = arith.constant 1 : index
    %c0_4 = arith.constant 0 : index
    %c0_5 = arith.constant 0 : index
    %4 = vector.load %arg2[%c1, %c0_4, %c0_5] : memref<4x32x8xf32, #tpu.memory_space<vmem>>, vector<1x32x8xf32>
    %5 = vector.shape_cast %4 : vector<1x32x8xf32> to vector<32x8xf32>
    %cst_6 = arith.constant dense<0.000000e+00> : vector<16x8xf32>
    %6 = tpu.matmul %0, %5, %cst_6 {dimension_numbers = #tpu.dot_dimension_numbers<[1], [0], [0], [1], [0, 0, 1, 1], [], []>} : vector<16x32xf32>, vector<32x8xf32>, vector<16x8xf32> -> vector<16x8xf32>
    %c2 = arith.constant 2 : index
    %c0_7 = arith.constant 0 : index
    %c0_8 = arith.constant 0 : index
    %7 = vector.load %arg2[%c2, %c0_7, %c0_8] : memref<4x32x8xf32, #tpu.memory_space<vmem>>, vector<1x32x8xf32>
    %8 = vector.shape_cast %7 : vector<1x32x8xf32> to vector<32x8xf32>
    %cst_9 = arith.constant dense<0.000000e+00> : vector<16x8xf32>
    %9 = tpu.matmul %0, %8, %cst_9 {dimension_numbers = #tpu.dot_dimension_numbers<[1], [0], [0], [1], [0, 0, 1, 1], [], []>} : vector<16x32xf32>, vector<32x8xf32>, vector<16x8xf32> -> vector<16x8xf32>
    %c3 = arith.constant 3 : index
    %c0_10 = arith.constant 0 : index
    %c0_11 = arith.constant 0 : index
    %10 = vector.load %arg2[%c3, %c0_10, %c0_11] : memref<4x32x8xf32, #tpu.memory_space<vmem>>, vector<1x32x8xf32>
    %11 = vector.shape_cast %10 : vector<1x32x8xf32> to vector<32x8xf32>
    %cst_12 = arith.constant dense<0.000000e+00> : vector<16x8xf32>
    %12 = tpu.matmul %0, %11, %cst_12 {dimension_numbers = #tpu.dot_dimension_numbers<[1], [0], [0], [1], [0, 0, 1, 1], [], []>} : vector<16x32xf32>, vector<32x8xf32>, vector<16x8xf32> -> vector<16x8xf32>
    %c0_13 = arith.constant 0 : index
    %c0_14 = arith.constant 0 : index
    %c0_15 = arith.constant 0 : index
    %13 = vector.load %arg3[%c0_13, %c0_14, %c0_15] : memref<4x32x8xf32, #tpu.memory_space<vmem>>, vector<1x32x8xf32>
    %14 = vector.shape_cast %13 : vector<1x32x8xf32> to vector<32x8xf32>
    %cst_16 = arith.constant dense<0.000000e+00> : vector<16x8xf32>
    %15 = tpu.matmul %0, %14, %cst_16 {dimension_numbers = #tpu.dot_dimension_numbers<[1], [0], [0], [1], [0, 0, 1, 1], [], []>} : vector<16x32xf32>, vector<32x8xf32>, vector<16x8xf32> -> vector<16x8xf32>
    %c1_17 = arith.constant 1 : index
    %c0_18 = arith.constant 0 : index
    %c0_19 = arith.constant 0 : index
    %16 = vector.load %arg3[%c1_17, %c0_18, %c0_19] : memref<4x32x8xf32, #tpu.memory_space<vmem>>, vector<1x32x8xf32>
    %17 = vector.shape_cast %16 : vector<1x32x8xf32> to vector<32x8xf32>
    %cst_20 = arith.constant dense<0.000000e+00> : vector<16x8xf32>
    %18 = tpu.matmul %0, %17, %cst_20 {dimension_numbers = #tpu.dot_dimension_numbers<[1], [0], [0], [1], [0, 0, 1, 1], [], []>} : vector<16x32xf32>, vector<32x8xf32>, vector<16x8xf32> -> vector<16x8xf32>
    %c2_21 = arith.constant 2 : index
    %c0_22 = arith.constant 0 : index
    %c0_23 = arith.constant 0 : index
    %19 = vector.load %arg3[%c2_21, %c0_22, %c0_23] : memref<4x32x8xf32, #tpu.memory_space<vmem>>, vector<1x32x8xf32>
    %20 = vector.shape_cast %19 : vector<1x32x8xf32> to vector<32x8xf32>
    %cst_24 = arith.constant dense<0.000000e+00> : vector<16x8xf32>
    %21 = tpu.matmul %0, %20, %cst_24 {dimension_numbers = #tpu.dot_dimension_numbers<[1], [0], [0], [1], [0, 0, 1, 1], [], []>} : vector<16x32xf32>, vector<32x8xf32>, vector<16x8xf32> -> vector<16x8xf32>
    %c3_25 = arith.constant 3 : index
    %c0_26 = arith.constant 0 : index
    %c0_27 = arith.constant 0 : index
    %22 = vector.load %arg3[%c3_25, %c0_26, %c0_27] : memref<4x32x8xf32, #tpu.memory_space<vmem>>, vector<1x32x8xf32>
    %23 = vector.shape_cast %22 : vector<1x32x8xf32> to vector<32x8xf32>
    %cst_28 = arith.constant dense<0.000000e+00> : vector<16x8xf32>
    %24 = tpu.matmul %0, %23, %cst_28 {dimension_numbers = #tpu.dot_dimension_numbers<[1], [0], [0], [1], [0, 0, 1, 1], [], []>} : vector<16x32xf32>, vector<32x8xf32>, vector<16x8xf32> -> vector<16x8xf32>
    %c0_29 = arith.constant 0 : index
    %c0_30 = arith.constant 0 : index
    %c0_31 = arith.constant 0 : index
    %25 = vector.load %arg4[%c0_29, %c0_30, %c0_31] : memref<4x32x8xf32, #tpu.memory_space<vmem>>, vector<1x32x8xf32>
    %26 = vector.shape_cast %25 : vector<1x32x8xf32> to vector<32x8xf32>
    %cst_32 = arith.constant dense<0.000000e+00> : vector<16x8xf32>
    %27 = tpu.matmul %0, %26, %cst_32 {dimension_numbers = #tpu.dot_dimension_numbers<[1], [0], [0], [1], [0, 0, 1, 1], [], []>} : vector<16x32xf32>, vector<32x8xf32>, vector<16x8xf32> -> vector<16x8xf32>
    %c1_33 = arith.constant 1 : index
    %c0_34 = arith.constant 0 : index
    %c0_35 = arith.constant 0 : index
    %28 = vector.load %arg4[%c1_33, %c0_34, %c0_35] : memref<4x32x8xf32, #tpu.memory_space<vmem>>, vector<1x32x8xf32>
    %29 = vector.shape_cast %28 : vector<1x32x8xf32> to vector<32x8xf32>
    %cst_36 = arith.constant dense<0.000000e+00> : vector<16x8xf32>
    %30 = tpu.matmul %0, %29, %cst_36 {dimension_numbers = #tpu.dot_dimension_numbers<[1], [0], [0], [1], [0, 0, 1, 1], [], []>} : vector<16x32xf32>, vector<32x8xf32>, vector<16x8xf32> -> vector<16x8xf32>
    %c2_37 = arith.constant 2 : index
    %c0_38 = arith.constant 0 : index
    %c0_39 = arith.constant 0 : index
    %31 = vector.load %arg4[%c2_37, %c0_38, %c0_39] : memref<4x32x8xf32, #tpu.memory_space<vmem>>, vector<1x32x8xf32>
    %32 = vector.shape_cast %31 : vector<1x32x8xf32> to vector<32x8xf32>
    %cst_40 = arith.constant dense<0.000000e+00> : vector<16x8xf32>
    %33 = tpu.matmul %0, %32, %cst_40 {dimension_numbers = #tpu.dot_dimension_numbers<[1], [0], [0], [1], [0, 0, 1, 1], [], []>} : vector<16x32xf32>, vector<32x8xf32>, vector<16x8xf32> -> vector<16x8xf32>
    %c3_41 = arith.constant 3 : index
    %c0_42 = arith.constant 0 : index
    %c0_43 = arith.constant 0 : index
    %34 = vector.load %arg4[%c3_41, %c0_42, %c0_43] : memref<4x32x8xf32, #tpu.memory_space<vmem>>, vector<1x32x8xf32>
    %35 = vector.shape_cast %34 : vector<1x32x8xf32> to vector<32x8xf32>
    %cst_44 = arith.constant dense<0.000000e+00> : vector<16x8xf32>
    %36 = tpu.matmul %0, %35, %cst_44 {dimension_numbers = #tpu.dot_dimension_numbers<[1], [0], [0], [1], [0, 0, 1, 1], [], []>} : vector<16x32xf32>, vector<32x8xf32>, vector<16x8xf32> -> vector<16x8xf32>
    %37 = vector.extract_strided_slice %3 {offsets = [0, 0], sizes = [8, 8], strides = [1, 1]} : vector<16x8xf32> to vector<8x8xf32>
    %38 = vector.extract_strided_slice %15 {offsets = [0, 0], sizes = [8, 8], strides = [1, 1]} : vector<16x8xf32> to vector<8x8xf32>
    %cst_45 = arith.constant dense<0.000000e+00> : vector<8x8xf32>
    %39 = tpu.matmul %37, %38, %cst_45 {dimension_numbers = #tpu.dot_dimension_numbers<[1], [1], [0], [0], [0, 0, 1, 0], [], []>} : vector<8x8xf32>, vector<8x8xf32>, vector<8x8xf32> -> vector<8x8xf32>
    %40 = vector.extract_strided_slice %6 {offsets = [0, 0], sizes = [8, 8], strides = [1, 1]} : vector<16x8xf32> to vector<8x8xf32>
    %41 = vector.extract_strided_slice %18 {offsets = [0, 0], sizes = [8, 8], strides = [1, 1]} : vector<16x8xf32> to vector<8x8xf32>
    %cst_46 = arith.constant dense<0.000000e+00> : vector<8x8xf32>
    %42 = tpu.matmul %40, %41, %cst_46 {dimension_numbers = #tpu.dot_dimension_numbers<[1], [1], [0], [0], [0, 0, 1, 0], [], []>} : vector<8x8xf32>, vector<8x8xf32>, vector<8x8xf32> -> vector<8x8xf32>
    %43 = vector.extract_strided_slice %9 {offsets = [0, 0], sizes = [8, 8], strides = [1, 1]} : vector<16x8xf32> to vector<8x8xf32>
    %44 = vector.extract_strided_slice %21 {offsets = [0, 0], sizes = [8, 8], strides = [1, 1]} : vector<16x8xf32> to vector<8x8xf32>
    %cst_47 = arith.constant dense<0.000000e+00> : vector<8x8xf32>
    %45 = tpu.matmul %43, %44, %cst_47 {dimension_numbers = #tpu.dot_dimension_numbers<[1], [1], [0], [0], [0, 0, 1, 0], [], []>} : vector<8x8xf32>, vector<8x8xf32>, vector<8x8xf32> -> vector<8x8xf32>
    %46 = vector.extract_strided_slice %12 {offsets = [0, 0], sizes = [8, 8], strides = [1, 1]} : vector<16x8xf32> to vector<8x8xf32>
    %47 = vector.extract_strided_slice %24 {offsets = [0, 0], sizes = [8, 8], strides = [1, 1]} : vector<16x8xf32> to vector<8x8xf32>
    %cst_48 = arith.constant dense<0.000000e+00> : vector<8x8xf32>
    %48 = tpu.matmul %46, %47, %cst_48 {dimension_numbers = #tpu.dot_dimension_numbers<[1], [1], [0], [0], [0, 0, 1, 0], [], []>} : vector<8x8xf32>, vector<8x8xf32>, vector<8x8xf32> -> vector<8x8xf32>
    %49 = vector.extract_strided_slice %3 {offsets = [8, 0], sizes = [8, 8], strides = [1, 1]} : vector<16x8xf32> to vector<8x8xf32>
    %50 = vector.extract_strided_slice %15 {offsets = [8, 0], sizes = [8, 8], strides = [1, 1]} : vector<16x8xf32> to vector<8x8xf32>
    %cst_49 = arith.constant dense<0.000000e+00> : vector<8x8xf32>
    %51 = tpu.matmul %49, %50, %cst_49 {dimension_numbers = #tpu.dot_dimension_numbers<[1], [1], [0], [0], [0, 0, 1, 0], [], []>} : vector<8x8xf32>, vector<8x8xf32>, vector<8x8xf32> -> vector<8x8xf32>
    %52 = vector.extract_strided_slice %6 {offsets = [8, 0], sizes = [8, 8], strides = [1, 1]} : vector<16x8xf32> to vector<8x8xf32>
    %53 = vector.extract_strided_slice %18 {offsets = [8, 0], sizes = [8, 8], strides = [1, 1]} : vector<16x8xf32> to vector<8x8xf32>
    %cst_50 = arith.constant dense<0.000000e+00> : vector<8x8xf32>
    %54 = tpu.matmul %52, %53, %cst_50 {dimension_numbers = #tpu.dot_dimension_numbers<[1], [1], [0], [0], [0, 0, 1, 0], [], []>} : vector<8x8xf32>, vector<8x8xf32>, vector<8x8xf32> -> vector<8x8xf32>
    %55 = vector.extract_strided_slice %9 {offsets = [8, 0], sizes = [8, 8], strides = [1, 1]} : vector<16x8xf32> to vector<8x8xf32>
    %56 = vector.extract_strided_slice %21 {offsets = [8, 0], sizes = [8, 8], strides = [1, 1]} : vector<16x8xf32> to vector<8x8xf32>
    %cst_51 = arith.constant dense<0.000000e+00> : vector<8x8xf32>
    %57 = tpu.matmul %55, %56, %cst_51 {dimension_numbers = #tpu.dot_dimension_numbers<[1], [1], [0], [0], [0, 0, 1, 0], [], []>} : vector<8x8xf32>, vector<8x8xf32>, vector<8x8xf32> -> vector<8x8xf32>
    %58 = vector.extract_strided_slice %12 {offsets = [8, 0], sizes = [8, 8], strides = [1, 1]} : vector<16x8xf32> to vector<8x8xf32>
    %59 = vector.extract_strided_slice %24 {offsets = [8, 0], sizes = [8, 8], strides = [1, 1]} : vector<16x8xf32> to vector<8x8xf32>
    %cst_52 = arith.constant dense<0.000000e+00> : vector<8x8xf32>
    %60 = tpu.matmul %58, %59, %cst_52 {dimension_numbers = #tpu.dot_dimension_numbers<[1], [1], [0], [0], [0, 0, 1, 0], [], []>} : vector<8x8xf32>, vector<8x8xf32>, vector<8x8xf32> -> vector<8x8xf32>
    %61 = tpu.concatenate %39, %42, %45, %48, %51, %54, %57, %60 in 0 : vector<8x8xf32>, vector<8x8xf32>, vector<8x8xf32>, vector<8x8xf32>, vector<8x8xf32>, vector<8x8xf32>, vector<8x8xf32>, vector<8x8xf32> -> vector<64x8xf32>
    %c0_53 = arith.constant 0 : index
    %c0_54 = arith.constant 0 : index
    %62 = vector.load %arg6[%c0_53, %c0_54] : memref<64x8xf32, #tpu.memory_space<vmem>>, vector<64x8xf32>
    %63 = arith.addf %61, %62 : vector<64x8xf32>
    %cst_55 = arith.constant dense<0xFF800000> : vector<64xf32>
    %64 = vector.multi_reduction <maximumf>, %63, %cst_55 [1] : vector<64x8xf32> to vector<64xf32>
    %65 = vector.shape_cast %64 : vector<64xf32> to vector<64x1xf32>
    %66 = vector.broadcast %65 : vector<64x1xf32> to vector<64x8xf32>
    %67 = arith.subf %63, %66 : vector<64x8xf32>
    %68 = math.exp %67 : vector<64x8xf32>
    %cst_56 = arith.constant dense<0.000000e+00> : vector<64xf32>
    %69 = vector.multi_reduction <add>, %68, %cst_56 [1] : vector<64x8xf32> to vector<64xf32>
    %70 = vector.shape_cast %69 : vector<64xf32> to vector<64x1xf32>
    %71 = tpu.reciprocal %70 {approx = true} : vector<64x1xf32> -> vector<64x1xf32>
    %72 = vector.broadcast %71 : vector<64x1xf32> to vector<64x8xf32>
    %73 = arith.mulf %68, %72 : vector<64x8xf32>
    %c0_57 = arith.constant 0 : index
    %c0_58 = arith.constant 0 : index
    %74 = vector.load %arg8[%c0_57, %c0_58] : memref<64x8xf32, #tpu.memory_space<vmem>>, vector<64x8xf32>
    tpu.vector_store %arg8[%c0_57, %c0_58], %73 {strides = array<i32>} : memref<64x8xf32, #tpu.memory_space<vmem>>, vector<64x8xf32>,
    %cst_59 = arith.constant 0.000000e+00 : f32
    %75 = vector.broadcast %cst_59 : f32 to vector<8x32xf32>
    %76 = vector.extract_strided_slice %73 {offsets = [0, 0], sizes = [8, 8], strides = [1, 1]} : vector<64x8xf32> to vector<8x8xf32>
    %77 = vector.extract_strided_slice %27 {offsets = [0, 0], sizes = [8, 8], strides = [1, 1]} : vector<16x8xf32> to vector<8x8xf32>
    %cst_60 = arith.constant dense<0.000000e+00> : vector<8x8xf32>
    %78 = tpu.matmul %76, %77, %cst_60 {dimension_numbers = #tpu.dot_dimension_numbers<[1], [0], [0], [1], [0, 0, 1, 1], [], []>} : vector<8x8xf32>, vector<8x8xf32>, vector<8x8xf32> -> vector<8x8xf32>
    %c0_61 = arith.constant 0 : index
    %c0_62 = arith.constant 0 : index
    %c0_63 = arith.constant 0 : index
    %79 = vector.load %arg5[%c0_61, %c0_62, %c0_63] : memref<4x8x32xf32, #tpu.memory_space<vmem>>, vector<1x8x32xf32>
    %80 = vector.shape_cast %79 : vector<1x8x32xf32> to vector<8x32xf32>
    %cst_64 = arith.constant dense<0.000000e+00> : vector<8x32xf32>
    %81 = tpu.matmul %78, %80, %cst_64 {dimension_numbers = #tpu.dot_dimension_numbers<[1], [0], [0], [1], [0, 0, 1, 1], [], []>} : vector<8x8xf32>, vector<8x32xf32>, vector<8x32xf32> -> vector<8x32xf32>
    %82 = arith.addf %75, %81 : vector<8x32xf32>
    %83 = vector.extract_strided_slice %73 {offsets = [8, 0], sizes = [8, 8], strides = [1, 1]} : vector<64x8xf32> to vector<8x8xf32>
    %84 = vector.extract_strided_slice %30 {offsets = [0, 0], sizes = [8, 8], strides = [1, 1]} : vector<16x8xf32> to vector<8x8xf32>
    %cst_65 = arith.constant dense<0.000000e+00> : vector<8x8xf32>
    %85 = tpu.matmul %83, %84, %cst_65 {dimension_numbers = #tpu.dot_dimension_numbers<[1], [0], [0], [1], [0, 0, 1, 1], [], []>} : vector<8x8xf32>, vector<8x8xf32>, vector<8x8xf32> -> vector<8x8xf32>
    %c1_66 = arith.constant 1 : index
    %c0_67 = arith.constant 0 : index
    %c0_68 = arith.constant 0 : index
    %86 = vector.load %arg5[%c1_66, %c0_67, %c0_68] : memref<4x8x32xf32, #tpu.memory_space<vmem>>, vector<1x8x32xf32>
    %87 = vector.shape_cast %86 : vector<1x8x32xf32> to vector<8x32xf32>
    %cst_69 = arith.constant dense<0.000000e+00> : vector<8x32xf32>
    %88 = tpu.matmul %85, %87, %cst_69 {dimension_numbers = #tpu.dot_dimension_numbers<[1], [0], [0], [1], [0, 0, 1, 1], [], []>} : vector<8x8xf32>, vector<8x32xf32>, vector<8x32xf32> -> vector<8x32xf32>
    %89 = arith.addf %82, %88 : vector<8x32xf32>
    %90 = vector.extract_strided_slice %73 {offsets = [16, 0], sizes = [8, 8], strides = [1, 1]} : vector<64x8xf32> to vector<8x8xf32>
    %91 = vector.extract_strided_slice %33 {offsets = [0, 0], sizes = [8, 8], strides = [1, 1]} : vector<16x8xf32> to vector<8x8xf32>
    %cst_70 = arith.constant dense<0.000000e+00> : vector<8x8xf32>
    %92 = tpu.matmul %90, %91, %cst_70 {dimension_numbers = #tpu.dot_dimension_numbers<[1], [0], [0], [1], [0, 0, 1, 1], [], []>} : vector<8x8xf32>, vector<8x8xf32>, vector<8x8xf32> -> vector<8x8xf32>
    %c2_71 = arith.constant 2 : index
    %c0_72 = arith.constant 0 : index
    %c0_73 = arith.constant 0 : index
    %93 = vector.load %arg5[%c2_71, %c0_72, %c0_73] : memref<4x8x32xf32, #tpu.memory_space<vmem>>, vector<1x8x32xf32>
    %94 = vector.shape_cast %93 : vector<1x8x32xf32> to vector<8x32xf32>
    %cst_74 = arith.constant dense<0.000000e+00> : vector<8x32xf32>
    %95 = tpu.matmul %92, %94, %cst_74 {dimension_numbers = #tpu.dot_dimension_numbers<[1], [0], [0], [1], [0, 0, 1, 1], [], []>} : vector<8x8xf32>, vector<8x32xf32>, vector<8x32xf32> -> vector<8x32xf32>
    %96 = arith.addf %89, %95 : vector<8x32xf32>
    %97 = vector.extract_strided_slice %73 {offsets = [24, 0], sizes = [8, 8], strides = [1, 1]} : vector<64x8xf32> to vector<8x8xf32>
    %98 = vector.extract_strided_slice %36 {offsets = [0, 0], sizes = [8, 8], strides = [1, 1]} : vector<16x8xf32> to vector<8x8xf32>
    %cst_75 = arith.constant dense<0.000000e+00> : vector<8x8xf32>
    %99 = tpu.matmul %97, %98, %cst_75 {dimension_numbers = #tpu.dot_dimension_numbers<[1], [0], [0], [1], [0, 0, 1, 1], [], []>} : vector<8x8xf32>, vector<8x8xf32>, vector<8x8xf32> -> vector<8x8xf32>
    %c3_76 = arith.constant 3 : index
    %c0_77 = arith.constant 0 : index
    %c0_78 = arith.constant 0 : index
    %100 = vector.load %arg5[%c3_76, %c0_77, %c0_78] : memref<4x8x32xf32, #tpu.memory_space<vmem>>, vector<1x8x32xf32>
    %101 = vector.shape_cast %100 : vector<1x8x32xf32> to vector<8x32xf32>
    %cst_79 = arith.constant dense<0.000000e+00> : vector<8x32xf32>
    %102 = tpu.matmul %99, %101, %cst_79 {dimension_numbers = #tpu.dot_dimension_numbers<[1], [0], [0], [1], [0, 0, 1, 1], [], []>} : vector<8x8xf32>, vector<8x32xf32>, vector<8x32xf32> -> vector<8x32xf32>
    %103 = arith.addf %96, %102 : vector<8x32xf32>
    %cst_80 = arith.constant 0.000000e+00 : f32
    %104 = vector.broadcast %cst_80 : f32 to vector<8x32xf32>
    %105 = vector.extract_strided_slice %73 {offsets = [32, 0], sizes = [8, 8], strides = [1, 1]} : vector<64x8xf32> to vector<8x8xf32>
    %106 = vector.extract_strided_slice %27 {offsets = [8, 0], sizes = [8, 8], strides = [1, 1]} : vector<16x8xf32> to vector<8x8xf32>
    %cst_81 = arith.constant dense<0.000000e+00> : vector<8x8xf32>
    %107 = tpu.matmul %105, %106, %cst_81 {dimension_numbers = #tpu.dot_dimension_numbers<[1], [0], [0], [1], [0, 0, 1, 1], [], []>} : vector<8x8xf32>, vector<8x8xf32>, vector<8x8xf32> -> vector<8x8xf32>
    %c0_82 = arith.constant 0 : index
    %c0_83 = arith.constant 0 : index
    %c0_84 = arith.constant 0 : index
    %108 = vector.load %arg5[%c0_82, %c0_83, %c0_84] : memref<4x8x32xf32, #tpu.memory_space<vmem>>, vector<1x8x32xf32>
    %109 = vector.shape_cast %108 : vector<1x8x32xf32> to vector<8x32xf32>
    %cst_85 = arith.constant dense<0.000000e+00> : vector<8x32xf32>
    %110 = tpu.matmul %107, %109, %cst_85 {dimension_numbers = #tpu.dot_dimension_numbers<[1], [0], [0], [1], [0, 0, 1, 1], [], []>} : vector<8x8xf32>, vector<8x32xf32>, vector<8x32xf32> -> vector<8x32xf32>
    %111 = arith.addf %104, %110 : vector<8x32xf32>
    %112 = vector.extract_strided_slice %73 {offsets = [40, 0], sizes = [8, 8], strides = [1, 1]} : vector<64x8xf32> to vector<8x8xf32>
    %113 = vector.extract_strided_slice %30 {offsets = [8, 0], sizes = [8, 8], strides = [1, 1]} : vector<16x8xf32> to vector<8x8xf32>
    %cst_86 = arith.constant dense<0.000000e+00> : vector<8x8xf32>
    %114 = tpu.matmul %112, %113, %cst_86 {dimension_numbers = #tpu.dot_dimension_numbers<[1], [0], [0], [1], [0, 0, 1, 1], [], []>} : vector<8x8xf32>, vector<8x8xf32>, vector<8x8xf32> -> vector<8x8xf32>
    %c1_87 = arith.constant 1 : index
    %c0_88 = arith.constant 0 : index
    %c0_89 = arith.constant 0 : index
    %115 = vector.load %arg5[%c1_87, %c0_88, %c0_89] : memref<4x8x32xf32, #tpu.memory_space<vmem>>, vector<1x8x32xf32>
    %116 = vector.shape_cast %115 : vector<1x8x32xf32> to vector<8x32xf32>
    %cst_90 = arith.constant dense<0.000000e+00> : vector<8x32xf32>
    %117 = tpu.matmul %114, %116, %cst_90 {dimension_numbers = #tpu.dot_dimension_numbers<[1], [0], [0], [1], [0, 0, 1, 1], [], []>} : vector<8x8xf32>, vector<8x32xf32>, vector<8x32xf32> -> vector<8x32xf32>
    %118 = arith.addf %111, %117 : vector<8x32xf32>
    %119 = vector.extract_strided_slice %73 {offsets = [48, 0], sizes = [8, 8], strides = [1, 1]} : vector<64x8xf32> to vector<8x8xf32>
    %120 = vector.extract_strided_slice %33 {offsets = [8, 0], sizes = [8, 8], strides = [1, 1]} : vector<16x8xf32> to vector<8x8xf32>
    %cst_91 = arith.constant dense<0.000000e+00> : vector<8x8xf32>
    %121 = tpu.matmul %119, %120, %cst_91 {dimension_numbers = #tpu.dot_dimension_numbers<[1], [0], [0], [1], [0, 0, 1, 1], [], []>} : vector<8x8xf32>, vector<8x8xf32>, vector<8x8xf32> -> vector<8x8xf32>
    %c2_92 = arith.constant 2 : index
    %c0_93 = arith.constant 0 : index
    %c0_94 = arith.constant 0 : index
    %122 = vector.load %arg5[%c2_92, %c0_93, %c0_94] : memref<4x8x32xf32, #tpu.memory_space<vmem>>, vector<1x8x32xf32>
    %123 = vector.shape_cast %122 : vector<1x8x32xf32> to vector<8x32xf32>
    %cst_95 = arith.constant dense<0.000000e+00> : vector<8x32xf32>
    %124 = tpu.matmul %121, %123, %cst_95 {dimension_numbers = #tpu.dot_dimension_numbers<[1], [0], [0], [1], [0, 0, 1, 1], [], []>} : vector<8x8xf32>, vector<8x32xf32>, vector<8x32xf32> -> vector<8x32xf32>
    %125 = arith.addf %118, %124 : vector<8x32xf32>
    %126 = vector.extract_strided_slice %73 {offsets = [56, 0], sizes = [8, 8], strides = [1, 1]} : vector<64x8xf32> to vector<8x8xf32>
    %127 = vector.extract_strided_slice %36 {offsets = [8, 0], sizes = [8, 8], strides = [1, 1]} : vector<16x8xf32> to vector<8x8xf32>
    %cst_96 = arith.constant dense<0.000000e+00> : vector<8x8xf32>
    %128 = tpu.matmul %126, %127, %cst_96 {dimension_numbers = #tpu.dot_dimension_numbers<[1], [0], [0], [1], [0, 0, 1, 1], [], []>} : vector<8x8xf32>, vector<8x8xf32>, vector<8x8xf32> -> vector<8x8xf32>
    %c3_97 = arith.constant 3 : index
    %c0_98 = arith.constant 0 : index
    %c0_99 = arith.constant 0 : index
    %129 = vector.load %arg5[%c3_97, %c0_98, %c0_99] : memref<4x8x32xf32, #tpu.memory_space<vmem>>, vector<1x8x32xf32>
    %130 = vector.shape_cast %129 : vector<1x8x32xf32> to vector<8x32xf32>
    %cst_100 = arith.constant dense<0.000000e+00> : vector<8x32xf32>
    %131 = tpu.matmul %128, %130, %cst_100 {dimension_numbers = #tpu.dot_dimension_numbers<[1], [0], [0], [1], [0, 0, 1, 1], [], []>} : vector<8x8xf32>, vector<8x32xf32>, vector<8x32xf32> -> vector<8x32xf32>
    %132 = arith.addf %125, %131 : vector<8x32xf32>
    %133 = tpu.concatenate %103, %132 in 0 : vector<8x32xf32>, vector<8x32xf32> -> vector<16x32xf32>
    %c0_101 = arith.constant 0 : index
    %c0_102 = arith.constant 0 : index
    %134 = vector.load %arg7[%c0_101, %c0_102] : memref<16x32xf32, #tpu.memory_space<vmem>>, vector<16x32xf32>
    tpu.vector_store %arg7[%c0_101, %c0_102], %133 {strides = array<i32>} : memref<16x32xf32, #tpu.memory_space<vmem>>, vector<16x32xf32>,
    return
  }
  func.func @transform_0(%arg0: i32) -> (i32, i32) {
    %c0_i32 = arith.constant 0 : i32
    %c0_i32_0 = arith.constant 0 : i32
    %c0_i32_1 = arith.constant 0 : i32
    return %c0_i32, %c0_i32_0 : i32, i32
  }
  func.func @transform_1(%arg0: i32) -> (i32, i32, i32) {
    %c0_i32 = arith.constant 0 : i32
    %c0_i32_0 = arith.constant 0 : i32
    %c0_i32_1 = arith.constant 0 : i32
    %c0_i32_2 = arith.constant 0 : i32
    return %c0_i32, %c0_i32_0, %c0_i32_1 : i32, i32, i32
  }
  func.func @transform_2(%arg0: i32) -> (i32, i32, i32) {
    %c0_i32 = arith.constant 0 : i32
    %c0_i32_0 = arith.constant 0 : i32
    %c0_i32_1 = arith.constant 0 : i32
    %c0_i32_2 = arith.constant 0 : i32
    return %c0_i32, %c0_i32_0, %c0_i32_1 : i32, i32, i32
  }
  func.func @transform_3(%arg0: i32) -> (i32, i32, i32) {
    %c0_i32 = arith.constant 0 : i32
    %c0_i32_0 = arith.constant 0 : i32
    %c0_i32_1 = arith.constant 0 : i32
    %c0_i32_2 = arith.constant 0 : i32
    return %c0_i32, %c0_i32_0, %c0_i32_1 : i32, i32, i32
  }
  func.func @transform_4(%arg0: i32) -> (i32, i32, i32) {
    %c0_i32 = arith.constant 0 : i32
    %c0_i32_0 = arith.constant 0 : i32
    %c0_i32_1 = arith.constant 0 : i32
    %c0_i32_2 = arith.constant 0 : i32
    return %c0_i32, %c0_i32_0, %c0_i32_1 : i32, i32, i32
  }
  func.func @transform_5(%arg0: i32) -> (i32, i32) {
    %c0_i32 = arith.constant 0 : i32
    %c0_i32_0 = arith.constant 0 : i32
    %c0_i32_1 = arith.constant 0 : i32
    return %c0_i32, %c0_i32_0 : i32, i32
  }
  func.func @transform_6(%arg0: i32) -> (i32, i32) {
    %c0_i32 = arith.constant 0 : i32
    %c0_i32_0 = arith.constant 0 : i32
    %c0_i32_1 = arith.constant 0 : i32
    return %c0_i32, %c0_i32_0 : i32, i32
  }
  func.func @transform_7(%arg0: i32) -> (i32, i32) {
    %c0_i32 = arith.constant 0 : i32
    %c0_i32_0 = arith.constant 0 : i32
    %c0_i32_1 = arith.constant 0 : i32
    return %c0_i32, %c0_i32_0 : i32, i32
  }
}

</mosaic_0001>

<llo_original>
// kernel: tpu_custom_call.1
$region0: #{tpu_custom_call.1}
  #allocation0 [shape = 'u32[]', space=smem, size = 0x4, offset = 0x4, fixed_abs, tag = 'smem constant byte address 0x4 - core index']
  #allocation1 [shape = 'u32[144,128]{1,0:T(1,128)}', space=vmem, size = 0x12000, scoped, tag = 'internal scratch']
  %s0 = inlined_call_operand.vmem [shape: f32[16,32], index: 0, kind: input, shape index: {}]
  %s1 = inlined_call_operand.vmem [shape: f32[4,32,8], index: 1, kind: input, shape index: {}]
  %s2 = inlined_call_operand.vmem [shape: f32[4,32,8], index: 2, kind: input, shape index: {}]
  %s3 = inlined_call_operand.vmem [shape: f32[4,32,8], index: 3, kind: input, shape index: {}]
  %s4 = inlined_call_operand.vmem [shape: f32[4,8,32], index: 4, kind: input, shape index: {}]
  %s5 = inlined_call_operand.vmem [shape: f32[64,8], index: 5, kind: input, shape index: {}]
  %s6 = inlined_call_operand.hbm [shape: f32[16,32], index: 6, kind: output, shape index: {0}]
  %s7 = inlined_call_operand.vmem [shape: f32[64,8], index: 7, kind: output, shape index: {1}]
  %8 = xla_tuple %s6, %s7
  %s9 = sld [smem:[#allocation0]]
  $region42: #{tpu_custom_call.1} parent=0
    _
  %s11 = ssub.s32 1, %s9
  %s12 = scalar_select 0, %s11, %s9
  $region1: #{tpu_custom_call.1} parent=0
    #allocation2 [shape = 'u8[8192]{0}', space=vmem, size = 0x2000, scoped, tag = 'output window, operand 0, single buffered']
    #allocation3 [shape = 's32[1]{0}', space=sflag, size = 0x4, scoped, tag = 'scoped memory for tpu_custom_call.1']
    %13 = vsyncpa [#allocation3], 0
    // Predicated region
    $region2: #{tpu_custom_call.1} parent=1 // pred_check
      _
    $region3: #{tpu_custom_call.1} parent=1 // pred_check_branch
      %15 = sbr.rel (0) target = $region5
    $region4: #{tpu_custom_call.1} parent=1 // pred_region
      _
    $region5: #{tpu_custom_call.1} parent=1 // pred_fallthru
      _
    // Predicated region
    $region6: #{tpu_custom_call.1} parent=1 // pred_check
      _
    $region7: #{tpu_custom_call.1} parent=1 // pred_check_branch
      %17 = sbr.rel (0) target = $region9
    $region8: #{tpu_custom_call.1} parent=1 // pred_region
      _
    $region9: #{tpu_custom_call.1} parent=1 // pred_fallthru
      _
    // Predicated region
    $region10: #{tpu_custom_call.1} parent=1 // pred_check
      _
    $region11: #{tpu_custom_call.1} parent=1 // pred_check_branch
      %19 = sbr.rel (0) target = $region13
    $region12: #{tpu_custom_call.1} parent=1 // pred_region
      _
    $region13: #{tpu_custom_call.1} parent=1 // pred_fallthru
      _
    // Predicated region
    $region14: #{tpu_custom_call.1} parent=1 // pred_check
      _
    $region15: #{tpu_custom_call.1} parent=1 // pred_check_branch
      %21 = sbr.rel (0) target = $region17
    $region16: #{tpu_custom_call.1} parent=1 // pred_region
      _
    $region17: #{tpu_custom_call.1} parent=1 // pred_fallthru
      _
    // Predicated region
    $region18: #{tpu_custom_call.1} parent=1 // pred_check
      _
    $region19: #{tpu_custom_call.1} parent=1 // pred_check_branch
      %23 = sbr.rel (0) target = $region21
    $region20: #{tpu_custom_call.1} parent=1 // pred_region
      _
    $region21: #{tpu_custom_call.1} parent=1 // pred_fallthru
      _
    // Predicated region
    $region22: #{tpu_custom_call.1} parent=1 // pred_check
      _
    $region23: #{tpu_custom_call.1} parent=1 // pred_check_branch
      %25 = sbr.rel (0) target = $region25
    $region24: #{tpu_custom_call.1} parent=1 // pred_region
      _
    $region25: #{tpu_custom_call.1} parent=1 // pred_fallthru
      _
    %v26 = vld [vmem:[%s0] sm:$0xff]
    %v27 = vld [vmem:[%s0 + $0x8] sm:$0xff]
    %v28 = vld [vmem:[%s1] sm:$0xff]
    %v29 = vld [vmem:[%s1 + $0x8] sm:$0xff]
    %v30 = vld [vmem:[%s1 + $0x10] sm:$0xff]
    %v31 = vld [vmem:[%s1 + $0x18] sm:$0xff]
    %vm32 = vcmask 261120
    %v34 = vsel %vm32, %v26, 0
    %v37 = vsel %vm32, %v27, 0
    %39 = vmatprep.subr.mxu0 0.0
    %40 = vmatpush1.msra.mxu0 0.0
    %41 = vmatprep.subr.mxu0 0.0
    %42 = vmatpush1.msra.mxu0 0.0
    %43 = vmatprep.subr.mxu0 0.0
    %44 = vmatpush1.msra.mxu0 0.0
    %45 = vmatprep.subr.mxu0 0.0
    %46 = vmatpush1.msra.mxu0 0.0
    %47 = vmatprep.subr.mxu0 0.0
    %48 = vmatpush1.msra.mxu0 0.0
    %49 = vmatprep.subr.mxu0 0.0
    %50 = vmatpush1.msra.mxu0 0.0
    %51 = vmatprep.subr.mxu0 0.0
    %52 = vmatpush1.msra.mxu0 0.0
    %53 = vmatprep.subr.mxu0 0.0
    %54 = vmatpush1.msra.mxu0 0.0
    %55 = vmatprep.subr.mxu0 0.0
    %56 = vmatpush1.msra.mxu0 0.0
    %57 = vmatprep.subr.mxu0 0.0
    %58 = vmatpush1.msra.mxu0 0.0
    %59 = vmatprep.subr.mxu0 0.0
    %60 = vmatpush1.msra.mxu0 0.0
    %61 = vmatprep.subr.mxu0 0.0
    %62 = vmatpush1.msra.mxu0 0.0
    %63 = vmatprep.subr.mxu0 0.0
    %64 = vmatpush1.msra.mxu0 %v31
    %65 = vmatprep.subr.mxu0 0.0
    %66 = vmatpush1.msra.mxu0 %v30
    %67 = vmatprep.subr.mxu0 0.0
    %68 = vmatpush1.msra.mxu0 %v29
    %69 = vmatprep.subr.mxu0 0.0
    %70 = vmatpush1.msra.mxu0 %v28
    %71 = vmatprep.subr.mxu0 0.0
    %72 = vmatpush2.msra.mxu0 0.0
    %73 = vmatprep.subr.mxu0 0.0
    %74 = vmatpush2.msra.mxu0 0.0
    %75 = vmatprep.subr.mxu0 0.0
    %76 = vmatpush2.msra.mxu0 0.0
    %77 = vmatprep.subr.mxu0 0.0
    %78 = vmatpush2.msra.mxu0 0.0
    %79 = vmatprep.subr.mxu0 0.0
    %80 = vmatpush2.msra.mxu0 0.0
    %81 = vmatprep.subr.mxu0 0.0
    %82 = vmatpush2.msra.mxu0 0.0
    %83 = vmatprep.subr.mxu0 0.0
    %84 = vmatpush2.msra.mxu0 0.0
    %85 = vmatprep.subr.mxu0 0.0
    %86 = vmatpush2.msra.mxu0 0.0
    %87 = vmatprep.subr.mxu0 0.0
    %88 = vmatpush2.msra.mxu0 0.0
    %89 = vmatprep.subr.mxu0 0.0
    %90 = vmatpush2.msra.mxu0 0.0
    %91 = vmatprep.subr.mxu0 0.0
    %92 = vmatpush2.msra.mxu0 0.0
    %93 = vmatprep.subr.mxu0 0.0
    %94 = vmatpush2.msra.mxu0 0.0
    %95 = vmatprep.subr.mxu0 0.0
    %96 = vmatpush2.msra.mxu0 0.0
    %97 = vmatprep.subr.mxu0 0.0
    %98 = vmatpush2.msra.mxu0 0.0
    %99 = vmatprep.subr.mxu0 0.0
    %100 = vmatpush2.msra.mxu0 0.0
    %101 = vmatprep.subr.mxu0 0.0
    %102 = vmatpush2.msra.mxu0 0.0
    %103 = vmatprep.mubr.f32.mxu0 0.0
    %104 = vmatmul.mubr.f32.gmra.mxu0 %v34
    %v105 = vpop.f32.mrf.mxu0
    %v106 = vadd.f32 0.0, %v105
    %v107 = vpop.f32.mrf.mxu0
    %108 = vmatprep.mubr.f32.mxu0 0.0
    %109 = vmatmul.mubr.f32.gmra.mxu0 %v37
    %v110 = vpop.f32.mrf.mxu0
    %v111 = vadd.f32 0.0, %v110
    %v112 = vpop.f32.mrf.mxu0
    %113 = vdwg.mxu0
    %s114 = scalar_lea.vmem %s1, 32
    %v115 = vld [vmem:[%s114] sm:$0xff]
    %v116 = vld [vmem:[%s114 + $0x8] sm:$0xff]
    %v117 = vld [vmem:[%s114 + $0x10] sm:$0xff]
    %v118 = vld [vmem:[%s114 + $0x18] sm:$0xff]
    %119 = vmatprep.subr.mxu0 0.0
    %120 = vmatpush1.msra.mxu0 0.0
    %121 = vmatprep.subr.mxu0 0.0
    %122 = vmatpush1.msra.mxu0 0.0
    %123 = vmatprep.subr.mxu0 0.0
    %124 = vmatpush1.msra.mxu0 0.0
    %125 = vmatprep.subr.mxu0 0.0
    %126 = vmatpush1.msra.mxu0 0.0
    %127 = vmatprep.subr.mxu0 0.0
    %128 = vmatpush1.msra.mxu0 0.0
    %129 = vmatprep.subr.mxu0 0.0
    %130 = vmatpush1.msra.mxu0 0.0
    %131 = vmatprep.subr.mxu0 0.0
    %132 = vmatpush1.msra.mxu0 0.0
    %133 = vmatprep.subr.mxu0 0.0
    %134 = vmatpush1.msra.mxu0 0.0
    %135 = vmatprep.subr.mxu0 0.0
    %136 = vmatpush1.msra.mxu0 0.0
    %137 = vmatprep.subr.mxu0 0.0
    %138 = vmatpush1.msra.mxu0 0.0
    %139 = vmatprep.subr.mxu0 0.0
    %140 = vmatpush1.msra.mxu0 0.0
    %141 = vmatprep.subr.mxu0 0.0
    %142 = vmatpush1.msra.mxu0 0.0
    %143 = vmatprep.subr.mxu0 0.0
    %144 = vmatpush1.msra.mxu0 %v118
    %145 = vmatprep.subr.mxu0 0.0
    %146 = vmatpush1.msra.mxu0 %v117
    %147 = vmatprep.subr.mxu0 0.0
    %148 = vmatpush1.msra.mxu0 %v116
    %149 = vmatprep.subr.mxu0 0.0
    %150 = vmatpush1.msra.mxu0 %v115
    %151 = vmatprep.subr.mxu0 0.0
    %152 = vmatpush2.msra.mxu0 0.0
    %153 = vmatprep.subr.mxu0 0.0
    %154 = vmatpush2.msra.mxu0 0.0
    %155 = vmatprep.subr.mxu0 0.0
    %156 = vmatpush2.msra.mxu0 0.0
    %157 = vmatprep.subr.mxu0 0.0
    %158 = vmatpush2.msra.mxu0 0.0
    %159 = vmatprep.subr.mxu0 0.0
    %160 = vmatpush2.msra.mxu0 0.0
    %161 = vmatprep.subr.mxu0 0.0
    %162 = vmatpush2.msra.mxu0 0.0
    %163 = vmatprep.subr.mxu0 0.0
    %164 = vmatpush2.msra.mxu0 0.0
    %165 = vmatprep.subr.mxu0 0.0
    %166 = vmatpush2.msra.mxu0 0.0
    %167 = vmatprep.subr.mxu0 0.0
    %168 = vmatpush2.msra.mxu0 0.0
    %169 = vmatprep.subr.mxu0 0.0
    %170 = vmatpush2.msra.mxu0 0.0
    %171 = vmatprep.subr.mxu0 0.0
    %172 = vmatpush2.msra.mxu0 0.0
    %173 = vmatprep.subr.mxu0 0.0
    %174 = vmatpush2.msra.mxu0 0.0
    %175 = vmatprep.subr.mxu0 0.0
    %176 = vmatpush2.msra.mxu0 0.0
    %177 = vmatprep.subr.mxu0 0.0
    %178 = vmatpush2.msra.mxu0 0.0
    %179 = vmatprep.subr.mxu0 0.0
    %180 = vmatpush2.msra.mxu0 0.0
    %181 = vmatprep.subr.mxu0 0.0
    %182 = vmatpush2.msra.mxu0 0.0
    %183 = vmatprep.mubr.f32.mxu0 0.0
    %184 = vmatmul.mubr.f32.gmra.mxu0 %v34
    %v185 = vpop.f32.mrf.mxu0
    %v186 = vadd.f32 0.0, %v185
    %v187 = vpop.f32.mrf.mxu0
    %188 = vmatprep.mubr.f32.mxu0 0.0
    %189 = vmatmul.mubr.f32.gmra.mxu0 %v37
    %v190 = vpop.f32.mrf.mxu0
    %v191 = vadd.f32 0.0, %v190
    %v192 = vpop.f32.mrf.mxu0
    %193 = vdwg.mxu0
    %s194 = scalar_lea.vmem %s1, 64
    %v195 = vld [vmem:[%s194] sm:$0xff]
    %v196 = vld [vmem:[%s194 + $0x8] sm:$0xff]
    %v197 = vld [vmem:[%s194 + $0x10] sm:$0xff]
    %v198 = vld [vmem:[%s194 + $0x18] sm:$0xff]
    %199 = vmatprep.subr.mxu0 0.0
    %200 = vmatpush1.msra.mxu0 0.0
    %201 = vmatprep.subr.mxu0 0.0
    %202 = vmatpush1.msra.mxu0 0.0
    %203 = vmatprep.subr.mxu0 0.0
    %204 = vmatpush1.msra.mxu0 0.0
    %205 = vmatprep.subr.mxu0 0.0
    %206 = vmatpush1.msra.mxu0 0.0
    %207 = vmatprep.subr.mxu0 0.0
    %208 = vmatpush1.msra.mxu0 0.0
    %209 = vmatprep.subr.mxu0 0.0
    %210 = vmatpush1.msra.mxu0 0.0
    %211 = vmatprep.subr.mxu0 0.0
    %212 = vmatpush1.msra.mxu0 0.0
    %213 = vmatprep.subr.mxu0 0.0
    %214 = vmatpush1.msra.mxu0 0.0
    %215 = vmatprep.subr.mxu0 0.0
    %216 = vmatpush1.msra.mxu0 0.0
    %217 = vmatprep.subr.mxu0 0.0
    %218 = vmatpush1.msra.mxu0 0.0
    %219 = vmatprep.subr.mxu0 0.0
    %220 = vmatpush1.msra.mxu0 0.0
    %221 = vmatprep.subr.mxu0 0.0
    %222 = vmatpush1.msra.mxu0 0.0
    %223 = vmatprep.subr.mxu0 0.0
    %224 = vmatpush1.msra.mxu0 %v198
    %225 = vmatprep.subr.mxu0 0.0
    %226 = vmatpush1.msra.mxu0 %v197
    %227 = vmatprep.subr.mxu0 0.0
    %228 = vmatpush1.msra.mxu0 %v196
    %229 = vmatprep.subr.mxu0 0.0
    %230 = vmatpush1.msra.mxu0 %v195
    %231 = vmatprep.subr.mxu0 0.0
    %232 = vmatpush2.msra.mxu0 0.0
    %233 = vmatprep.subr.mxu0 0.0
    %234 = vmatpush2.msra.mxu0 0.0
    %235 = vmatprep.subr.mxu0 0.0
    %236 = vmatpush2.msra.mxu0 0.0
    %237 = vmatprep.subr.mxu0 0.0
    %238 = vmatpush2.msra.mxu0 0.0
    %239 = vmatprep.subr.mxu0 0.0
    %240 = vmatpush2.msra.mxu0 0.0
    %241 = vmatprep.subr.mxu0 0.0
    %242 = vmatpush2.msra.mxu0 0.0
    %243 = vmatprep.subr.mxu0 0.0
    %244 = vmatpush2.msra.mxu0 0.0
    %245 = vmatprep.subr.mxu0 0.0
    %246 = vmatpush2.msra.mxu0 0.0
    %247 = vmatprep.subr.mxu0 0.0
    %248 = vmatpush2.msra.mxu0 0.0
    %249 = vmatprep.subr.mxu0 0.0
    %250 = vmatpush2.msra.mxu0 0.0
    %251 = vmatprep.subr.mxu0 0.0
    %252 = vmatpush2.msra.mxu0 0.0
    %253 = vmatprep.subr.mxu0 0.0
    %254 = vmatpush2.msra.mxu0 0.0
    %255 = vmatprep.subr.mxu0 0.0
    %256 = vmatpush2.msra.mxu0 0.0
    %257 = vmatprep.subr.mxu0 0.0
    %258 = vmatpush2.msra.mxu0 0.0
    %259 = vmatprep.subr.mxu0 0.0
    %260 = vmatpush2.msra.mxu0 0.0
    %261 = vmatprep.subr.mxu0 0.0
    %262 = vmatpush2.msra.mxu0 0.0
    %263 = vmatprep.mubr.f32.mxu0 0.0
    %264 = vmatmul.mubr.f32.gmra.mxu0 %v34
    %v265 = vpop.f32.mrf.mxu0
    %v266 = vadd.f32 0.0, %v265
    %v267 = vpop.f32.mrf.mxu0
    %268 = vmatprep.mubr.f32.mxu0 0.0
    %269 = vmatmul.mubr.f32.gmra.mxu0 %v37
    %v270 = vpop.f32.mrf.mxu0
    %v271 = vadd.f32 0.0, %v270
    %v272 = vpop.f32.mrf.mxu0
    %273 = vdwg.mxu0
    %s274 = scalar_lea.vmem %s1, 96
    %v275 = vld [vmem:[%s274] sm:$0xff]
    %v276 = vld [vmem:[%s274 + $0x8] sm:$0xff]
    %v277 = vld [vmem:[%s274 + $0x10] sm:$0xff]
    %v278 = vld [vmem:[%s274 + $0x18] sm:$0xff]
    %279 = vmatprep.subr.mxu0 0.0
    %280 = vmatpush1.msra.mxu0 0.0
    %281 = vmatprep.subr.mxu0 0.0
    %282 = vmatpush1.msra.mxu0 0.0
    %283 = vmatprep.subr.mxu0 0.0
    %284 = vmatpush1.msra.mxu0 0.0
    %285 = vmatprep.subr.mxu0 0.0
    %286 = vmatpush1.msra.mxu0 0.0
    %287 = vmatprep.subr.mxu0 0.0
    %288 = vmatpush1.msra.mxu0 0.0
    %289 = vmatprep.subr.mxu0 0.0
    %290 = vmatpush1.msra.mxu0 0.0
    %291 = vmatprep.subr.mxu0 0.0
    %292 = vmatpush1.msra.mxu0 0.0
    %293 = vmatprep.subr.mxu0 0.0
    %294 = vmatpush1.msra.mxu0 0.0
    %295 = vmatprep.subr.mxu0 0.0
    %296 = vmatpush1.msra.mxu0 0.0
    %297 = vmatprep.subr.mxu0 0.0
    %298 = vmatpush1.msra.mxu0 0.0
    %299 = vmatprep.subr.mxu0 0.0
    %300 = vmatpush1.msra.mxu0 0.0
    %301 = vmatprep.subr.mxu0 0.0
    %302 = vmatpush1.msra.mxu0 0.0
    %303 = vmatprep.subr.mxu0 0.0
    %304 = vmatpush1.msra.mxu0 %v278
    %305 = vmatprep.subr.mxu0 0.0
    %306 = vmatpush1.msra.mxu0 %v277
    %307 = vmatprep.subr.mxu0 0.0
    %308 = vmatpush1.msra.mxu0 %v276
    %309 = vmatprep.subr.mxu0 0.0
    %310 = vmatpush1.msra.mxu0 %v275
    %311 = vmatprep.subr.mxu0 0.0
    %312 = vmatpush2.msra.mxu0 0.0
    %313 = vmatprep.subr.mxu0 0.0
    %314 = vmatpush2.msra.mxu0 0.0
    %315 = vmatprep.subr.mxu0 0.0
    %316 = vmatpush2.msra.mxu0 0.0
    %317 = vmatprep.subr.mxu0 0.0
    %318 = vmatpush2.msra.mxu0 0.0
    %319 = vmatprep.subr.mxu0 0.0
    %320 = vmatpush2.msra.mxu0 0.0
    %321 = vmatprep.subr.mxu0 0.0
    %322 = vmatpush2.msra.mxu0 0.0
    %323 = vmatprep.subr.mxu0 0.0
    %324 = vmatpush2.msra.mxu0 0.0
    %325 = vmatprep.subr.mxu0 0.0
    %326 = vmatpush2.msra.mxu0 0.0
    %327 = vmatprep.subr.mxu0 0.0
    %328 = vmatpush2.msra.mxu0 0.0
    %329 = vmatprep.subr.mxu0 0.0
    %330 = vmatpush2.msra.mxu0 0.0
    %331 = vmatprep.subr.mxu0 0.0
    %332 = vmatpush2.msra.mxu0 0.0
    %333 = vmatprep.subr.mxu0 0.0
    %334 = vmatpush2.msra.mxu0 0.0
    %335 = vmatprep.subr.mxu0 0.0
    %336 = vmatpush2.msra.mxu0 0.0
    %337 = vmatprep.subr.mxu0 0.0
    %338 = vmatpush2.msra.mxu0 0.0
    %339 = vmatprep.subr.mxu0 0.0
    %340 = vmatpush2.msra.mxu0 0.0
    %341 = vmatprep.subr.mxu0 0.0
    %342 = vmatpush2.msra.mxu0 0.0
    %343 = vmatprep.mubr.f32.mxu0 0.0
    %344 = vmatmul.mubr.f32.gmra.mxu0 %v34
    %v345 = vpop.f32.mrf.mxu0
    %v346 = vadd.f32 0.0, %v345
    %v347 = vpop.f32.mrf.mxu0
    %348 = vmatprep.mubr.f32.mxu0 0.0
    %349 = vmatmul.mubr.f32.gmra.mxu0 %v37
    %v350 = vpop.f32.mrf.mxu0
    %v351 = vadd.f32 0.0, %v350
    %v352 = vpop.f32.mrf.mxu0
    %353 = vdwg.mxu0
    %v354 = vld [vmem:[%s2] sm:$0xff]
    %v355 = vld [vmem:[%s2 + $0x8] sm:$0xff]
    %v356 = vld [vmem:[%s2 + $0x10] sm:$0xff]
    %v357 = vld [vmem:[%s2 + $0x18] sm:$0xff]
    %358 = vmatprep.subr.mxu0 0.0
    %359 = vmatpush1.msra.mxu0 0.0
    %360 = vmatprep.subr.mxu0 0.0
    %361 = vmatpush1.msra.mxu0 0.0
    %362 = vmatprep.subr.mxu0 0.0
    %363 = vmatpush1.msra.mxu0 0.0
    %364 = vmatprep.subr.mxu0 0.0
    %365 = vmatpush1.msra.mxu0 0.0
    %366 = vmatprep.subr.mxu0 0.0
    %367 = vmatpush1.msra.mxu0 0.0
    %368 = vmatprep.subr.mxu0 0.0
    %369 = vmatpush1.msra.mxu0 0.0
    %370 = vmatprep.subr.mxu0 0.0
    %371 = vmatpush1.msra.mxu0 0.0
    %372 = vmatprep.subr.mxu0 0.0
    %373 = vmatpush1.msra.mxu0 0.0
    %374 = vmatprep.subr.mxu0 0.0
    %375 = vmatpush1.msra.mxu0 0.0
    %376 = vmatprep.subr.mxu0 0.0
    %377 = vmatpush1.msra.mxu0 0.0
    %378 = vmatprep.subr.mxu0 0.0
    %379 = vmatpush1.msra.mxu0 0.0
    %380 = vmatprep.subr.mxu0 0.0
    %381 = vmatpush1.msra.mxu0 0.0
    %382 = vmatprep.subr.mxu0 0.0
    %383 = vmatpush1.msra.mxu0 %v357
    %384 = vmatprep.subr.mxu0 0.0
    %385 = vmatpush1.msra.mxu0 %v356
    %386 = vmatprep.subr.mxu0 0.0
    %387 = vmatpush1.msra.mxu0 %v355
    %388 = vmatprep.subr.mxu0 0.0
    %389 = vmatpush1.msra.mxu0 %v354
    %390 = vmatprep.subr.mxu0 0.0
    %391 = vmatpush2.msra.mxu0 0.0
    %392 = vmatprep.subr.mxu0 0.0
    %393 = vmatpush2.msra.mxu0 0.0
    %394 = vmatprep.subr.mxu0 0.0
    %395 = vmatpush2.msra.mxu0 0.0
    %396 = vmatprep.subr.mxu0 0.0
    %397 = vmatpush2.msra.mxu0 0.0
    %398 = vmatprep.subr.mxu0 0.0
    %399 = vmatpush2.msra.mxu0 0.0
    %400 = vmatprep.subr.mxu0 0.0
    %401 = vmatpush2.msra.mxu0 0.0
    %402 = vmatprep.subr.mxu0 0.0
    %403 = vmatpush2.msra.mxu0 0.0
    %404 = vmatprep.subr.mxu0 0.0
    %405 = vmatpush2.msra.mxu0 0.0
    %406 = vmatprep.subr.mxu0 0.0
    %407 = vmatpush2.msra.mxu0 0.0
    %408 = vmatprep.subr.mxu0 0.0
    %409 = vmatpush2.msra.mxu0 0.0
    %410 = vmatprep.subr.mxu0 0.0
    %411 = vmatpush2.msra.mxu0 0.0
    %412 = vmatprep.subr.mxu0 0.0
    %413 = vmatpush2.msra.mxu0 0.0
    %414 = vmatprep.subr.mxu0 0.0
    %415 = vmatpush2.msra.mxu0 0.0
    %416 = vmatprep.subr.mxu0 0.0
    %417 = vmatpush2.msra.mxu0 0.0
    %418 = vmatprep.subr.mxu0 0.0
    %419 = vmatpush2.msra.mxu0 0.0
    %420 = vmatprep.subr.mxu0 0.0
    %421 = vmatpush2.msra.mxu0 0.0
    %422 = vmatprep.mubr.f32.mxu0 0.0
    %423 = vmatmul.mubr.f32.gmra.mxu0 %v34
    %v424 = vpop.f32.mrf.mxu0
    %v425 = vadd.f32 0.0, %v424
    %v426 = vpop.f32.mrf.mxu0
    %427 = vmatprep.mubr.f32.mxu0 0.0
    %428 = vmatmul.mubr.f32.gmra.mxu0 %v37
    %v429 = vpop.f32.mrf.mxu0
    %v430 = vadd.f32 0.0, %v429
    %v431 = vpop.f32.mrf.mxu0
    %432 = vdwg.mxu0
    %s433 = scalar_lea.vmem %s2, 32
    %v434 = vld [vmem:[%s433] sm:$0xff]
    %v435 = vld [vmem:[%s433 + $0x8] sm:$0xff]
    %v436 = vld [vmem:[%s433 + $0x10] sm:$0xff]
    %v437 = vld [vmem:[%s433 + $0x18] sm:$0xff]
    %438 = vmatprep.subr.mxu0 0.0
    %439 = vmatpush1.msra.mxu0 0.0
    %440 = vmatprep.subr.mxu0 0.0
    %441 = vmatpush1.msra.mxu0 0.0
    %442 = vmatprep.subr.mxu0 0.0
    %443 = vmatpush1.msra.mxu0 0.0
    %444 = vmatprep.subr.mxu0 0.0
    %445 = vmatpush1.msra.mxu0 0.0
    %446 = vmatprep.subr.mxu0 0.0
    %447 = vmatpush1.msra.mxu0 0.0
    %448 = vmatprep.subr.mxu0 0.0
    %449 = vmatpush1.msra.mxu0 0.0
    %450 = vmatprep.subr.mxu0 0.0
    %451 = vmatpush1.msra.mxu0 0.0
    %452 = vmatprep.subr.mxu0 0.0
    %453 = vmatpush1.msra.mxu0 0.0
    %454 = vmatprep.subr.mxu0 0.0
    %455 = vmatpush1.msra.mxu0 0.0
    %456 = vmatprep.subr.mxu0 0.0
    %457 = vmatpush1.msra.mxu0 0.0
    %458 = vmatprep.subr.mxu0 0.0
    %459 = vmatpush1.msra.mxu0 0.0
    %460 = vmatprep.subr.mxu0 0.0
    %461 = vmatpush1.msra.mxu0 0.0
    %462 = vmatprep.subr.mxu0 0.0
    %463 = vmatpush1.msra.mxu0 %v437
    %464 = vmatprep.subr.mxu0 0.0
    %465 = vmatpush1.msra.mxu0 %v436
    %466 = vmatprep.subr.mxu0 0.0
    %467 = vmatpush1.msra.mxu0 %v435
    %468 = vmatprep.subr.mxu0 0.0
    %469 = vmatpush1.msra.mxu0 %v434
    %470 = vmatprep.subr.mxu0 0.0
    %471 = vmatpush2.msra.mxu0 0.0
    %472 = vmatprep.subr.mxu0 0.0
    %473 = vmatpush2.msra.mxu0 0.0
    %474 = vmatprep.subr.mxu0 0.0
    %475 = vmatpush2.msra.mxu0 0.0
    %476 = vmatprep.subr.mxu0 0.0
    %477 = vmatpush2.msra.mxu0 0.0
    %478 = vmatprep.subr.mxu0 0.0
    %479 = vmatpush2.msra.mxu0 0.0
    %480 = vmatprep.subr.mxu0 0.0
    %481 = vmatpush2.msra.mxu0 0.0
    %482 = vmatprep.subr.mxu0 0.0
    %483 = vmatpush2.msra.mxu0 0.0
    %484 = vmatprep.subr.mxu0 0.0
    %485 = vmatpush2.msra.mxu0 0.0
    %486 = vmatprep.subr.mxu0 0.0
    %487 = vmatpush2.msra.mxu0 0.0
    %488 = vmatprep.subr.mxu0 0.0
    %489 = vmatpush2.msra.mxu0 0.0
    %490 = vmatprep.subr.mxu0 0.0
    %491 = vmatpush2.msra.mxu0 0.0
    %492 = vmatprep.subr.mxu0 0.0
    %493 = vmatpush2.msra.mxu0 0.0
    %494 = vmatprep.subr.mxu0 0.0
    %495 = vmatpush2.msra.mxu0 0.0
    %496 = vmatprep.subr.mxu0 0.0
    %497 = vmatpush2.msra.mxu0 0.0
    %498 = vmatprep.subr.mxu0 0.0
    %499 = vmatpush2.msra.mxu0 0.0
    %500 = vmatprep.subr.mxu0 0.0
    %501 = vmatpush2.msra.mxu0 0.0
    %502 = vmatprep.mubr.f32.mxu0 0.0
    %503 = vmatmul.mubr.f32.gmra.mxu0 %v34
    %v504 = vpop.f32.mrf.mxu0
    %v505 = vadd.f32 0.0, %v504
    %v506 = vpop.f32.mrf.mxu0
    %507 = vmatprep.mubr.f32.mxu0 0.0
    %508 = vmatmul.mubr.f32.gmra.mxu0 %v37
    %v509 = vpop.f32.mrf.mxu0
    %v510 = vadd.f32 0.0, %v509
    %v511 = vpop.f32.mrf.mxu0
    %512 = vdwg.mxu0
    %s513 = scalar_lea.vmem %s2, 64
    %v514 = vld [vmem:[%s513] sm:$0xff]
    %v515 = vld [vmem:[%s513 + $0x8] sm:$0xff]
    %v516 = vld [vmem:[%s513 + $0x10] sm:$0xff]
    %v517 = vld [vmem:[%s513 + $0x18] sm:$0xff]
    %518 = vmatprep.subr.mxu0 0.0
    %519 = vmatpush1.msra.mxu0 0.0
    %520 = vmatprep.subr.mxu0 0.0
    %521 = vmatpush1.msra.mxu0 0.0
    %522 = vmatprep.subr.mxu0 0.0
    %523 = vmatpush1.msra.mxu0 0.0
    %524 = vmatprep.subr.mxu0 0.0
    %525 = vmatpush1.msra.mxu0 0.0
    %526 = vmatprep.subr.mxu0 0.0
    %527 = vmatpush1.msra.mxu0 0.0
    %528 = vmatprep.subr.mxu0 0.0
    %529 = vmatpush1.msra.mxu0 0.0
    %530 = vmatprep.subr.mxu0 0.0
    %531 = vmatpush1.msra.mxu0 0.0
    %532 = vmatprep.subr.mxu0 0.0
    %533 = vmatpush1.msra.mxu0 0.0
    %534 = vmatprep.subr.mxu0 0.0
    %535 = vmatpush1.msra.mxu0 0.0
    %536 = vmatprep.subr.mxu0 0.0
    %537 = vmatpush1.msra.mxu0 0.0
    %538 = vmatprep.subr.mxu0 0.0
    %539 = vmatpush1.msra.mxu0 0.0
    %540 = vmatprep.subr.mxu0 0.0
    %541 = vmatpush1.msra.mxu0 0.0
    %542 = vmatprep.subr.mxu0 0.0
    %543 = vmatpush1.msra.mxu0 %v517
    %544 = vmatprep.subr.mxu0 0.0
    %545 = vmatpush1.msra.mxu0 %v516
    %546 = vmatprep.subr.mxu0 0.0
    %547 = vmatpush1.msra.mxu0 %v515
    %548 = vmatprep.subr.mxu0 0.0
    %549 = vmatpush1.msra.mxu0 %v514
    %550 = vmatprep.subr.mxu0 0.0
    %551 = vmatpush2.msra.mxu0 0.0
    %552 = vmatprep.subr.mxu0 0.0
    %553 = vmatpush2.msra.mxu0 0.0
    %554 = vmatprep.subr.mxu0 0.0
    %555 = vmatpush2.msra.mxu0 0.0
    %556 = vmatprep.subr.mxu0 0.0
    %557 = vmatpush2.msra.mxu0 0.0
    %558 = vmatprep.subr.mxu0 0.0
    %559 = vmatpush2.msra.mxu0 0.0
    %560 = vmatprep.subr.mxu0 0.0
    %561 = vmatpush2.msra.mxu0 0.0
    %562 = vmatprep.subr.mxu0 0.0
    %563 = vmatpush2.msra.mxu0 0.0
    %564 = vmatprep.subr.mxu0 0.0
    %565 = vmatpush2.msra.mxu0 0.0
    %566 = vmatprep.subr.mxu0 0.0
    %567 = vmatpush2.msra.mxu0 0.0
    %568 = vmatprep.subr.mxu0 0.0
    %569 = vmatpush2.msra.mxu0 0.0
    %570 = vmatprep.subr.mxu0 0.0
    %571 = vmatpush2.msra.mxu0 0.0
    %572 = vmatprep.subr.mxu0 0.0
    %573 = vmatpush2.msra.mxu0 0.0
    %574 = vmatprep.subr.mxu0 0.0
    %575 = vmatpush2.msra.mxu0 0.0
    %576 = vmatprep.subr.mxu0 0.0
    %577 = vmatpush2.msra.mxu0 0.0
    %578 = vmatprep.subr.mxu0 0.0
    %579 = vmatpush2.msra.mxu0 0.0
    %580 = vmatprep.subr.mxu0 0.0
    %581 = vmatpush2.msra.mxu0 0.0
    %582 = vmatprep.mubr.f32.mxu0 0.0
    %583 = vmatmul.mubr.f32.gmra.mxu0 %v34
    %v584 = vpop.f32.mrf.mxu0
    %v585 = vadd.f32 0.0, %v584
    %v586 = vpop.f32.mrf.mxu0
    %587 = vmatprep.mubr.f32.mxu0 0.0
    %588 = vmatmul.mubr.f32.gmra.mxu0 %v37
    %v589 = vpop.f32.mrf.mxu0
    %v590 = vadd.f32 0.0, %v589
    %v591 = vpop.f32.mrf.mxu0
    %592 = vdwg.mxu0
    %s593 = scalar_lea.vmem %s2, 96
    %v594 = vld [vmem:[%s593] sm:$0xff]
    %v595 = vld [vmem:[%s593 + $0x8] sm:$0xff]
    %v596 = vld [vmem:[%s593 + $0x10] sm:$0xff]
    %v597 = vld [vmem:[%s593 + $0x18] sm:$0xff]
    %598 = vmatprep.subr.mxu0 0.0
    %599 = vmatpush1.msra.mxu0 0.0
    %600 = vmatprep.subr.mxu0 0.0
    %601 = vmatpush1.msra.mxu0 0.0
    %602 = vmatprep.subr.mxu0 0.0
    %603 = vmatpush1.msra.mxu0 0.0
    %604 = vmatprep.subr.mxu0 0.0
    %605 = vmatpush1.msra.mxu0 0.0
    %606 = vmatprep.subr.mxu0 0.0
    %607 = vmatpush1.msra.mxu0 0.0
    %608 = vmatprep.subr.mxu0 0.0
    %609 = vmatpush1.msra.mxu0 0.0
    %610 = vmatprep.subr.mxu0 0.0
    %611 = vmatpush1.msra.mxu0 0.0
    %612 = vmatprep.subr.mxu0 0.0
    %613 = vmatpush1.msra.mxu0 0.0
    %614 = vmatprep.subr.mxu0 0.0
    %615 = vmatpush1.msra.mxu0 0.0
    %616 = vmatprep.subr.mxu0 0.0
    %617 = vmatpush1.msra.mxu0 0.0
    %618 = vmatprep.subr.mxu0 0.0
    %619 = vmatpush1.msra.mxu0 0.0
    %620 = vmatprep.subr.mxu0 0.0
    %621 = vmatpush1.msra.mxu0 0.0
    %622 = vmatprep.subr.mxu0 0.0
    %623 = vmatpush1.msra.mxu0 %v597
    %624 = vmatprep.subr.mxu0 0.0
    %625 = vmatpush1.msra.mxu0 %v596
    %626 = vmatprep.subr.mxu0 0.0
    %627 = vmatpush1.msra.mxu0 %v595
    %628 = vmatprep.subr.mxu0 0.0
    %629 = vmatpush1.msra.mxu0 %v594
    %630 = vmatprep.subr.mxu0 0.0
    %631 = vmatpush2.msra.mxu0 0.0
    %632 = vmatprep.subr.mxu0 0.0
    %633 = vmatpush2.msra.mxu0 0.0
    %634 = vmatprep.subr.mxu0 0.0
    %635 = vmatpush2.msra.mxu0 0.0
    %636 = vmatprep.subr.mxu0 0.0
    %637 = vmatpush2.msra.mxu0 0.0
    %638 = vmatprep.subr.mxu0 0.0
    %639 = vmatpush2.msra.mxu0 0.0
    %640 = vmatprep.subr.mxu0 0.0
    %641 = vmatpush2.msra.mxu0 0.0
    %642 = vmatprep.subr.mxu0 0.0
    %643 = vmatpush2.msra.mxu0 0.0
    %644 = vmatprep.subr.mxu0 0.0
    %645 = vmatpush2.msra.mxu0 0.0
    %646 = vmatprep.subr.mxu0 0.0
    %647 = vmatpush2.msra.mxu0 0.0
    %648 = vmatprep.subr.mxu0 0.0
    %649 = vmatpush2.msra.mxu0 0.0
    %650 = vmatprep.subr.mxu0 0.0
    %651 = vmatpush2.msra.mxu0 0.0
    %652 = vmatprep.subr.mxu0 0.0
    %653 = vmatpush2.msra.mxu0 0.0
    %654 = vmatprep.subr.mxu0 0.0
    %655 = vmatpush2.msra.mxu0 0.0
    %656 = vmatprep.subr.mxu0 0.0
    %657 = vmatpush2.msra.mxu0 0.0
    %658 = vmatprep.subr.mxu0 0.0
    %659 = vmatpush2.msra.mxu0 0.0
    %660 = vmatprep.subr.mxu0 0.0
    %661 = vmatpush2.msra.mxu0 0.0
    %662 = vmatprep.mubr.f32.mxu0 0.0
    %663 = vmatmul.mubr.f32.gmra.mxu0 %v34
    %v664 = vpop.f32.mrf.mxu0
    %v665 = vadd.f32 0.0, %v664
    %v666 = vpop.f32.mrf.mxu0
    %667 = vmatprep.mubr.f32.mxu0 0.0
    %668 = vmatmul.mubr.f32.gmra.mxu0 %v37
    %v669 = vpop.f32.mrf.mxu0
    %v670 = vadd.f32 0.0, %v669
    %v671 = vpop.f32.mrf.mxu0
    %672 = vdwg.mxu0
    %v673 = vld [vmem:[%s3] sm:$0xff]
    %v674 = vld [vmem:[%s3 + $0x8] sm:$0xff]
    %v675 = vld [vmem:[%s3 + $0x10] sm:$0xff]
    %v676 = vld [vmem:[%s3 + $0x18] sm:$0xff]
    %677 = vmatprep.subr.mxu0 0.0
    %678 = vmatpush1.msra.mxu0 0.0
    %679 = vmatprep.subr.mxu0 0.0
    %680 = vmatpush1.msra.mxu0 0.0
    %681 = vmatprep.subr.mxu0 0.0
    %682 = vmatpush1.msra.mxu0 0.0
    %683 = vmatprep.subr.mxu0 0.0
    %684 = vmatpush1.msra.mxu0 0.0
    %685 = vmatprep.subr.mxu0 0.0
    %686 = vmatpush1.msra.mxu0 0.0
    %687 = vmatprep.subr.mxu0 0.0
    %688 = vmatpush1.msra.mxu0 0.0
    %689 = vmatprep.subr.mxu0 0.0
    %690 = vmatpush1.msra.mxu0 0.0
    %691 = vmatprep.subr.mxu0 0.0
    %692 = vmatpush1.msra.mxu0 0.0
    %693 = vmatprep.subr.mxu0 0.0
    %694 = vmatpush1.msra.mxu0 0.0
    %695 = vmatprep.subr.mxu0 0.0
    %696 = vmatpush1.msra.mxu0 0.0
    %697 = vmatprep.subr.mxu0 0.0
    %698 = vmatpush1.msra.mxu0 0.0
    %699 = vmatprep.subr.mxu0 0.0
    %700 = vmatpush1.msra.mxu0 0.0
    %701 = vmatprep.subr.mxu0 0.0
    %702 = vmatpush1.msra.mxu0 %v676
    %703 = vmatprep.subr.mxu0 0.0
    %704 = vmatpush1.msra.mxu0 %v675
    %705 = vmatprep.subr.mxu0 0.0
    %706 = vmatpush1.msra.mxu0 %v674
    %707 = vmatprep.subr.mxu0 0.0
    %708 = vmatpush1.msra.mxu0 %v673
    %709 = vmatprep.subr.mxu0 0.0
    %710 = vmatpush2.msra.mxu0 0.0
    %711 = vmatprep.subr.mxu0 0.0
    %712 = vmatpush2.msra.mxu0 0.0
    %713 = vmatprep.subr.mxu0 0.0
    %714 = vmatpush2.msra.mxu0 0.0
    %715 = vmatprep.subr.mxu0 0.0
    %716 = vmatpush2.msra.mxu0 0.0
    %717 = vmatprep.subr.mxu0 0.0
    %718 = vmatpush2.msra.mxu0 0.0
    %719 = vmatprep.subr.mxu0 0.0
    %720 = vmatpush2.msra.mxu0 0.0
    %721 = vmatprep.subr.mxu0 0.0
    %722 = vmatpush2.msra.mxu0 0.0
    %723 = vmatprep.subr.mxu0 0.0
    %724 = vmatpush2.msra.mxu0 0.0
    %725 = vmatprep.subr.mxu0 0.0
    %726 = vmatpush2.msra.mxu0 0.0
    %727 = vmatprep.subr.mxu0 0.0
    %728 = vmatpush2.msra.mxu0 0.0
    %729 = vmatprep.subr.mxu0 0.0
    %730 = vmatpush2.msra.mxu0 0.0
    %731 = vmatprep.subr.mxu0 0.0
    %732 = vmatpush2.msra.mxu0 0.0
    %733 = vmatprep.subr.mxu0 0.0
    %734 = vmatpush2.msra.mxu0 0.0
    %735 = vmatprep.subr.mxu0 0.0
    %736 = vmatpush2.msra.mxu0 0.0
    %737 = vmatprep.subr.mxu0 0.0
    %738 = vmatpush2.msra.mxu0 0.0
    %739 = vmatprep.subr.mxu0 0.0
    %740 = vmatpush2.msra.mxu0 0.0
    %741 = vmatprep.mubr.f32.mxu0 0.0
    %742 = vmatmul.mubr.f32.gmra.mxu0 %v34
    %v743 = vpop.f32.mrf.mxu0
    %v744 = vadd.f32 0.0, %v743
    %v745 = vpop.f32.mrf.mxu0
    %746 = vmatprep.mubr.f32.mxu0 0.0
    %747 = vmatmul.mubr.f32.gmra.mxu0 %v37
    %v748 = vpop.f32.mrf.mxu0
    %v749 = vadd.f32 0.0, %v748
    %v750 = vpop.f32.mrf.mxu0
    %751 = vdwg.mxu0
    %s752 = scalar_lea.vmem %s3, 32
    %v753 = vld [vmem:[%s752] sm:$0xff]
    %v754 = vld [vmem:[%s752 + $0x8] sm:$0xff]
    %v755 = vld [vmem:[%s752 + $0x10] sm:$0xff]
    %v756 = vld [vmem:[%s752 + $0x18] sm:$0xff]
    %757 = vmatprep.subr.mxu0 0.0
    %758 = vmatpush1.msra.mxu0 0.0
    %759 = vmatprep.subr.mxu0 0.0
    %760 = vmatpush1.msra.mxu0 0.0
    %761 = vmatprep.subr.mxu0 0.0
    %762 = vmatpush1.msra.mxu0 0.0
    %763 = vmatprep.subr.mxu0 0.0
    %764 = vmatpush1.msra.mxu0 0.0
    %765 = vmatprep.subr.mxu0 0.0
    %766 = vmatpush1.msra.mxu0 0.0
    %767 = vmatprep.subr.mxu0 0.0
    %768 = vmatpush1.msra.mxu0 0.0
    %769 = vmatprep.subr.mxu0 0.0
    %770 = vmatpush1.msra.mxu0 0.0
    %771 = vmatprep.subr.mxu0 0.0
    %772 = vmatpush1.msra.mxu0 0.0
    %773 = vmatprep.subr.mxu0 0.0
    %774 = vmatpush1.msra.mxu0 0.0
    %775 = vmatprep.subr.mxu0 0.0
    %776 = vmatpush1.msra.mxu0 0.0
    %777 = vmatprep.subr.mxu0 0.0
    %778 = vmatpush1.msra.mxu0 0.0
    %779 = vmatprep.subr.mxu0 0.0
    %780 = vmatpush1.msra.mxu0 0.0
    %781 = vmatprep.subr.mxu0 0.0
    %782 = vmatpush1.msra.mxu0 %v756
    %783 = vmatprep.subr.mxu0 0.0
    %784 = vmatpush1.msra.mxu0 %v755
    %785 = vmatprep.subr.mxu0 0.0
    %786 = vmatpush1.msra.mxu0 %v754
    %787 = vmatprep.subr.mxu0 0.0
    %788 = vmatpush1.msra.mxu0 %v753
    %789 = vmatprep.subr.mxu0 0.0
    %790 = vmatpush2.msra.mxu0 0.0
    %791 = vmatprep.subr.mxu0 0.0
    %792 = vmatpush2.msra.mxu0 0.0
    %793 = vmatprep.subr.mxu0 0.0
    %794 = vmatpush2.msra.mxu0 0.0
    %795 = vmatprep.subr.mxu0 0.0
    %796 = vmatpush2.msra.mxu0 0.0
    %797 = vmatprep.subr.mxu0 0.0
    %798 = vmatpush2.msra.mxu0 0.0
    %799 = vmatprep.subr.mxu0 0.0
    %800 = vmatpush2.msra.mxu0 0.0
    %801 = vmatprep.subr.mxu0 0.0
    %802 = vmatpush2.msra.mxu0 0.0
    %803 = vmatprep.subr.mxu0 0.0
    %804 = vmatpush2.msra.mxu0 0.0
    %805 = vmatprep.subr.mxu0 0.0
    %806 = vmatpush2.msra.mxu0 0.0
    %807 = vmatprep.subr.mxu0 0.0
    %808 = vmatpush2.msra.mxu0 0.0
    %809 = vmatprep.subr.mxu0 0.0
    %810 = vmatpush2.msra.mxu0 0.0
    %811 = vmatprep.subr.mxu0 0.0
    %812 = vmatpush2.msra.mxu0 0.0
    %813 = vmatprep.subr.mxu0 0.0
    %814 = vmatpush2.msra.mxu0 0.0
    %815 = vmatprep.subr.mxu0 0.0
    %816 = vmatpush2.msra.mxu0 0.0
    %817 = vmatprep.subr.mxu0 0.0
    %818 = vmatpush2.msra.mxu0 0.0
    %819 = vmatprep.subr.mxu0 0.0
    %820 = vmatpush2.msra.mxu0 0.0
    %821 = vmatprep.mubr.f32.mxu0 0.0
    %822 = vmatmul.mubr.f32.gmra.mxu0 %v34
    %v823 = vpop.f32.mrf.mxu0
    %v824 = vadd.f32 0.0, %v823
    %v825 = vpop.f32.mrf.mxu0
    %826 = vmatprep.mubr.f32.mxu0 0.0
    %827 = vmatmul.mubr.f32.gmra.mxu0 %v37
    %v828 = vpop.f32.mrf.mxu0
    %v829 = vadd.f32 0.0, %v828
    %v830 = vpop.f32.mrf.mxu0
    %831 = vdwg.mxu0
    %s832 = scalar_lea.vmem %s3, 64
    %v833 = vld [vmem:[%s832] sm:$0xff]
    %v834 = vld [vmem:[%s832 + $0x8] sm:$0xff]
    %v835 = vld [vmem:[%s832 + $0x10] sm:$0xff]
    %v836 = vld [vmem:[%s832 + $0x18] sm:$0xff]
    %837 = vmatprep.subr.mxu0 0.0
    %838 = vmatpush1.msra.mxu0 0.0
    %839 = vmatprep.subr.mxu0 0.0
    %840 = vmatpush1.msra.mxu0 0.0
    %841 = vmatprep.subr.mxu0 0.0
    %842 = vmatpush1.msra.mxu0 0.0
    %843 = vmatprep.subr.mxu0 0.0
    %844 = vmatpush1.msra.mxu0 0.0
    %845 = vmatprep.subr.mxu0 0.0
    %846 = vmatpush1.msra.mxu0 0.0
    %847 = vmatprep.subr.mxu0 0.0
    %848 = vmatpush1.msra.mxu0 0.0
    %849 = vmatprep.subr.mxu0 0.0
    %850 = vmatpush1.msra.mxu0 0.0
    %851 = vmatprep.subr.mxu0 0.0
    %852 = vmatpush1.msra.mxu0 0.0
    %853 = vmatprep.subr.mxu0 0.0
    %854 = vmatpush1.msra.mxu0 0.0
    %855 = vmatprep.subr.mxu0 0.0
    %856 = vmatpush1.msra.mxu0 0.0
    %857 = vmatprep.subr.mxu0 0.0
    %858 = vmatpush1.msra.mxu0 0.0
    %859 = vmatprep.subr.mxu0 0.0
    %860 = vmatpush1.msra.mxu0 0.0
    %861 = vmatprep.subr.mxu0 0.0
    %862 = vmatpush1.msra.mxu0 %v836
    %863 = vmatprep.subr.mxu0 0.0
    %864 = vmatpush1.msra.mxu0 %v835
    %865 = vmatprep.subr.mxu0 0.0
    %866 = vmatpush1.msra.mxu0 %v834
    %867 = vmatprep.subr.mxu0 0.0
    %868 = vmatpush1.msra.mxu0 %v833
    %869 = vmatprep.subr.mxu0 0.0
    %870 = vmatpush2.msra.mxu0 0.0
    %871 = vmatprep.subr.mxu0 0.0
    %872 = vmatpush2.msra.mxu0 0.0
    %873 = vmatprep.subr.mxu0 0.0
    %874 = vmatpush2.msra.mxu0 0.0
    %875 = vmatprep.subr.mxu0 0.0
    %876 = vmatpush2.msra.mxu0 0.0
    %877 = vmatprep.subr.mxu0 0.0
    %878 = vmatpush2.msra.mxu0 0.0
    %879 = vmatprep.subr.mxu0 0.0
    %880 = vmatpush2.msra.mxu0 0.0
    %881 = vmatprep.subr.mxu0 0.0
    %882 = vmatpush2.msra.mxu0 0.0
    %883 = vmatprep.subr.mxu0 0.0
    %884 = vmatpush2.msra.mxu0 0.0
    %885 = vmatprep.subr.mxu0 0.0
    %886 = vmatpush2.msra.mxu0 0.0
    %887 = vmatprep.subr.mxu0 0.0
    %888 = vmatpush2.msra.mxu0 0.0
    %889 = vmatprep.subr.mxu0 0.0
    %890 = vmatpush2.msra.mxu0 0.0
    %891 = vmatprep.subr.mxu0 0.0
    %892 = vmatpush2.msra.mxu0 0.0
    %893 = vmatprep.subr.mxu0 0.0
    %894 = vmatpush2.msra.mxu0 0.0
    %895 = vmatprep.subr.mxu0 0.0
    %896 = vmatpush2.msra.mxu0 0.0
    %897 = vmatprep.subr.mxu0 0.0
    %898 = vmatpush2.msra.mxu0 0.0
    %899 = vmatprep.subr.mxu0 0.0
    %900 = vmatpush2.msra.mxu0 0.0
    %901 = vmatprep.mubr.f32.mxu0 0.0
    %902 = vmatmul.mubr.f32.gmra.mxu0 %v34
    %v903 = vpop.f32.mrf.mxu0
    %v904 = vadd.f32 0.0, %v903
    %v905 = vpop.f32.mrf.mxu0
    %906 = vmatprep.mubr.f32.mxu0 0.0
    %907 = vmatmul.mubr.f32.gmra.mxu0 %v37
    %v908 = vpop.f32.mrf.mxu0
    %v909 = vadd.f32 0.0, %v908
    %v910 = vpop.f32.mrf.mxu0
    %911 = vdwg.mxu0
    %s912 = scalar_lea.vmem %s3, 96
    %v913 = vld [vmem:[%s912] sm:$0xff]
    %v914 = vld [vmem:[%s912 + $0x8] sm:$0xff]
    %v915 = vld [vmem:[%s912 + $0x10] sm:$0xff]
    %v916 = vld [vmem:[%s912 + $0x18] sm:$0xff]
    %917 = vmatprep.subr.mxu0 0.0
    %918 = vmatpush1.msra.mxu0 0.0
    %919 = vmatprep.subr.mxu0 0.0
    %920 = vmatpush1.msra.mxu0 0.0
    %921 = vmatprep.subr.mxu0 0.0
    %922 = vmatpush1.msra.mxu0 0.0
    %923 = vmatprep.subr.mxu0 0.0
    %924 = vmatpush1.msra.mxu0 0.0
    %925 = vmatprep.subr.mxu0 0.0
    %926 = vmatpush1.msra.mxu0 0.0
    %927 = vmatprep.subr.mxu0 0.0
    %928 = vmatpush1.msra.mxu0 0.0
    %929 = vmatprep.subr.mxu0 0.0
    %930 = vmatpush1.msra.mxu0 0.0
    %931 = vmatprep.subr.mxu0 0.0
    %932 = vmatpush1.msra.mxu0 0.0
    %933 = vmatprep.subr.mxu0 0.0
    %934 = vmatpush1.msra.mxu0 0.0
    %935 = vmatprep.subr.mxu0 0.0
    %936 = vmatpush1.msra.mxu0 0.0
    %937 = vmatprep.subr.mxu0 0.0
    %938 = vmatpush1.msra.mxu0 0.0
    %939 = vmatprep.subr.mxu0 0.0
    %940 = vmatpush1.msra.mxu0 0.0
    %941 = vmatprep.subr.mxu0 0.0
    %942 = vmatpush1.msra.mxu0 %v916
    %943 = vmatprep.subr.mxu0 0.0
    %944 = vmatpush1.msra.mxu0 %v915
    %945 = vmatprep.subr.mxu0 0.0
    %946 = vmatpush1.msra.mxu0 %v914
    %947 = vmatprep.subr.mxu0 0.0
    %948 = vmatpush1.msra.mxu0 %v913
    %949 = vmatprep.subr.mxu0 0.0
    %950 = vmatpush2.msra.mxu0 0.0
    %951 = vmatprep.subr.mxu0 0.0
    %952 = vmatpush2.msra.mxu0 0.0
    %953 = vmatprep.subr.mxu0 0.0
    %954 = vmatpush2.msra.mxu0 0.0
    %955 = vmatprep.subr.mxu0 0.0
    %956 = vmatpush2.msra.mxu0 0.0
    %957 = vmatprep.subr.mxu0 0.0
    %958 = vmatpush2.msra.mxu0 0.0
    %959 = vmatprep.subr.mxu0 0.0
    %960 = vmatpush2.msra.mxu0 0.0
    %961 = vmatprep.subr.mxu0 0.0
    %962 = vmatpush2.msra.mxu0 0.0
    %963 = vmatprep.subr.mxu0 0.0
    %964 = vmatpush2.msra.mxu0 0.0
    %965 = vmatprep.subr.mxu0 0.0
    %966 = vmatpush2.msra.mxu0 0.0
    %967 = vmatprep.subr.mxu0 0.0
    %968 = vmatpush2.msra.mxu0 0.0
    %969 = vmatprep.subr.mxu0 0.0
    %970 = vmatpush2.msra.mxu0 0.0
    %971 = vmatprep.subr.mxu0 0.0
    %972 = vmatpush2.msra.mxu0 0.0
    %973 = vmatprep.subr.mxu0 0.0
    %974 = vmatpush2.msra.mxu0 0.0
    %975 = vmatprep.subr.mxu0 0.0
    %976 = vmatpush2.msra.mxu0 0.0
    %977 = vmatprep.subr.mxu0 0.0
    %978 = vmatpush2.msra.mxu0 0.0
    %979 = vmatprep.subr.mxu0 0.0
    %980 = vmatpush2.msra.mxu0 0.0
    %981 = vmatprep.mubr.f32.mxu0 0.0
    %982 = vmatmul.mubr.f32.gmra.mxu0 %v34
    %v983 = vpop.f32.mrf.mxu0
    %v984 = vadd.f32 0.0, %v983
    %v985 = vpop.f32.mrf.mxu0
    %986 = vmatprep.mubr.f32.mxu0 0.0
    %987 = vmatmul.mubr.f32.gmra.mxu0 %v37
    %v988 = vpop.f32.mrf.mxu0
    %v989 = vadd.f32 0.0, %v988
    %v990 = vpop.f32.mrf.mxu0
    %991 = vdwg.mxu0
    %vm992 = vcmask 64512
    %v994 = vsel %vm992, %v106, 0
    %v997 = vsel %vm992, %v425, 0
    %999 = vmatprep.subr.mxu0 0.0
    %1000 = vmatpush1.xpose.msra.mxu0 0.0
    %1001 = vmatprep.subr.mxu0 0.0
    %1002 = vmatpush1.xpose.msra.mxu0 0.0
    %1003 = vmatprep.subr.mxu0 0.0
    %1004 = vmatpush1.xpose.msra.mxu0 0.0
    %1005 = vmatprep.subr.mxu0 0.0
    %1006 = vmatpush1.xpose.msra.mxu0 0.0
    %1007 = vmatprep.subr.mxu0 0.0
    %1008 = vmatpush1.xpose.msra.mxu0 0.0
    %1009 = vmatprep.subr.mxu0 0.0
    %1010 = vmatpush1.xpose.msra.mxu0 0.0
    %1011 = vmatprep.subr.mxu0 0.0
    %1012 = vmatpush1.xpose.msra.mxu0 0.0
    %1013 = vmatprep.subr.mxu0 0.0
    %1014 = vmatpush1.xpose.msra.mxu0 0.0
    %1015 = vmatprep.subr.mxu0 0.0
    %1016 = vmatpush1.xpose.msra.mxu0 0.0
    %1017 = vmatprep.subr.mxu0 0.0
    %1018 = vmatpush1.xpose.msra.mxu0 0.0
    %1019 = vmatprep.subr.mxu0 0.0
    %1020 = vmatpush1.xpose.msra.mxu0 0.0
    %1021 = vmatprep.subr.mxu0 0.0
    %1022 = vmatpush1.xpose.msra.mxu0 0.0
    %1023 = vmatprep.subr.mxu0 0.0
    %1024 = vmatpush1.xpose.msra.mxu0 0.0
    %1025 = vmatprep.subr.mxu0 0.0
    %1026 = vmatpush1.xpose.msra.mxu0 0.0
    %1027 = vmatprep.subr.mxu0 0.0
    %1028 = vmatpush1.xpose.msra.mxu0 0.0
    %1029 = vmatprep.subr.mxu0 0.0
    %1030 = vmatpush1.xpose.msra.mxu0 %v997
    %1031 = vmatprep.subr.mxu0 0.0
    %1032 = vmatpush2.xpose.msra.mxu0 0.0
    %1033 = vmatprep.subr.mxu0 0.0
    %1034 = vmatpush2.xpose.msra.mxu0 0.0
    %1035 = vmatprep.subr.mxu0 0.0
    %1036 = vmatpush2.xpose.msra.mxu0 0.0
    %1037 = vmatprep.subr.mxu0 0.0
    %1038 = vmatpush2.xpose.msra.mxu0 0.0
    %1039 = vmatprep.subr.mxu0 0.0
    %1040 = vmatpush2.xpose.msra.mxu0 0.0
    %1041 = vmatprep.subr.mxu0 0.0
    %1042 = vmatpush2.xpose.msra.mxu0 0.0
    %1043 = vmatprep.subr.mxu0 0.0
    %1044 = vmatpush2.xpose.msra.mxu0 0.0
    %1045 = vmatprep.subr.mxu0 0.0
    %1046 = vmatpush2.xpose.msra.mxu0 0.0
    %1047 = vmatprep.subr.mxu0 0.0
    %1048 = vmatpush2.xpose.msra.mxu0 0.0
    %1049 = vmatprep.subr.mxu0 0.0
    %1050 = vmatpush2.xpose.msra.mxu0 0.0
    %1051 = vmatprep.subr.mxu0 0.0
    %1052 = vmatpush2.xpose.msra.mxu0 0.0
    %1053 = vmatprep.subr.mxu0 0.0
    %1054 = vmatpush2.xpose.msra.mxu0 0.0
    %1055 = vmatprep.subr.mxu0 0.0
    %1056 = vmatpush2.xpose.msra.mxu0 0.0
    %1057 = vmatprep.subr.mxu0 0.0
    %1058 = vmatpush2.xpose.msra.mxu0 0.0
    %1059 = vmatprep.subr.mxu0 0.0
    %1060 = vmatpush2.xpose.msra.mxu0 0.0
    %1061 = vmatprep.subr.mxu0 0.0
    %1062 = vmatpush2.xpose.msra.mxu0 0.0
    %1063 = vmatprep.mubr.f32.mxu0 0.0
    %1064 = vmatmul.mubr.f32.gmra.mxu0 %v994
    %v1065 = vpop.f32.mrf.mxu0
    %v1066 = vadd.f32 0.0, %v1065
    %v1067 = vpop.f32.mrf.mxu0
    %1068 = vdwg.mxu0
    %v1070 = vsel %vm992, %v186, 0
    %v1073 = vsel %vm992, %v505, 0
    %1075 = vmatprep.subr.mxu0 0.0
    %1076 = vmatpush1.xpose.msra.mxu0 0.0
    %1077 = vmatprep.subr.mxu0 0.0
    %1078 = vmatpush1.xpose.msra.mxu0 0.0
    %1079 = vmatprep.subr.mxu0 0.0
    %1080 = vmatpush1.xpose.msra.mxu0 0.0
    %1081 = vmatprep.subr.mxu0 0.0
    %1082 = vmatpush1.xpose.msra.mxu0 0.0
    %1083 = vmatprep.subr.mxu0 0.0
    %1084 = vmatpush1.xpose.msra.mxu0 0.0
    %1085 = vmatprep.subr.mxu0 0.0
    %1086 = vmatpush1.xpose.msra.mxu0 0.0
    %1087 = vmatprep.subr.mxu0 0.0
    %1088 = vmatpush1.xpose.msra.mxu0 0.0
    %1089 = vmatprep.subr.mxu0 0.0
    %1090 = vmatpush1.xpose.msra.mxu0 0.0
    %1091 = vmatprep.subr.mxu0 0.0
    %1092 = vmatpush1.xpose.msra.mxu0 0.0
    %1093 = vmatprep.subr.mxu0 0.0
    %1094 = vmatpush1.xpose.msra.mxu0 0.0
    %1095 = vmatprep.subr.mxu0 0.0
    %1096 = vmatpush1.xpose.msra.mxu0 0.0
    %1097 = vmatprep.subr.mxu0 0.0
    %1098 = vmatpush1.xpose.msra.mxu0 0.0
    %1099 = vmatprep.subr.mxu0 0.0
    %1100 = vmatpush1.xpose.msra.mxu0 0.0
    %1101 = vmatprep.subr.mxu0 0.0
    %1102 = vmatpush1.xpose.msra.mxu0 0.0
    %1103 = vmatprep.subr.mxu0 0.0
    %1104 = vmatpush1.xpose.msra.mxu0 0.0
    %1105 = vmatprep.subr.mxu0 0.0
    %1106 = vmatpush1.xpose.msra.mxu0 %v1073
    %1107 = vmatprep.subr.mxu0 0.0
    %1108 = vmatpush2.xpose.msra.mxu0 0.0
    %1109 = vmatprep.subr.mxu0 0.0
    %1110 = vmatpush2.xpose.msra.mxu0 0.0
    %1111 = vmatprep.subr.mxu0 0.0
    %1112 = vmatpush2.xpose.msra.mxu0 0.0
    %1113 = vmatprep.subr.mxu0 0.0
    %1114 = vmatpush2.xpose.msra.mxu0 0.0
    %1115 = vmatprep.subr.mxu0 0.0
    %1116 = vmatpush2.xpose.msra.mxu0 0.0
    %1117 = vmatprep.subr.mxu0 0.0
    %1118 = vmatpush2.xpose.msra.mxu0 0.0
    %1119 = vmatprep.subr.mxu0 0.0
    %1120 = vmatpush2.xpose.msra.mxu0 0.0
    %1121 = vmatprep.subr.mxu0 0.0
    %1122 = vmatpush2.xpose.msra.mxu0 0.0
    %1123 = vmatprep.subr.mxu0 0.0
    %1124 = vmatpush2.xpose.msra.mxu0 0.0
    %1125 = vmatprep.subr.mxu0 0.0
    %1126 = vmatpush2.xpose.msra.mxu0 0.0
    %1127 = vmatprep.subr.mxu0 0.0
    %1128 = vmatpush2.xpose.msra.mxu0 0.0
    %1129 = vmatprep.subr.mxu0 0.0
    %1130 = vmatpush2.xpose.msra.mxu0 0.0
    %1131 = vmatprep.subr.mxu0 0.0
    %1132 = vmatpush2.xpose.msra.mxu0 0.0
    %1133 = vmatprep.subr.mxu0 0.0
    %1134 = vmatpush2.xpose.msra.mxu0 0.0
    %1135 = vmatprep.subr.mxu0 0.0
    %1136 = vmatpush2.xpose.msra.mxu0 0.0
    %1137 = vmatprep.subr.mxu0 0.0
    %1138 = vmatpush2.xpose.msra.mxu0 0.0
    %1139 = vmatprep.mubr.f32.mxu0 0.0
    %1140 = vmatmul.mubr.f32.gmra.mxu0 %v1070
    %v1141 = vpop.f32.mrf.mxu0
    %v1142 = vadd.f32 0.0, %v1141
    %v1143 = vpop.f32.mrf.mxu0
    %1144 = vdwg.mxu0
    %v1146 = vsel %vm992, %v266, 0
    %v1149 = vsel %vm992, %v585, 0
    %1151 = vmatprep.subr.mxu0 0.0
    %1152 = vmatpush1.xpose.msra.mxu0 0.0
    %1153 = vmatprep.subr.mxu0 0.0
    %1154 = vmatpush1.xpose.msra.mxu0 0.0
    %1155 = vmatprep.subr.mxu0 0.0
    %1156 = vmatpush1.xpose.msra.mxu0 0.0
    %1157 = vmatprep.subr.mxu0 0.0
    %1158 = vmatpush1.xpose.msra.mxu0 0.0
    %1159 = vmatprep.subr.mxu0 0.0
    %1160 = vmatpush1.xpose.msra.mxu0 0.0
    %1161 = vmatprep.subr.mxu0 0.0
    %1162 = vmatpush1.xpose.msra.mxu0 0.0
    %1163 = vmatprep.subr.mxu0 0.0
    %1164 = vmatpush1.xpose.msra.mxu0 0.0
    %1165 = vmatprep.subr.mxu0 0.0
    %1166 = vmatpush1.xpose.msra.mxu0 0.0
    %1167 = vmatprep.subr.mxu0 0.0
    %1168 = vmatpush1.xpose.msra.mxu0 0.0
    %1169 = vmatprep.subr.mxu0 0.0
    %1170 = vmatpush1.xpose.msra.mxu0 0.0
    %1171 = vmatprep.subr.mxu0 0.0
    %1172 = vmatpush1.xpose.msra.mxu0 0.0
    %1173 = vmatprep.subr.mxu0 0.0
    %1174 = vmatpush1.xpose.msra.mxu0 0.0
    %1175 = vmatprep.subr.mxu0 0.0
    %1176 = vmatpush1.xpose.msra.mxu0 0.0
    %1177 = vmatprep.subr.mxu0 0.0
    %1178 = vmatpush1.xpose.msra.mxu0 0.0
    %1179 = vmatprep.subr.mxu0 0.0
    %1180 = vmatpush1.xpose.msra.mxu0 0.0
    %1181 = vmatprep.subr.mxu0 0.0
    %1182 = vmatpush1.xpose.msra.mxu0 %v1149
    %1183 = vmatprep.subr.mxu0 0.0
    %1184 = vmatpush2.xpose.msra.mxu0 0.0
    %1185 = vmatprep.subr.mxu0 0.0
    %1186 = vmatpush2.xpose.msra.mxu0 0.0
    %1187 = vmatprep.subr.mxu0 0.0
    %1188 = vmatpush2.xpose.msra.mxu0 0.0
    %1189 = vmatprep.subr.mxu0 0.0
    %1190 = vmatpush2.xpose.msra.mxu0 0.0
    %1191 = vmatprep.subr.mxu0 0.0
    %1192 = vmatpush2.xpose.msra.mxu0 0.0
    %1193 = vmatprep.subr.mxu0 0.0
    %1194 = vmatpush2.xpose.msra.mxu0 0.0
    %1195 = vmatprep.subr.mxu0 0.0
    %1196 = vmatpush2.xpose.msra.mxu0 0.0
    %1197 = vmatprep.subr.mxu0 0.0
    %1198 = vmatpush2.xpose.msra.mxu0 0.0
    %1199 = vmatprep.subr.mxu0 0.0
    %1200 = vmatpush2.xpose.msra.mxu0 0.0
    %1201 = vmatprep.subr.mxu0 0.0
    %1202 = vmatpush2.xpose.msra.mxu0 0.0
    %1203 = vmatprep.subr.mxu0 0.0
    %1204 = vmatpush2.xpose.msra.mxu0 0.0
    %1205 = vmatprep.subr.mxu0 0.0
    %1206 = vmatpush2.xpose.msra.mxu0 0.0
    %1207 = vmatprep.subr.mxu0 0.0
    %1208 = vmatpush2.xpose.msra.mxu0 0.0
    %1209 = vmatprep.subr.mxu0 0.0
    %1210 = vmatpush2.xpose.msra.mxu0 0.0
    %1211 = vmatprep.subr.mxu0 0.0
    %1212 = vmatpush2.xpose.msra.mxu0 0.0
    %1213 = vmatprep.subr.mxu0 0.0
    %1214 = vmatpush2.xpose.msra.mxu0 0.0
    %1215 = vmatprep.mubr.f32.mxu0 0.0
    %1216 = vmatmul.mubr.f32.gmra.mxu0 %v1146
    %v1217 = vpop.f32.mrf.mxu0
    %v1218 = vadd.f32 0.0, %v1217
    %v1219 = vpop.f32.mrf.mxu0
    %1220 = vdwg.mxu0
    %v1222 = vsel %vm992, %v346, 0
    %v1225 = vsel %vm992, %v665, 0
    %1227 = vmatprep.subr.mxu0 0.0
    %1228 = vmatpush1.xpose.msra.mxu0 0.0
    %1229 = vmatprep.subr.mxu0 0.0
    %1230 = vmatpush1.xpose.msra.mxu0 0.0
    %1231 = vmatprep.subr.mxu0 0.0
    %1232 = vmatpush1.xpose.msra.mxu0 0.0
    %1233 = vmatprep.subr.mxu0 0.0
    %1234 = vmatpush1.xpose.msra.mxu0 0.0
    %1235 = vmatprep.subr.mxu0 0.0
    %1236 = vmatpush1.xpose.msra.mxu0 0.0
    %1237 = vmatprep.subr.mxu0 0.0
    %1238 = vmatpush1.xpose.msra.mxu0 0.0
    %1239 = vmatprep.subr.mxu0 0.0
    %1240 = vmatpush1.xpose.msra.mxu0 0.0
    %1241 = vmatprep.subr.mxu0 0.0
    %1242 = vmatpush1.xpose.msra.mxu0 0.0
    %1243 = vmatprep.subr.mxu0 0.0
    %1244 = vmatpush1.xpose.msra.mxu0 0.0
    %1245 = vmatprep.subr.mxu0 0.0
    %1246 = vmatpush1.xpose.msra.mxu0 0.0
    %1247 = vmatprep.subr.mxu0 0.0
    %1248 = vmatpush1.xpose.msra.mxu0 0.0
    %1249 = vmatprep.subr.mxu0 0.0
    %1250 = vmatpush1.xpose.msra.mxu0 0.0
    %1251 = vmatprep.subr.mxu0 0.0
    %1252 = vmatpush1.xpose.msra.mxu0 0.0
    %1253 = vmatprep.subr.mxu0 0.0
    %1254 = vmatpush1.xpose.msra.mxu0 0.0
    %1255 = vmatprep.subr.mxu0 0.0
    %1256 = vmatpush1.xpose.msra.mxu0 0.0
    %1257 = vmatprep.subr.mxu0 0.0
    %1258 = vmatpush1.xpose.msra.mxu0 %v1225
    %1259 = vmatprep.subr.mxu0 0.0
    %1260 = vmatpush2.xpose.msra.mxu0 0.0
    %1261 = vmatprep.subr.mxu0 0.0
    %1262 = vmatpush2.xpose.msra.mxu0 0.0
    %1263 = vmatprep.subr.mxu0 0.0
    %1264 = vmatpush2.xpose.msra.mxu0 0.0
    %1265 = vmatprep.subr.mxu0 0.0
    %1266 = vmatpush2.xpose.msra.mxu0 0.0
    %1267 = vmatprep.subr.mxu0 0.0
    %1268 = vmatpush2.xpose.msra.mxu0 0.0
    %1269 = vmatprep.subr.mxu0 0.0
    %1270 = vmatpush2.xpose.msra.mxu0 0.0
    %1271 = vmatprep.subr.mxu0 0.0
    %1272 = vmatpush2.xpose.msra.mxu0 0.0
    %1273 = vmatprep.subr.mxu0 0.0
    %1274 = vmatpush2.xpose.msra.mxu0 0.0
    %1275 = vmatprep.subr.mxu0 0.0
    %1276 = vmatpush2.xpose.msra.mxu0 0.0
    %1277 = vmatprep.subr.mxu0 0.0
    %1278 = vmatpush2.xpose.msra.mxu0 0.0
    %1279 = vmatprep.subr.mxu0 0.0
    %1280 = vmatpush2.xpose.msra.mxu0 0.0
    %1281 = vmatprep.subr.mxu0 0.0
    %1282 = vmatpush2.xpose.msra.mxu0 0.0
    %1283 = vmatprep.subr.mxu0 0.0
    %1284 = vmatpush2.xpose.msra.mxu0 0.0
    %1285 = vmatprep.subr.mxu0 0.0
    %1286 = vmatpush2.xpose.msra.mxu0 0.0
    %1287 = vmatprep.subr.mxu0 0.0
    %1288 = vmatpush2.xpose.msra.mxu0 0.0
    %1289 = vmatprep.subr.mxu0 0.0
    %1290 = vmatpush2.xpose.msra.mxu0 0.0
    %1291 = vmatprep.mubr.f32.mxu0 0.0
    %1292 = vmatmul.mubr.f32.gmra.mxu0 %v1222
    %v1293 = vpop.f32.mrf.mxu0
    %v1294 = vadd.f32 0.0, %v1293
    %v1295 = vpop.f32.mrf.mxu0
    %1296 = vdwg.mxu0
    %v1298 = vsel %vm992, %v111, 0
    %v1301 = vsel %vm992, %v430, 0
    %1303 = vmatprep.subr.mxu0 0.0
    %1304 = vmatpush1.xpose.msra.mxu0 0.0
    %1305 = vmatprep.subr.mxu0 0.0
    %1306 = vmatpush1.xpose.msra.mxu0 0.0
    %1307 = vmatprep.subr.mxu0 0.0
    %1308 = vmatpush1.xpose.msra.mxu0 0.0
    %1309 = vmatprep.subr.mxu0 0.0
    %1310 = vmatpush1.xpose.msra.mxu0 0.0
    %1311 = vmatprep.subr.mxu0 0.0
    %1312 = vmatpush1.xpose.msra.mxu0 0.0
    %1313 = vmatprep.subr.mxu0 0.0
    %1314 = vmatpush1.xpose.msra.mxu0 0.0
    %1315 = vmatprep.subr.mxu0 0.0
    %1316 = vmatpush1.xpose.msra.mxu0 0.0
    %1317 = vmatprep.subr.mxu0 0.0
    %1318 = vmatpush1.xpose.msra.mxu0 0.0
    %1319 = vmatprep.subr.mxu0 0.0
    %1320 = vmatpush1.xpose.msra.mxu0 0.0
    %1321 = vmatprep.subr.mxu0 0.0
    %1322 = vmatpush1.xpose.msra.mxu0 0.0
    %1323 = vmatprep.subr.mxu0 0.0
    %1324 = vmatpush1.xpose.msra.mxu0 0.0
    %1325 = vmatprep.subr.mxu0 0.0
    %1326 = vmatpush1.xpose.msra.mxu0 0.0
    %1327 = vmatprep.subr.mxu0 0.0
    %1328 = vmatpush1.xpose.msra.mxu0 0.0
    %1329 = vmatprep.subr.mxu0 0.0
    %1330 = vmatpush1.xpose.msra.mxu0 0.0
    %1331 = vmatprep.subr.mxu0 0.0
    %1332 = vmatpush1.xpose.msra.mxu0 0.0
    %1333 = vmatprep.subr.mxu0 0.0
    %1334 = vmatpush1.xpose.msra.mxu0 %v1301
    %1335 = vmatprep.subr.mxu0 0.0
    %1336 = vmatpush2.xpose.msra.mxu0 0.0
    %1337 = vmatprep.subr.mxu0 0.0
    %1338 = vmatpush2.xpose.msra.mxu0 0.0
    %1339 = vmatprep.subr.mxu0 0.0
    %1340 = vmatpush2.xpose.msra.mxu0 0.0
    %1341 = vmatprep.subr.mxu0 0.0
    %1342 = vmatpush2.xpose.msra.mxu0 0.0
    %1343 = vmatprep.subr.mxu0 0.0
    %1344 = vmatpush2.xpose.msra.mxu0 0.0
    %1345 = vmatprep.subr.mxu0 0.0
    %1346 = vmatpush2.xpose.msra.mxu0 0.0
    %1347 = vmatprep.subr.mxu0 0.0
    %1348 = vmatpush2.xpose.msra.mxu0 0.0
    %1349 = vmatprep.subr.mxu0 0.0
    %1350 = vmatpush2.xpose.msra.mxu0 0.0
    %1351 = vmatprep.subr.mxu0 0.0
    %1352 = vmatpush2.xpose.msra.mxu0 0.0
    %1353 = vmatprep.subr.mxu0 0.0
    %1354 = vmatpush2.xpose.msra.mxu0 0.0
    %1355 = vmatprep.subr.mxu0 0.0
    %1356 = vmatpush2.xpose.msra.mxu0 0.0
    %1357 = vmatprep.subr.mxu0 0.0
    %1358 = vmatpush2.xpose.msra.mxu0 0.0
    %1359 = vmatprep.subr.mxu0 0.0
    %1360 = vmatpush2.xpose.msra.mxu0 0.0
    %1361 = vmatprep.subr.mxu0 0.0
    %1362 = vmatpush2.xpose.msra.mxu0 0.0
    %1363 = vmatprep.subr.mxu0 0.0
    %1364 = vmatpush2.xpose.msra.mxu0 0.0
    %1365 = vmatprep.subr.mxu0 0.0
    %1366 = vmatpush2.xpose.msra.mxu0 0.0
    %1367 = vmatprep.mubr.f32.mxu0 0.0
    %1368 = vmatmul.mubr.f32.gmra.mxu0 %v1298
    %v1369 = vpop.f32.mrf.mxu0
    %v1370 = vadd.f32 0.0, %v1369
    %v1371 = vpop.f32.mrf.mxu0
    %1372 = vdwg.mxu0
    %v1374 = vsel %vm992, %v191, 0
    %v1377 = vsel %vm992, %v510, 0
    %1379 = vmatprep.subr.mxu0 0.0
    %1380 = vmatpush1.xpose.msra.mxu0 0.0
    %1381 = vmatprep.subr.mxu0 0.0
    %1382 = vmatpush1.xpose.msra.mxu0 0.0
    %1383 = vmatprep.subr.mxu0 0.0
    %1384 = vmatpush1.xpose.msra.mxu0 0.0
    %1385 = vmatprep.subr.mxu0 0.0
    %1386 = vmatpush1.xpose.msra.mxu0 0.0
    %1387 = vmatprep.subr.mxu0 0.0
    %1388 = vmatpush1.xpose.msra.mxu0 0.0
    %1389 = vmatprep.subr.mxu0 0.0
    %1390 = vmatpush1.xpose.msra.mxu0 0.0
    %1391 = vmatprep.subr.mxu0 0.0
    %1392 = vmatpush1.xpose.msra.mxu0 0.0
    %1393 = vmatprep.subr.mxu0 0.0
    %1394 = vmatpush1.xpose.msra.mxu0 0.0
    %1395 = vmatprep.subr.mxu0 0.0
    %1396 = vmatpush1.xpose.msra.mxu0 0.0
    %1397 = vmatprep.subr.mxu0 0.0
    %1398 = vmatpush1.xpose.msra.mxu0 0.0
    %1399 = vmatprep.subr.mxu0 0.0
    %1400 = vmatpush1.xpose.msra.mxu0 0.0
    %1401 = vmatprep.subr.mxu0 0.0
    %1402 = vmatpush1.xpose.msra.mxu0 0.0
    %1403 = vmatprep.subr.mxu0 0.0
    %1404 = vmatpush1.xpose.msra.mxu0 0.0
    %1405 = vmatprep.subr.mxu0 0.0
    %1406 = vmatpush1.xpose.msra.mxu0 0.0
    %1407 = vmatprep.subr.mxu0 0.0
    %1408 = vmatpush1.xpose.msra.mxu0 0.0
    %1409 = vmatprep.subr.mxu0 0.0
    %1410 = vmatpush1.xpose.msra.mxu0 %v1377
    %1411 = vmatprep.subr.mxu0 0.0
    %1412 = vmatpush2.xpose.msra.mxu0 0.0
    %1413 = vmatprep.subr.mxu0 0.0
    %1414 = vmatpush2.xpose.msra.mxu0 0.0
    %1415 = vmatprep.subr.mxu0 0.0
    %1416 = vmatpush2.xpose.msra.mxu0 0.0
    %1417 = vmatprep.subr.mxu0 0.0
    %1418 = vmatpush2.xpose.msra.mxu0 0.0
    %1419 = vmatprep.subr.mxu0 0.0
    %1420 = vmatpush2.xpose.msra.mxu0 0.0
    %1421 = vmatprep.subr.mxu0 0.0
    %1422 = vmatpush2.xpose.msra.mxu0 0.0
    %1423 = vmatprep.subr.mxu0 0.0
    %1424 = vmatpush2.xpose.msra.mxu0 0.0
    %1425 = vmatprep.subr.mxu0 0.0
    %1426 = vmatpush2.xpose.msra.mxu0 0.0
    %1427 = vmatprep.subr.mxu0 0.0
    %1428 = vmatpush2.xpose.msra.mxu0 0.0
    %1429 = vmatprep.subr.mxu0 0.0
    %1430 = vmatpush2.xpose.msra.mxu0 0.0
    %1431 = vmatprep.subr.mxu0 0.0
    %1432 = vmatpush2.xpose.msra.mxu0 0.0
    %1433 = vmatprep.subr.mxu0 0.0
    %1434 = vmatpush2.xpose.msra.mxu0 0.0
    %1435 = vmatprep.subr.mxu0 0.0
    %1436 = vmatpush2.xpose.msra.mxu0 0.0
    %1437 = vmatprep.subr.mxu0 0.0
    %1438 = vmatpush2.xpose.msra.mxu0 0.0
    %1439 = vmatprep.subr.mxu0 0.0
    %1440 = vmatpush2.xpose.msra.mxu0 0.0
    %1441 = vmatprep.subr.mxu0 0.0
    %1442 = vmatpush2.xpose.msra.mxu0 0.0
    %1443 = vmatprep.mubr.f32.mxu0 0.0
    %1444 = vmatmul.mubr.f32.gmra.mxu0 %v1374
    %v1445 = vpop.f32.mrf.mxu0
    %v1446 = vadd.f32 0.0, %v1445
    %v1447 = vpop.f32.mrf.mxu0
    %1448 = vdwg.mxu0
    %v1450 = vsel %vm992, %v271, 0
    %v1453 = vsel %vm992, %v590, 0
    %1455 = vmatprep.subr.mxu0 0.0
    %1456 = vmatpush1.xpose.msra.mxu0 0.0
    %1457 = vmatprep.subr.mxu0 0.0
    %1458 = vmatpush1.xpose.msra.mxu0 0.0
    %1459 = vmatprep.subr.mxu0 0.0
    %1460 = vmatpush1.xpose.msra.mxu0 0.0
    %1461 = vmatprep.subr.mxu0 0.0
    %1462 = vmatpush1.xpose.msra.mxu0 0.0
    %1463 = vmatprep.subr.mxu0 0.0
    %1464 = vmatpush1.xpose.msra.mxu0 0.0
    %1465 = vmatprep.subr.mxu0 0.0
    %1466 = vmatpush1.xpose.msra.mxu0 0.0
    %1467 = vmatprep.subr.mxu0 0.0
    %1468 = vmatpush1.xpose.msra.mxu0 0.0
    %1469 = vmatprep.subr.mxu0 0.0
    %1470 = vmatpush1.xpose.msra.mxu0 0.0
    %1471 = vmatprep.subr.mxu0 0.0
    %1472 = vmatpush1.xpose.msra.mxu0 0.0
    %1473 = vmatprep.subr.mxu0 0.0
    %1474 = vmatpush1.xpose.msra.mxu0 0.0
    %1475 = vmatprep.subr.mxu0 0.0
    %1476 = vmatpush1.xpose.msra.mxu0 0.0
    %1477 = vmatprep.subr.mxu0 0.0
    %1478 = vmatpush1.xpose.msra.mxu0 0.0
    %1479 = vmatprep.subr.mxu0 0.0
    %1480 = vmatpush1.xpose.msra.mxu0 0.0
    %1481 = vmatprep.subr.mxu0 0.0
    %1482 = vmatpush1.xpose.msra.mxu0 0.0
    %1483 = vmatprep.subr.mxu0 0.0
    %1484 = vmatpush1.xpose.msra.mxu0 0.0
    %1485 = vmatprep.subr.mxu0 0.0
    %1486 = vmatpush1.xpose.msra.mxu0 %v1453
    %1487 = vmatprep.subr.mxu0 0.0
    %1488 = vmatpush2.xpose.msra.mxu0 0.0
    %1489 = vmatprep.subr.mxu0 0.0
    %1490 = vmatpush2.xpose.msra.mxu0 0.0
    %1491 = vmatprep.subr.mxu0 0.0
    %1492 = vmatpush2.xpose.msra.mxu0 0.0
    %1493 = vmatprep.subr.mxu0 0.0
    %1494 = vmatpush2.xpose.msra.mxu0 0.0
    %1495 = vmatprep.subr.mxu0 0.0
    %1496 = vmatpush2.xpose.msra.mxu0 0.0
    %1497 = vmatprep.subr.mxu0 0.0
    %1498 = vmatpush2.xpose.msra.mxu0 0.0
    %1499 = vmatprep.subr.mxu0 0.0
    %1500 = vmatpush2.xpose.msra.mxu0 0.0
    %1501 = vmatprep.subr.mxu0 0.0
    %1502 = vmatpush2.xpose.msra.mxu0 0.0
    %1503 = vmatprep.subr.mxu0 0.0
    %1504 = vmatpush2.xpose.msra.mxu0 0.0
    %1505 = vmatprep.subr.mxu0 0.0
    %1506 = vmatpush2.xpose.msra.mxu0 0.0
    %1507 = vmatprep.subr.mxu0 0.0
    %1508 = vmatpush2.xpose.msra.mxu0 0.0
    %1509 = vmatprep.subr.mxu0 0.0
    %1510 = vmatpush2.xpose.msra.mxu0 0.0
    %1511 = vmatprep.subr.mxu0 0.0
    %1512 = vmatpush2.xpose.msra.mxu0 0.0
    %1513 = vmatprep.subr.mxu0 0.0
    %1514 = vmatpush2.xpose.msra.mxu0 0.0
    %1515 = vmatprep.subr.mxu0 0.0
    %1516 = vmatpush2.xpose.msra.mxu0 0.0
    %1517 = vmatprep.subr.mxu0 0.0
    %1518 = vmatpush2.xpose.msra.mxu0 0.0
    %1519 = vmatprep.mubr.f32.mxu0 0.0
    %1520 = vmatmul.mubr.f32.gmra.mxu0 %v1450
    %v1521 = vpop.f32.mrf.mxu0
    %v1522 = vadd.f32 0.0, %v1521
    %v1523 = vpop.f32.mrf.mxu0
    %1524 = vdwg.mxu0
    %v1526 = vsel %vm992, %v351, 0
    %v1529 = vsel %vm992, %v670, 0
    %1531 = vmatprep.subr.mxu0 0.0
    %1532 = vmatpush1.xpose.msra.mxu0 0.0
    %1533 = vmatprep.subr.mxu0 0.0
    %1534 = vmatpush1.xpose.msra.mxu0 0.0
    %1535 = vmatprep.subr.mxu0 0.0
    %1536 = vmatpush1.xpose.msra.mxu0 0.0
    %1537 = vmatprep.subr.mxu0 0.0
    %1538 = vmatpush1.xpose.msra.mxu0 0.0
    %1539 = vmatprep.subr.mxu0 0.0
    %1540 = vmatpush1.xpose.msra.mxu0 0.0
    %1541 = vmatprep.subr.mxu0 0.0
    %1542 = vmatpush1.xpose.msra.mxu0 0.0
    %1543 = vmatprep.subr.mxu0 0.0
    %1544 = vmatpush1.xpose.msra.mxu0 0.0
    %1545 = vmatprep.subr.mxu0 0.0
    %1546 = vmatpush1.xpose.msra.mxu0 0.0
    %1547 = vmatprep.subr.mxu0 0.0
    %1548 = vmatpush1.xpose.msra.mxu0 0.0
    %1549 = vmatprep.subr.mxu0 0.0
    %1550 = vmatpush1.xpose.msra.mxu0 0.0
    %1551 = vmatprep.subr.mxu0 0.0
    %1552 = vmatpush1.xpose.msra.mxu0 0.0
    %1553 = vmatprep.subr.mxu0 0.0
    %1554 = vmatpush1.xpose.msra.mxu0 0.0
    %1555 = vmatprep.subr.mxu0 0.0
    %1556 = vmatpush1.xpose.msra.mxu0 0.0
    %1557 = vmatprep.subr.mxu0 0.0
    %1558 = vmatpush1.xpose.msra.mxu0 0.0
    %1559 = vmatprep.subr.mxu0 0.0
    %1560 = vmatpush1.xpose.msra.mxu0 0.0
    %1561 = vmatprep.subr.mxu0 0.0
    %1562 = vmatpush1.xpose.msra.mxu0 %v1529
    %1563 = vmatprep.subr.mxu0 0.0
    %1564 = vmatpush2.xpose.msra.mxu0 0.0
    %1565 = vmatprep.subr.mxu0 0.0
    %1566 = vmatpush2.xpose.msra.mxu0 0.0
    %1567 = vmatprep.subr.mxu0 0.0
    %1568 = vmatpush2.xpose.msra.mxu0 0.0
    %1569 = vmatprep.subr.mxu0 0.0
    %1570 = vmatpush2.xpose.msra.mxu0 0.0
    %1571 = vmatprep.subr.mxu0 0.0
    %1572 = vmatpush2.xpose.msra.mxu0 0.0
    %1573 = vmatprep.subr.mxu0 0.0
    %1574 = vmatpush2.xpose.msra.mxu0 0.0
    %1575 = vmatprep.subr.mxu0 0.0
    %1576 = vmatpush2.xpose.msra.mxu0 0.0
    %1577 = vmatprep.subr.mxu0 0.0
    %1578 = vmatpush2.xpose.msra.mxu0 0.0
    %1579 = vmatprep.subr.mxu0 0.0
    %1580 = vmatpush2.xpose.msra.mxu0 0.0
    %1581 = vmatprep.subr.mxu0 0.0
    %1582 = vmatpush2.xpose.msra.mxu0 0.0
    %1583 = vmatprep.subr.mxu0 0.0
    %1584 = vmatpush2.xpose.msra.mxu0 0.0
    %1585 = vmatprep.subr.mxu0 0.0
    %1586 = vmatpush2.xpose.msra.mxu0 0.0
    %1587 = vmatprep.subr.mxu0 0.0
    %1588 = vmatpush2.xpose.msra.mxu0 0.0
    %1589 = vmatprep.subr.mxu0 0.0
    %1590 = vmatpush2.xpose.msra.mxu0 0.0
    %1591 = vmatprep.subr.mxu0 0.0
    %1592 = vmatpush2.xpose.msra.mxu0 0.0
    %1593 = vmatprep.subr.mxu0 0.0
    %1594 = vmatpush2.xpose.msra.mxu0 0.0
    %1595 = vmatprep.mubr.f32.mxu0 0.0
    %1596 = vmatmul.mubr.f32.gmra.mxu0 %v1526
    %v1597 = vpop.f32.mrf.mxu0
    %v1598 = vadd.f32 0.0, %v1597
    %v1599 = vpop.f32.mrf.mxu0
    %1600 = vdwg.mxu0
    %v1601 = vld [vmem:[%s5] sm:$0xff]
    %v1602 = vld [vmem:[%s5 + $0x8] sm:$0xff]
    %v1603 = vld [vmem:[%s5 + $0x10] sm:$0xff]
    %v1604 = vld [vmem:[%s5 + $0x18] sm:$0xff]
    %v1605 = vld [vmem:[%s5 + $0x20] sm:$0xff]
    %v1606 = vld [vmem:[%s5 + $0x28] sm:$0xff]
    %v1607 = vld [vmem:[%s5 + $0x30] sm:$0xff]
    %v1608 = vld [vmem:[%s5 + $0x38] sm:$0xff]
    %v1609 = vadd.f32 %v1066, %v1601
    %v1610 = vadd.f32 %v1142, %v1602
    %v1611 = vadd.f32 %v1218, %v1603
    %v1612 = vadd.f32 %v1294, %v1604
    %v1613 = vadd.f32 %v1370, %v1605
    %v1614 = vadd.f32 %v1446, %v1606
    %v1615 = vadd.f32 %v1522, %v1607
    %v1616 = vadd.f32 %v1598, %v1608
    %v1617 = vsel %vm992, %v1609, -inf
    %1618 = vmax.xlane.f32.xlu0 %v1617
    %v1619 = vpop.xlane.xlu0 %1618
    %v1620 = vsel %vm992, %v1610, -inf
    %1621 = vmax.xlane.f32.xlu0 %v1620
    %v1622 = vpop.xlane.xlu0 %1621
    %v1623 = vsel %vm992, %v1611, -inf
    %1624 = vmax.xlane.f32.xlu0 %v1623
    %v1625 = vpop.xlane.xlu0 %1624
    %v1626 = vsel %vm992, %v1612, -inf
    %1627 = vmax.xlane.f32.xlu0 %v1626
    %v1628 = vpop.xlane.xlu0 %1627
    %v1629 = vsel %vm992, %v1613, -inf
    %1630 = vmax.xlane.f32.xlu0 %v1629
    %v1631 = vpop.xlane.xlu0 %1630
    %v1632 = vsel %vm992, %v1614, -inf
    %1633 = vmax.xlane.f32.xlu0 %v1632
    %v1634 = vpop.xlane.xlu0 %1633
    %v1635 = vsel %vm992, %v1615, -inf
    %1636 = vmax.xlane.f32.xlu0 %v1635
    %v1637 = vpop.xlane.xlu0 %1636
    %v1638 = vsel %vm992, %v1616, -inf
    %1639 = vmax.xlane.f32.xlu0 %v1638
    %v1640 = vpop.xlane.xlu0 %1639
    %v1641 = vsub.f32 %v1609, %v1619
    %v1642 = vsub.f32 %v1610, %v1622
    %v1643 = vsub.f32 %v1611, %v1625
    %v1644 = vsub.f32 %v1612, %v1628
    %v1645 = vsub.f32 %v1613, %v1631
    %v1646 = vsub.f32 %v1614, %v1634
    %v1647 = vsub.f32 %v1615, %v1637
    %v1648 = vsub.f32 %v1616, %v1640
    %v1649 = vmul.f32 %v1641, 1.442695
    %v1650 = vpow.pop %v1649
    %v1651 = vmul.f32 %v1642, 1.442695
    %v1652 = vpow.pop %v1651
    %v1653 = vmul.f32 %v1643, 1.442695
    %v1654 = vpow.pop %v1653
    %v1655 = vmul.f32 %v1644, 1.442695
    %v1656 = vpow.pop %v1655
    %v1657 = vmul.f32 %v1645, 1.442695
    %v1658 = vpow.pop %v1657
    %v1659 = vmul.f32 %v1646, 1.442695
    %v1660 = vpow.pop %v1659
    %v1661 = vmul.f32 %v1647, 1.442695
    %v1662 = vpow.pop %v1661
    %v1663 = vmul.f32 %v1648, 1.442695
    %v1664 = vpow.pop %v1663
    %v1665 = vsel %vm992, %v1650, 0.0
    %1666 = vadd.xlane.f32.xlu0 %v1665
    %v1667 = vpop.xlane.xlu0 %1666
    %v1668 = vsel %vm992, %v1652, 0.0
    %1669 = vadd.xlane.f32.xlu0 %v1668
    %v1670 = vpop.xlane.xlu0 %1669
    %v1671 = vsel %vm992, %v1654, 0.0
    %1672 = vadd.xlane.f32.xlu0 %v1671
    %v1673 = vpop.xlane.xlu0 %1672
    %v1674 = vsel %vm992, %v1656, 0.0
    %1675 = vadd.xlane.f32.xlu0 %v1674
    %v1676 = vpop.xlane.xlu0 %1675
    %v1677 = vsel %vm992, %v1658, 0.0
    %1678 = vadd.xlane.f32.xlu0 %v1677
    %v1679 = vpop.xlane.xlu0 %1678
    %v1680 = vsel %vm992, %v1660, 0.0
    %1681 = vadd.xlane.f32.xlu0 %v1680
    %v1682 = vpop.xlane.xlu0 %1681
    %v1683 = vsel %vm992, %v1662, 0.0
    %1684 = vadd.xlane.f32.xlu0 %v1683
    %v1685 = vpop.xlane.xlu0 %1684
    %v1686 = vsel %vm992, %v1664, 0.0
    %1687 = vadd.xlane.f32.xlu0 %v1686
    %v1688 = vpop.xlane.xlu0 %1687
    %v1689 = vrcp.pop %v1667
    %v1690 = vrcp.pop %v1670
    %v1691 = vrcp.pop %v1673
    %v1692 = vrcp.pop %v1676
    %v1693 = vrcp.pop %v1679
    %v1694 = vrcp.pop %v1682
    %v1695 = vrcp.pop %v1685
    %v1696 = vrcp.pop %v1688
    %v1697 = vmul.f32 %v1650, %v1689
    %v1698 = vmul.f32 %v1652, %v1690
    %v1699 = vmul.f32 %v1654, %v1691
    %v1700 = vmul.f32 %v1656, %v1692
    %v1701 = vmul.f32 %v1658, %v1693
    %v1702 = vmul.f32 %v1660, %v1694
    %v1703 = vmul.f32 %v1662, %v1695
    %v1704 = vmul.f32 %v1664, %v1696
    %1705 = vst.msk [vmem:[%s7] sm:$0xff] %vm992, %v1697
    %1706 = vst.msk [vmem:[%s7 + $0x8] sm:$0xff] %vm992, %v1698
    %1707 = vst.msk [vmem:[%s7 + $0x10] sm:$0xff] %vm992, %v1699
    %1708 = vst.msk [vmem:[%s7 + $0x18] sm:$0xff] %vm992, %v1700
    %1709 = vst.msk [vmem:[%s7 + $0x20] sm:$0xff] %vm992, %v1701
    %1710 = vst.msk [vmem:[%s7 + $0x28] sm:$0xff] %vm992, %v1702
    %1711 = vst.msk [vmem:[%s7 + $0x30] sm:$0xff] %vm992, %v1703
    %1712 = vst.msk [vmem:[%s7 + $0x38] sm:$0xff] %vm992, %v1704
    %v1714 = vsel %vm992, %v1697, 0
    %1716 = vmatprep.subr.mxu0 0.0
    %1717 = vmatpush1.msra.mxu0 0.0
    %1718 = vmatprep.subr.mxu0 0.0
    %1719 = vmatpush1.msra.mxu0 0.0
    %1720 = vmatprep.subr.mxu0 0.0
    %1721 = vmatpush1.msra.mxu0 0.0
    %1722 = vmatprep.subr.mxu0 0.0
    %1723 = vmatpush1.msra.mxu0 0.0
    %1724 = vmatprep.subr.mxu0 0.0
    %1725 = vmatpush1.msra.mxu0 0.0
    %1726 = vmatprep.subr.mxu0 0.0
    %1727 = vmatpush1.msra.mxu0 0.0
    %1728 = vmatprep.subr.mxu0 0.0
    %1729 = vmatpush1.msra.mxu0 0.0
    %1730 = vmatprep.subr.mxu0 0.0
    %1731 = vmatpush1.msra.mxu0 0.0
    %1732 = vmatprep.subr.mxu0 0.0
    %1733 = vmatpush1.msra.mxu0 0.0
    %1734 = vmatprep.subr.mxu0 0.0
    %1735 = vmatpush1.msra.mxu0 0.0
    %1736 = vmatprep.subr.mxu0 0.0
    %1737 = vmatpush1.msra.mxu0 0.0
    %1738 = vmatprep.subr.mxu0 0.0
    %1739 = vmatpush1.msra.mxu0 0.0
    %1740 = vmatprep.subr.mxu0 0.0
    %1741 = vmatpush1.msra.mxu0 0.0
    %1742 = vmatprep.subr.mxu0 0.0
    %1743 = vmatpush1.msra.mxu0 0.0
    %1744 = vmatprep.subr.mxu0 0.0
    %1745 = vmatpush1.msra.mxu0 0.0
    %1746 = vmatprep.subr.mxu0 0.0
    %1747 = vmatpush1.msra.mxu0 %v744
    %1748 = vmatprep.subr.mxu0 0.0
    %1749 = vmatpush2.msra.mxu0 0.0
    %1750 = vmatprep.subr.mxu0 0.0
    %1751 = vmatpush2.msra.mxu0 0.0
    %1752 = vmatprep.subr.mxu0 0.0
    %1753 = vmatpush2.msra.mxu0 0.0
    %1754 = vmatprep.subr.mxu0 0.0
    %1755 = vmatpush2.msra.mxu0 0.0
    %1756 = vmatprep.subr.mxu0 0.0
    %1757 = vmatpush2.msra.mxu0 0.0
    %1758 = vmatprep.subr.mxu0 0.0
    %1759 = vmatpush2.msra.mxu0 0.0
    %1760 = vmatprep.subr.mxu0 0.0
    %1761 = vmatpush2.msra.mxu0 0.0
    %1762 = vmatprep.subr.mxu0 0.0
    %1763 = vmatpush2.msra.mxu0 0.0
    %1764 = vmatprep.subr.mxu0 0.0
    %1765 = vmatpush2.msra.mxu0 0.0
    %1766 = vmatprep.subr.mxu0 0.0
    %1767 = vmatpush2.msra.mxu0 0.0
    %1768 = vmatprep.subr.mxu0 0.0
    %1769 = vmatpush2.msra.mxu0 0.0
    %1770 = vmatprep.subr.mxu0 0.0
    %1771 = vmatpush2.msra.mxu0 0.0
    %1772 = vmatprep.subr.mxu0 0.0
    %1773 = vmatpush2.msra.mxu0 0.0
    %1774 = vmatprep.subr.mxu0 0.0
    %1775 = vmatpush2.msra.mxu0 0.0
    %1776 = vmatprep.subr.mxu0 0.0
    %1777 = vmatpush2.msra.mxu0 0.0
    %1778 = vmatprep.subr.mxu0 0.0
    %1779 = vmatpush2.msra.mxu0 0.0
    %1780 = vmatprep.mubr.f32.mxu0 0.0
    %1781 = vmatmul.mubr.f32.gmra.mxu0 %v1714
    %v1782 = vpop.f32.mrf.mxu0
    %v1783 = vadd.f32 0.0, %v1782
    %v1784 = vpop.f32.mrf.mxu0
    %1785 = vdwg.mxu0
    %v1786 = vld [vmem:[%s4] sm:$0xff]
    %v1788 = vsel %vm992, %v1698, 0
    %1790 = vmatprep.subr.mxu0 0.0
    %1791 = vmatpush1.msra.mxu0 0.0
    %1792 = vmatprep.subr.mxu0 0.0
    %1793 = vmatpush1.msra.mxu0 0.0
    %1794 = vmatprep.subr.mxu0 0.0
    %1795 = vmatpush1.msra.mxu0 0.0
    %1796 = vmatprep.subr.mxu0 0.0
    %1797 = vmatpush1.msra.mxu0 0.0
    %1798 = vmatprep.subr.mxu0 0.0
    %1799 = vmatpush1.msra.mxu0 0.0
    %1800 = vmatprep.subr.mxu0 0.0
    %1801 = vmatpush1.msra.mxu0 0.0
    %1802 = vmatprep.subr.mxu0 0.0
    %1803 = vmatpush1.msra.mxu0 0.0
    %1804 = vmatprep.subr.mxu0 0.0
    %1805 = vmatpush1.msra.mxu0 0.0
    %1806 = vmatprep.subr.mxu0 0.0
    %1807 = vmatpush1.msra.mxu0 0.0
    %1808 = vmatprep.subr.mxu0 0.0
    %1809 = vmatpush1.msra.mxu0 0.0
    %1810 = vmatprep.subr.mxu0 0.0
    %1811 = vmatpush1.msra.mxu0 0.0
    %1812 = vmatprep.subr.mxu0 0.0
    %1813 = vmatpush1.msra.mxu0 0.0
    %1814 = vmatprep.subr.mxu0 0.0
    %1815 = vmatpush1.msra.mxu0 0.0
    %1816 = vmatprep.subr.mxu0 0.0
    %1817 = vmatpush1.msra.mxu0 0.0
    %1818 = vmatprep.subr.mxu0 0.0
    %1819 = vmatpush1.msra.mxu0 0.0
    %1820 = vmatprep.subr.mxu0 0.0
    %1821 = vmatpush1.msra.mxu0 %v824
    %1822 = vmatprep.subr.mxu0 0.0
    %1823 = vmatpush2.msra.mxu0 0.0
    %1824 = vmatprep.subr.mxu0 0.0
    %1825 = vmatpush2.msra.mxu0 0.0
    %1826 = vmatprep.subr.mxu0 0.0
    %1827 = vmatpush2.msra.mxu0 0.0
    %1828 = vmatprep.subr.mxu0 0.0
    %1829 = vmatpush2.msra.mxu0 0.0
    %1830 = vmatprep.subr.mxu0 0.0
    %1831 = vmatpush2.msra.mxu0 0.0
    %1832 = vmatprep.subr.mxu0 0.0
    %1833 = vmatpush2.msra.mxu0 0.0
    %1834 = vmatprep.subr.mxu0 0.0
    %1835 = vmatpush2.msra.mxu0 0.0
    %1836 = vmatprep.subr.mxu0 0.0
    %1837 = vmatpush2.msra.mxu0 0.0
    %1838 = vmatprep.subr.mxu0 0.0
    %1839 = vmatpush2.msra.mxu0 0.0
    %1840 = vmatprep.subr.mxu0 0.0
    %1841 = vmatpush2.msra.mxu0 0.0
    %1842 = vmatprep.subr.mxu0 0.0
    %1843 = vmatpush2.msra.mxu0 0.0
    %1844 = vmatprep.subr.mxu0 0.0
    %1845 = vmatpush2.msra.mxu0 0.0
    %1846 = vmatprep.subr.mxu0 0.0
    %1847 = vmatpush2.msra.mxu0 0.0
    %1848 = vmatprep.subr.mxu0 0.0
    %1849 = vmatpush2.msra.mxu0 0.0
    %1850 = vmatprep.subr.mxu0 0.0
    %1851 = vmatpush2.msra.mxu0 0.0
    %1852 = vmatprep.subr.mxu0 0.0
    %1853 = vmatpush2.msra.mxu0 0.0
    %1854 = vmatprep.mubr.f32.mxu0 0.0
    %1855 = vmatmul.mubr.f32.gmra.mxu0 %v1788
    %v1856 = vpop.f32.mrf.mxu0
    %v1857 = vadd.f32 0.0, %v1856
    %v1858 = vpop.f32.mrf.mxu0
    %1859 = vdwg.mxu0
    %s1860 = scalar_lea.vmem %s4, 8
    %v1861 = vld [vmem:[%s1860] sm:$0xff]
    %v1863 = vsel %vm992, %v1857, 0
    %1865 = vmatprep.subr.mxu0 0.0
    %1866 = vmatpush1.msra.mxu0 0.0
    %1867 = vmatprep.subr.mxu0 0.0
    %1868 = vmatpush1.msra.mxu0 0.0
    %1869 = vmatprep.subr.mxu0 0.0
    %1870 = vmatpush1.msra.mxu0 0.0
    %1871 = vmatprep.subr.mxu0 0.0
    %1872 = vmatpush1.msra.mxu0 0.0
    %1873 = vmatprep.subr.mxu0 0.0
    %1874 = vmatpush1.msra.mxu0 0.0
    %1875 = vmatprep.subr.mxu0 0.0
    %1876 = vmatpush1.msra.mxu0 0.0
    %1877 = vmatprep.subr.mxu0 0.0
    %1878 = vmatpush1.msra.mxu0 0.0
    %1879 = vmatprep.subr.mxu0 0.0
    %1880 = vmatpush1.msra.mxu0 0.0
    %1881 = vmatprep.subr.mxu0 0.0
    %1882 = vmatpush1.msra.mxu0 0.0
    %1883 = vmatprep.subr.mxu0 0.0
    %1884 = vmatpush1.msra.mxu0 0.0
    %1885 = vmatprep.subr.mxu0 0.0
    %1886 = vmatpush1.msra.mxu0 0.0
    %1887 = vmatprep.subr.mxu0 0.0
    %1888 = vmatpush1.msra.mxu0 0.0
    %1889 = vmatprep.subr.mxu0 0.0
    %1890 = vmatpush1.msra.mxu0 0.0
    %1891 = vmatprep.subr.mxu0 0.0
    %1892 = vmatpush1.msra.mxu0 0.0
    %1893 = vmatprep.subr.mxu0 0.0
    %1894 = vmatpush1.msra.mxu0 0.0
    %1895 = vmatprep.subr.mxu0 0.0
    %1896 = vmatpush1.msra.mxu0 %v1861
    %1897 = vmatprep.subr.mxu0 0.0
    %1898 = vmatpush2.msra.mxu0 0.0
    %1899 = vmatprep.subr.mxu0 0.0
    %1900 = vmatpush2.msra.mxu0 0.0
    %1901 = vmatprep.subr.mxu0 0.0
    %1902 = vmatpush2.msra.mxu0 0.0
    %1903 = vmatprep.subr.mxu0 0.0
    %1904 = vmatpush2.msra.mxu0 0.0
    %1905 = vmatprep.subr.mxu0 0.0
    %1906 = vmatpush2.msra.mxu0 0.0
    %1907 = vmatprep.subr.mxu0 0.0
    %1908 = vmatpush2.msra.mxu0 0.0
    %1909 = vmatprep.subr.mxu0 0.0
    %1910 = vmatpush2.msra.mxu0 0.0
    %1911 = vmatprep.subr.mxu0 0.0
    %1912 = vmatpush2.msra.mxu0 0.0
    %1913 = vmatprep.subr.mxu0 0.0
    %1914 = vmatpush2.msra.mxu0 0.0
    %1915 = vmatprep.subr.mxu0 0.0
    %1916 = vmatpush2.msra.mxu0 0.0
    %1917 = vmatprep.subr.mxu0 0.0
    %1918 = vmatpush2.msra.mxu0 0.0
    %1919 = vmatprep.subr.mxu0 0.0
    %1920 = vmatpush2.msra.mxu0 0.0
    %1921 = vmatprep.subr.mxu0 0.0
    %1922 = vmatpush2.msra.mxu0 0.0
    %1923 = vmatprep.subr.mxu0 0.0
    %1924 = vmatpush2.msra.mxu0 0.0
    %1925 = vmatprep.subr.mxu0 0.0
    %1926 = vmatpush2.msra.mxu0 0.0
    %1927 = vmatprep.subr.mxu0 0.0
    %1928 = vmatpush2.msra.mxu0 0.0
    %1929 = vmatprep.mubr.f32.mxu0 0.0
    %1930 = vmatmul.mubr.f32.gmra.mxu0 %v1863
    %v1931 = vpop.f32.mrf.mxu0
    %v1932 = vadd.f32 0.0, %v1931
    %v1933 = vpop.f32.mrf.mxu0
    %1934 = vdwg.mxu0
    %v1936 = vsel %vm992, %v1783, 0
    %1938 = vmatprep.subr.mxu0 0.0
    %1939 = vmatpush1.msra.mxu0 0.0
    %1940 = vmatprep.subr.mxu0 0.0
    %1941 = vmatpush1.msra.mxu0 0.0
    %1942 = vmatprep.subr.mxu0 0.0
    %1943 = vmatpush1.msra.mxu0 0.0
    %1944 = vmatprep.subr.mxu0 0.0
    %1945 = vmatpush1.msra.mxu0 0.0
    %1946 = vmatprep.subr.mxu0 0.0
    %1947 = vmatpush1.msra.mxu0 0.0
    %1948 = vmatprep.subr.mxu0 0.0
    %1949 = vmatpush1.msra.mxu0 0.0
    %1950 = vmatprep.subr.mxu0 0.0
    %1951 = vmatpush1.msra.mxu0 0.0
    %1952 = vmatprep.subr.mxu0 0.0
    %1953 = vmatpush1.msra.mxu0 0.0
    %1954 = vmatprep.subr.mxu0 0.0
    %1955 = vmatpush1.msra.mxu0 0.0
    %1956 = vmatprep.subr.mxu0 0.0
    %1957 = vmatpush1.msra.mxu0 0.0
    %1958 = vmatprep.subr.mxu0 0.0
    %1959 = vmatpush1.msra.mxu0 0.0
    %1960 = vmatprep.subr.mxu0 0.0
    %1961 = vmatpush1.msra.mxu0 0.0
    %1962 = vmatprep.subr.mxu0 0.0
    %1963 = vmatpush1.msra.mxu0 0.0
    %1964 = vmatprep.subr.mxu0 0.0
    %1965 = vmatpush1.msra.mxu0 0.0
    %1966 = vmatprep.subr.mxu0 0.0
    %1967 = vmatpush1.msra.mxu0 0.0
    %1968 = vmatprep.subr.mxu0 0.0
    %1969 = vmatpush1.msra.mxu0 %v1786
    %1970 = vmatprep.subr.mxu0 0.0
    %1971 = vmatpush2.msra.mxu0 0.0
    %1972 = vmatprep.subr.mxu0 0.0
    %1973 = vmatpush2.msra.mxu0 0.0
    %1974 = vmatprep.subr.mxu0 0.0
    %1975 = vmatpush2.msra.mxu0 0.0
    %1976 = vmatprep.subr.mxu0 0.0
    %1977 = vmatpush2.msra.mxu0 0.0
    %1978 = vmatprep.subr.mxu0 0.0
    %1979 = vmatpush2.msra.mxu0 0.0
    %1980 = vmatprep.subr.mxu0 0.0
    %1981 = vmatpush2.msra.mxu0 0.0
    %1982 = vmatprep.subr.mxu0 0.0
    %1983 = vmatpush2.msra.mxu0 0.0
    %1984 = vmatprep.subr.mxu0 0.0
    %1985 = vmatpush2.msra.mxu0 0.0
    %1986 = vmatprep.subr.mxu0 0.0
    %1987 = vmatpush2.msra.mxu0 0.0
    %1988 = vmatprep.subr.mxu0 0.0
    %1989 = vmatpush2.msra.mxu0 0.0
    %1990 = vmatprep.subr.mxu0 0.0
    %1991 = vmatpush2.msra.mxu0 0.0
    %1992 = vmatprep.subr.mxu0 0.0
    %1993 = vmatpush2.msra.mxu0 0.0
    %1994 = vmatprep.subr.mxu0 0.0
    %1995 = vmatpush2.msra.mxu0 0.0
    %1996 = vmatprep.subr.mxu0 0.0
    %1997 = vmatpush2.msra.mxu0 0.0
    %1998 = vmatprep.subr.mxu0 0.0
    %1999 = vmatpush2.msra.mxu0 0.0
    %2000 = vmatprep.subr.mxu0 0.0
    %2001 = vmatpush2.msra.mxu0 0.0
    %2002 = vmatprep.mubr.f32.mxu0 0.0
    %2003 = vmatmul.mubr.f32.gmra.mxu0 %v1936
    %v2004 = vpop.f32.mrf.mxu0
    %v2005 = vadd.f32 %v1932, %v2004
    %v2006 = vpop.f32.mrf.mxu0
    %2007 = vdwg.mxu0
    %v2009 = vsel %vm992, %v1699, 0
    %2011 = vmatprep.subr.mxu0 0.0
    %2012 = vmatpush1.msra.mxu0 0.0
    %2013 = vmatprep.subr.mxu0 0.0
    %2014 = vmatpush1.msra.mxu0 0.0
    %2015 = vmatprep.subr.mxu0 0.0
    %2016 = vmatpush1.msra.mxu0 0.0
    %2017 = vmatprep.subr.mxu0 0.0
    %2018 = vmatpush1.msra.mxu0 0.0
    %2019 = vmatprep.subr.mxu0 0.0
    %2020 = vmatpush1.msra.mxu0 0.0
    %2021 = vmatprep.subr.mxu0 0.0
    %2022 = vmatpush1.msra.mxu0 0.0
    %2023 = vmatprep.subr.mxu0 0.0
    %2024 = vmatpush1.msra.mxu0 0.0
    %2025 = vmatprep.subr.mxu0 0.0
    %2026 = vmatpush1.msra.mxu0 0.0
    %2027 = vmatprep.subr.mxu0 0.0
    %2028 = vmatpush1.msra.mxu0 0.0
    %2029 = vmatprep.subr.mxu0 0.0
    %2030 = vmatpush1.msra.mxu0 0.0
    %2031 = vmatprep.subr.mxu0 0.0
    %2032 = vmatpush1.msra.mxu0 0.0
    %2033 = vmatprep.subr.mxu0 0.0
    %2034 = vmatpush1.msra.mxu0 0.0
    %2035 = vmatprep.subr.mxu0 0.0
    %2036 = vmatpush1.msra.mxu0 0.0
    %2037 = vmatprep.subr.mxu0 0.0
    %2038 = vmatpush1.msra.mxu0 0.0
    %2039 = vmatprep.subr.mxu0 0.0
    %2040 = vmatpush1.msra.mxu0 0.0
    %2041 = vmatprep.subr.mxu0 0.0
    %2042 = vmatpush1.msra.mxu0 %v904
    %2043 = vmatprep.subr.mxu0 0.0
    %2044 = vmatpush2.msra.mxu0 0.0
    %2045 = vmatprep.subr.mxu0 0.0
    %2046 = vmatpush2.msra.mxu0 0.0
    %2047 = vmatprep.subr.mxu0 0.0
    %2048 = vmatpush2.msra.mxu0 0.0
    %2049 = vmatprep.subr.mxu0 0.0
    %2050 = vmatpush2.msra.mxu0 0.0
    %2051 = vmatprep.subr.mxu0 0.0
    %2052 = vmatpush2.msra.mxu0 0.0
    %2053 = vmatprep.subr.mxu0 0.0
    %2054 = vmatpush2.msra.mxu0 0.0
    %2055 = vmatprep.subr.mxu0 0.0
    %2056 = vmatpush2.msra.mxu0 0.0
    %2057 = vmatprep.subr.mxu0 0.0
    %2058 = vmatpush2.msra.mxu0 0.0
    %2059 = vmatprep.subr.mxu0 0.0
    %2060 = vmatpush2.msra.mxu0 0.0
    %2061 = vmatprep.subr.mxu0 0.0
    %2062 = vmatpush2.msra.mxu0 0.0
    %2063 = vmatprep.subr.mxu0 0.0
    %2064 = vmatpush2.msra.mxu0 0.0
    %2065 = vmatprep.subr.mxu0 0.0
    %2066 = vmatpush2.msra.mxu0 0.0
    %2067 = vmatprep.subr.mxu0 0.0
    %2068 = vmatpush2.msra.mxu0 0.0
    %2069 = vmatprep.subr.mxu0 0.0
    %2070 = vmatpush2.msra.mxu0 0.0
    %2071 = vmatprep.subr.mxu0 0.0
    %2072 = vmatpush2.msra.mxu0 0.0
    %2073 = vmatprep.subr.mxu0 0.0
    %2074 = vmatpush2.msra.mxu0 0.0
    %2075 = vmatprep.mubr.f32.mxu0 0.0
    %2076 = vmatmul.mubr.f32.gmra.mxu0 %v2009
    %v2077 = vpop.f32.mrf.mxu0
    %v2078 = vadd.f32 0.0, %v2077
    %v2079 = vpop.f32.mrf.mxu0
    %2080 = vdwg.mxu0
    %s2081 = scalar_lea.vmem %s4, 16
    %v2082 = vld [vmem:[%s2081] sm:$0xff]
    %v2084 = vsel %vm992, %v2078, 0
    %2086 = vmatprep.subr.mxu0 0.0
    %2087 = vmatpush1.msra.mxu0 0.0
    %2088 = vmatprep.subr.mxu0 0.0
    %2089 = vmatpush1.msra.mxu0 0.0
    %2090 = vmatprep.subr.mxu0 0.0
    %2091 = vmatpush1.msra.mxu0 0.0
    %2092 = vmatprep.subr.mxu0 0.0
    %2093 = vmatpush1.msra.mxu0 0.0
    %2094 = vmatprep.subr.mxu0 0.0
    %2095 = vmatpush1.msra.mxu0 0.0
    %2096 = vmatprep.subr.mxu0 0.0
    %2097 = vmatpush1.msra.mxu0 0.0
    %2098 = vmatprep.subr.mxu0 0.0
    %2099 = vmatpush1.msra.mxu0 0.0
    %2100 = vmatprep.subr.mxu0 0.0
    %2101 = vmatpush1.msra.mxu0 0.0
    %2102 = vmatprep.subr.mxu0 0.0
    %2103 = vmatpush1.msra.mxu0 0.0
    %2104 = vmatprep.subr.mxu0 0.0
    %2105 = vmatpush1.msra.mxu0 0.0
    %2106 = vmatprep.subr.mxu0 0.0
    %2107 = vmatpush1.msra.mxu0 0.0
    %2108 = vmatprep.subr.mxu0 0.0
    %2109 = vmatpush1.msra.mxu0 0.0
    %2110 = vmatprep.subr.mxu0 0.0
    %2111 = vmatpush1.msra.mxu0 0.0
    %2112 = vmatprep.subr.mxu0 0.0
    %2113 = vmatpush1.msra.mxu0 0.0
    %2114 = vmatprep.subr.mxu0 0.0
    %2115 = vmatpush1.msra.mxu0 0.0
    %2116 = vmatprep.subr.mxu0 0.0
    %2117 = vmatpush1.msra.mxu0 %v2082
    %2118 = vmatprep.subr.mxu0 0.0
    %2119 = vmatpush2.msra.mxu0 0.0
    %2120 = vmatprep.subr.mxu0 0.0
    %2121 = vmatpush2.msra.mxu0 0.0
    %2122 = vmatprep.subr.mxu0 0.0
    %2123 = vmatpush2.msra.mxu0 0.0
    %2124 = vmatprep.subr.mxu0 0.0
    %2125 = vmatpush2.msra.mxu0 0.0
    %2126 = vmatprep.subr.mxu0 0.0
    %2127 = vmatpush2.msra.mxu0 0.0
    %2128 = vmatprep.subr.mxu0 0.0
    %2129 = vmatpush2.msra.mxu0 0.0
    %2130 = vmatprep.subr.mxu0 0.0
    %2131 = vmatpush2.msra.mxu0 0.0
    %2132 = vmatprep.subr.mxu0 0.0
    %2133 = vmatpush2.msra.mxu0 0.0
    %2134 = vmatprep.subr.mxu0 0.0
    %2135 = vmatpush2.msra.mxu0 0.0
    %2136 = vmatprep.subr.mxu0 0.0
    %2137 = vmatpush2.msra.mxu0 0.0
    %2138 = vmatprep.subr.mxu0 0.0
    %2139 = vmatpush2.msra.mxu0 0.0
    %2140 = vmatprep.subr.mxu0 0.0
    %2141 = vmatpush2.msra.mxu0 0.0
    %2142 = vmatprep.subr.mxu0 0.0
    %2143 = vmatpush2.msra.mxu0 0.0
    %2144 = vmatprep.subr.mxu0 0.0
    %2145 = vmatpush2.msra.mxu0 0.0
    %2146 = vmatprep.subr.mxu0 0.0
    %2147 = vmatpush2.msra.mxu0 0.0
    %2148 = vmatprep.subr.mxu0 0.0
    %2149 = vmatpush2.msra.mxu0 0.0
    %2150 = vmatprep.mubr.f32.mxu0 0.0
    %2151 = vmatmul.mubr.f32.gmra.mxu0 %v2084
    %v2152 = vpop.f32.mrf.mxu0
    %v2153 = vadd.f32 0.0, %v2152
    %v2154 = vpop.f32.mrf.mxu0
    %2155 = vdwg.mxu0
    %v2156 = vadd.f32 %v2005, %v2153
    %v2158 = vsel %vm992, %v1700, 0
    %2160 = vmatprep.subr.mxu0 0.0
    %2161 = vmatpush1.msra.mxu0 0.0
    %2162 = vmatprep.subr.mxu0 0.0
    %2163 = vmatpush1.msra.mxu0 0.0
    %2164 = vmatprep.subr.mxu0 0.0
    %2165 = vmatpush1.msra.mxu0 0.0
    %2166 = vmatprep.subr.mxu0 0.0
    %2167 = vmatpush1.msra.mxu0 0.0
    %2168 = vmatprep.subr.mxu0 0.0
    %2169 = vmatpush1.msra.mxu0 0.0
    %2170 = vmatprep.subr.mxu0 0.0
    %2171 = vmatpush1.msra.mxu0 0.0
    %2172 = vmatprep.subr.mxu0 0.0
    %2173 = vmatpush1.msra.mxu0 0.0
    %2174 = vmatprep.subr.mxu0 0.0
    %2175 = vmatpush1.msra.mxu0 0.0
    %2176 = vmatprep.subr.mxu0 0.0
    %2177 = vmatpush1.msra.mxu0 0.0
    %2178 = vmatprep.subr.mxu0 0.0
    %2179 = vmatpush1.msra.mxu0 0.0
    %2180 = vmatprep.subr.mxu0 0.0
    %2181 = vmatpush1.msra.mxu0 0.0
    %2182 = vmatprep.subr.mxu0 0.0
    %2183 = vmatpush1.msra.mxu0 0.0
    %2184 = vmatprep.subr.mxu0 0.0
    %2185 = vmatpush1.msra.mxu0 0.0
    %2186 = vmatprep.subr.mxu0 0.0
    %2187 = vmatpush1.msra.mxu0 0.0
    %2188 = vmatprep.subr.mxu0 0.0
    %2189 = vmatpush1.msra.mxu0 0.0
    %2190 = vmatprep.subr.mxu0 0.0
    %2191 = vmatpush1.msra.mxu0 %v984
    %2192 = vmatprep.subr.mxu0 0.0
    %2193 = vmatpush2.msra.mxu0 0.0
    %2194 = vmatprep.subr.mxu0 0.0
    %2195 = vmatpush2.msra.mxu0 0.0
    %2196 = vmatprep.subr.mxu0 0.0
    %2197 = vmatpush2.msra.mxu0 0.0
    %2198 = vmatprep.subr.mxu0 0.0
    %2199 = vmatpush2.msra.mxu0 0.0
    %2200 = vmatprep.subr.mxu0 0.0
    %2201 = vmatpush2.msra.mxu0 0.0
    %2202 = vmatprep.subr.mxu0 0.0
    %2203 = vmatpush2.msra.mxu0 0.0
    %2204 = vmatprep.subr.mxu0 0.0
    %2205 = vmatpush2.msra.mxu0 0.0
    %2206 = vmatprep.subr.mxu0 0.0
    %2207 = vmatpush2.msra.mxu0 0.0
    %2208 = vmatprep.subr.mxu0 0.0
    %2209 = vmatpush2.msra.mxu0 0.0
    %2210 = vmatprep.subr.mxu0 0.0
    %2211 = vmatpush2.msra.mxu0 0.0
    %2212 = vmatprep.subr.mxu0 0.0
    %2213 = vmatpush2.msra.mxu0 0.0
    %2214 = vmatprep.subr.mxu0 0.0
    %2215 = vmatpush2.msra.mxu0 0.0
    %2216 = vmatprep.subr.mxu0 0.0
    %2217 = vmatpush2.msra.mxu0 0.0
    %2218 = vmatprep.subr.mxu0 0.0
    %2219 = vmatpush2.msra.mxu0 0.0
    %2220 = vmatprep.subr.mxu0 0.0
    %2221 = vmatpush2.msra.mxu0 0.0
    %2222 = vmatprep.subr.mxu0 0.0
    %2223 = vmatpush2.msra.mxu0 0.0
    %2224 = vmatprep.mubr.f32.mxu0 0.0
    %2225 = vmatmul.mubr.f32.gmra.mxu0 %v2158
    %v2226 = vpop.f32.mrf.mxu0
    %v2227 = vadd.f32 0.0, %v2226
    %v2228 = vpop.f32.mrf.mxu0
    %2229 = vdwg.mxu0
    %s2230 = scalar_lea.vmem %s4, 24
    %v2231 = vld [vmem:[%s2230] sm:$0xff]
    %v2233 = vsel %vm992, %v2227, 0
    %2235 = vmatprep.subr.mxu0 0.0
    %2236 = vmatpush1.msra.mxu0 0.0
    %2237 = vmatprep.subr.mxu0 0.0
    %2238 = vmatpush1.msra.mxu0 0.0
    %2239 = vmatprep.subr.mxu0 0.0
    %2240 = vmatpush1.msra.mxu0 0.0
    %2241 = vmatprep.subr.mxu0 0.0
    %2242 = vmatpush1.msra.mxu0 0.0
    %2243 = vmatprep.subr.mxu0 0.0
    %2244 = vmatpush1.msra.mxu0 0.0
    %2245 = vmatprep.subr.mxu0 0.0
    %2246 = vmatpush1.msra.mxu0 0.0
    %2247 = vmatprep.subr.mxu0 0.0
    %2248 = vmatpush1.msra.mxu0 0.0
    %2249 = vmatprep.subr.mxu0 0.0
    %2250 = vmatpush1.msra.mxu0 0.0
    %2251 = vmatprep.subr.mxu0 0.0
    %2252 = vmatpush1.msra.mxu0 0.0
    %2253 = vmatprep.subr.mxu0 0.0
    %2254 = vmatpush1.msra.mxu0 0.0
    %2255 = vmatprep.subr.mxu0 0.0
    %2256 = vmatpush1.msra.mxu0 0.0
    %2257 = vmatprep.subr.mxu0 0.0
    %2258 = vmatpush1.msra.mxu0 0.0
    %2259 = vmatprep.subr.mxu0 0.0
    %2260 = vmatpush1.msra.mxu0 0.0
    %2261 = vmatprep.subr.mxu0 0.0
    %2262 = vmatpush1.msra.mxu0 0.0
    %2263 = vmatprep.subr.mxu0 0.0
    %2264 = vmatpush1.msra.mxu0 0.0
    %2265 = vmatprep.subr.mxu0 0.0
    %2266 = vmatpush1.msra.mxu0 %v2231
    %2267 = vmatprep.subr.mxu0 0.0
    %2268 = vmatpush2.msra.mxu0 0.0
    %2269 = vmatprep.subr.mxu0 0.0
    %2270 = vmatpush2.msra.mxu0 0.0
    %2271 = vmatprep.subr.mxu0 0.0
    %2272 = vmatpush2.msra.mxu0 0.0
    %2273 = vmatprep.subr.mxu0 0.0
    %2274 = vmatpush2.msra.mxu0 0.0
    %2275 = vmatprep.subr.mxu0 0.0
    %2276 = vmatpush2.msra.mxu0 0.0
    %2277 = vmatprep.subr.mxu0 0.0
    %2278 = vmatpush2.msra.mxu0 0.0
    %2279 = vmatprep.subr.mxu0 0.0
    %2280 = vmatpush2.msra.mxu0 0.0
    %2281 = vmatprep.subr.mxu0 0.0
    %2282 = vmatpush2.msra.mxu0 0.0
    %2283 = vmatprep.subr.mxu0 0.0
    %2284 = vmatpush2.msra.mxu0 0.0
    %2285 = vmatprep.subr.mxu0 0.0
    %2286 = vmatpush2.msra.mxu0 0.0
    %2287 = vmatprep.subr.mxu0 0.0
    %2288 = vmatpush2.msra.mxu0 0.0
    %2289 = vmatprep.subr.mxu0 0.0
    %2290 = vmatpush2.msra.mxu0 0.0
    %2291 = vmatprep.subr.mxu0 0.0
    %2292 = vmatpush2.msra.mxu0 0.0
    %2293 = vmatprep.subr.mxu0 0.0
    %2294 = vmatpush2.msra.mxu0 0.0
    %2295 = vmatprep.subr.mxu0 0.0
    %2296 = vmatpush2.msra.mxu0 0.0
    %2297 = vmatprep.subr.mxu0 0.0
    %2298 = vmatpush2.msra.mxu0 0.0
    %2299 = vmatprep.mubr.f32.mxu0 0.0
    %2300 = vmatmul.mubr.f32.gmra.mxu0 %v2233
    %v2301 = vpop.f32.mrf.mxu0
    %v2302 = vadd.f32 0.0, %v2301
    %v2303 = vpop.f32.mrf.mxu0
    %2304 = vdwg.mxu0
    %v2305 = vadd.f32 %v2156, %v2302
    %v2307 = vsel %vm992, %v1701, 0
    %2309 = vmatprep.subr.mxu0 0.0
    %2310 = vmatpush1.msra.mxu0 0.0
    %2311 = vmatprep.subr.mxu0 0.0
    %2312 = vmatpush1.msra.mxu0 0.0
    %2313 = vmatprep.subr.mxu0 0.0
    %2314 = vmatpush1.msra.mxu0 0.0
    %2315 = vmatprep.subr.mxu0 0.0
    %2316 = vmatpush1.msra.mxu0 0.0
    %2317 = vmatprep.subr.mxu0 0.0
    %2318 = vmatpush1.msra.mxu0 0.0
    %2319 = vmatprep.subr.mxu0 0.0
    %2320 = vmatpush1.msra.mxu0 0.0
    %2321 = vmatprep.subr.mxu0 0.0
    %2322 = vmatpush1.msra.mxu0 0.0
    %2323 = vmatprep.subr.mxu0 0.0
    %2324 = vmatpush1.msra.mxu0 0.0
    %2325 = vmatprep.subr.mxu0 0.0
    %2326 = vmatpush1.msra.mxu0 0.0
    %2327 = vmatprep.subr.mxu0 0.0
    %2328 = vmatpush1.msra.mxu0 0.0
    %2329 = vmatprep.subr.mxu0 0.0
    %2330 = vmatpush1.msra.mxu0 0.0
    %2331 = vmatprep.subr.mxu0 0.0
    %2332 = vmatpush1.msra.mxu0 0.0
    %2333 = vmatprep.subr.mxu0 0.0
    %2334 = vmatpush1.msra.mxu0 0.0
    %2335 = vmatprep.subr.mxu0 0.0
    %2336 = vmatpush1.msra.mxu0 0.0
    %2337 = vmatprep.subr.mxu0 0.0
    %2338 = vmatpush1.msra.mxu0 0.0
    %2339 = vmatprep.subr.mxu0 0.0
    %2340 = vmatpush1.msra.mxu0 %v749
    %2341 = vmatprep.subr.mxu0 0.0
    %2342 = vmatpush2.msra.mxu0 0.0
    %2343 = vmatprep.subr.mxu0 0.0
    %2344 = vmatpush2.msra.mxu0 0.0
    %2345 = vmatprep.subr.mxu0 0.0
    %2346 = vmatpush2.msra.mxu0 0.0
    %2347 = vmatprep.subr.mxu0 0.0
    %2348 = vmatpush2.msra.mxu0 0.0
    %2349 = vmatprep.subr.mxu0 0.0
    %2350 = vmatpush2.msra.mxu0 0.0
    %2351 = vmatprep.subr.mxu0 0.0
    %2352 = vmatpush2.msra.mxu0 0.0
    %2353 = vmatprep.subr.mxu0 0.0
    %2354 = vmatpush2.msra.mxu0 0.0
    %2355 = vmatprep.subr.mxu0 0.0
    %2356 = vmatpush2.msra.mxu0 0.0
    %2357 = vmatprep.subr.mxu0 0.0
    %2358 = vmatpush2.msra.mxu0 0.0
    %2359 = vmatprep.subr.mxu0 0.0
    %2360 = vmatpush2.msra.mxu0 0.0
    %2361 = vmatprep.subr.mxu0 0.0
    %2362 = vmatpush2.msra.mxu0 0.0
    %2363 = vmatprep.subr.mxu0 0.0
    %2364 = vmatpush2.msra.mxu0 0.0
    %2365 = vmatprep.subr.mxu0 0.0
    %2366 = vmatpush2.msra.mxu0 0.0
    %2367 = vmatprep.subr.mxu0 0.0
    %2368 = vmatpush2.msra.mxu0 0.0
    %2369 = vmatprep.subr.mxu0 0.0
    %2370 = vmatpush2.msra.mxu0 0.0
    %2371 = vmatprep.subr.mxu0 0.0
    %2372 = vmatpush2.msra.mxu0 0.0
    %2373 = vmatprep.mubr.f32.mxu0 0.0
    %2374 = vmatmul.mubr.f32.gmra.mxu0 %v2307
    %v2375 = vpop.f32.mrf.mxu0
    %v2376 = vadd.f32 0.0, %v2375
    %v2377 = vpop.f32.mrf.mxu0
    %2378 = vdwg.mxu0
    %v2380 = vsel %vm992, %v1702, 0
    %2382 = vmatprep.subr.mxu0 0.0
    %2383 = vmatpush1.msra.mxu0 0.0
    %2384 = vmatprep.subr.mxu0 0.0
    %2385 = vmatpush1.msra.mxu0 0.0
    %2386 = vmatprep.subr.mxu0 0.0
    %2387 = vmatpush1.msra.mxu0 0.0
    %2388 = vmatprep.subr.mxu0 0.0
    %2389 = vmatpush1.msra.mxu0 0.0
    %2390 = vmatprep.subr.mxu0 0.0
    %2391 = vmatpush1.msra.mxu0 0.0
    %2392 = vmatprep.subr.mxu0 0.0
    %2393 = vmatpush1.msra.mxu0 0.0
    %2394 = vmatprep.subr.mxu0 0.0
    %2395 = vmatpush1.msra.mxu0 0.0
    %2396 = vmatprep.subr.mxu0 0.0
    %2397 = vmatpush1.msra.mxu0 0.0
    %2398 = vmatprep.subr.mxu0 0.0
    %2399 = vmatpush1.msra.mxu0 0.0
    %2400 = vmatprep.subr.mxu0 0.0
    %2401 = vmatpush1.msra.mxu0 0.0
    %2402 = vmatprep.subr.mxu0 0.0
    %2403 = vmatpush1.msra.mxu0 0.0
    %2404 = vmatprep.subr.mxu0 0.0
    %2405 = vmatpush1.msra.mxu0 0.0
    %2406 = vmatprep.subr.mxu0 0.0
    %2407 = vmatpush1.msra.mxu0 0.0
    %2408 = vmatprep.subr.mxu0 0.0
    %2409 = vmatpush1.msra.mxu0 0.0
    %2410 = vmatprep.subr.mxu0 0.0
    %2411 = vmatpush1.msra.mxu0 0.0
    %2412 = vmatprep.subr.mxu0 0.0
    %2413 = vmatpush1.msra.mxu0 %v829
    %2414 = vmatprep.subr.mxu0 0.0
    %2415 = vmatpush2.msra.mxu0 0.0
    %2416 = vmatprep.subr.mxu0 0.0
    %2417 = vmatpush2.msra.mxu0 0.0
    %2418 = vmatprep.subr.mxu0 0.0
    %2419 = vmatpush2.msra.mxu0 0.0
    %2420 = vmatprep.subr.mxu0 0.0
    %2421 = vmatpush2.msra.mxu0 0.0
    %2422 = vmatprep.subr.mxu0 0.0
    %2423 = vmatpush2.msra.mxu0 0.0
    %2424 = vmatprep.subr.mxu0 0.0
    %2425 = vmatpush2.msra.mxu0 0.0
    %2426 = vmatprep.subr.mxu0 0.0
    %2427 = vmatpush2.msra.mxu0 0.0
    %2428 = vmatprep.subr.mxu0 0.0
    %2429 = vmatpush2.msra.mxu0 0.0
    %2430 = vmatprep.subr.mxu0 0.0
    %2431 = vmatpush2.msra.mxu0 0.0
    %2432 = vmatprep.subr.mxu0 0.0
    %2433 = vmatpush2.msra.mxu0 0.0
    %2434 = vmatprep.subr.mxu0 0.0
    %2435 = vmatpush2.msra.mxu0 0.0
    %2436 = vmatprep.subr.mxu0 0.0
    %2437 = vmatpush2.msra.mxu0 0.0
    %2438 = vmatprep.subr.mxu0 0.0
    %2439 = vmatpush2.msra.mxu0 0.0
    %2440 = vmatprep.subr.mxu0 0.0
    %2441 = vmatpush2.msra.mxu0 0.0
    %2442 = vmatprep.subr.mxu0 0.0
    %2443 = vmatpush2.msra.mxu0 0.0
    %2444 = vmatprep.subr.mxu0 0.0
    %2445 = vmatpush2.msra.mxu0 0.0
    %2446 = vmatprep.mubr.f32.mxu0 0.0
    %2447 = vmatmul.mubr.f32.gmra.mxu0 %v2380
    %v2448 = vpop.f32.mrf.mxu0
    %v2449 = vadd.f32 0.0, %v2448
    %v2450 = vpop.f32.mrf.mxu0
    %2451 = vdwg.mxu0
    %v2453 = vsel %vm992, %v2449, 0
    %2455 = vmatprep.subr.mxu0 0.0
    %2456 = vmatpush1.msra.mxu0 0.0
    %2457 = vmatprep.subr.mxu0 0.0
    %2458 = vmatpush1.msra.mxu0 0.0
    %2459 = vmatprep.subr.mxu0 0.0
    %2460 = vmatpush1.msra.mxu0 0.0
    %2461 = vmatprep.subr.mxu0 0.0
    %2462 = vmatpush1.msra.mxu0 0.0
    %2463 = vmatprep.subr.mxu0 0.0
    %2464 = vmatpush1.msra.mxu0 0.0
    %2465 = vmatprep.subr.mxu0 0.0
    %2466 = vmatpush1.msra.mxu0 0.0
    %2467 = vmatprep.subr.mxu0 0.0
    %2468 = vmatpush1.msra.mxu0 0.0
    %2469 = vmatprep.subr.mxu0 0.0
    %2470 = vmatpush1.msra.mxu0 0.0
    %2471 = vmatprep.subr.mxu0 0.0
    %2472 = vmatpush1.msra.mxu0 0.0
    %2473 = vmatprep.subr.mxu0 0.0
    %2474 = vmatpush1.msra.mxu0 0.0
    %2475 = vmatprep.subr.mxu0 0.0
    %2476 = vmatpush1.msra.mxu0 0.0
    %2477 = vmatprep.subr.mxu0 0.0
    %2478 = vmatpush1.msra.mxu0 0.0
    %2479 = vmatprep.subr.mxu0 0.0
    %2480 = vmatpush1.msra.mxu0 0.0
    %2481 = vmatprep.subr.mxu0 0.0
    %2482 = vmatpush1.msra.mxu0 0.0
    %2483 = vmatprep.subr.mxu0 0.0
    %2484 = vmatpush1.msra.mxu0 0.0
    %2485 = vmatprep.subr.mxu0 0.0
    %2486 = vmatpush1.msra.mxu0 %v1861
    %2487 = vmatprep.subr.mxu0 0.0
    %2488 = vmatpush2.msra.mxu0 0.0
    %2489 = vmatprep.subr.mxu0 0.0
    %2490 = vmatpush2.msra.mxu0 0.0
    %2491 = vmatprep.subr.mxu0 0.0
    %2492 = vmatpush2.msra.mxu0 0.0
    %2493 = vmatprep.subr.mxu0 0.0
    %2494 = vmatpush2.msra.mxu0 0.0
    %2495 = vmatprep.subr.mxu0 0.0
    %2496 = vmatpush2.msra.mxu0 0.0
    %2497 = vmatprep.subr.mxu0 0.0
    %2498 = vmatpush2.msra.mxu0 0.0
    %2499 = vmatprep.subr.mxu0 0.0
    %2500 = vmatpush2.msra.mxu0 0.0
    %2501 = vmatprep.subr.mxu0 0.0
    %2502 = vmatpush2.msra.mxu0 0.0
    %2503 = vmatprep.subr.mxu0 0.0
    %2504 = vmatpush2.msra.mxu0 0.0
    %2505 = vmatprep.subr.mxu0 0.0
    %2506 = vmatpush2.msra.mxu0 0.0
    %2507 = vmatprep.subr.mxu0 0.0
    %2508 = vmatpush2.msra.mxu0 0.0
    %2509 = vmatprep.subr.mxu0 0.0
    %2510 = vmatpush2.msra.mxu0 0.0
    %2511 = vmatprep.subr.mxu0 0.0
    %2512 = vmatpush2.msra.mxu0 0.0
    %2513 = vmatprep.subr.mxu0 0.0
    %2514 = vmatpush2.msra.mxu0 0.0
    %2515 = vmatprep.subr.mxu0 0.0
    %2516 = vmatpush2.msra.mxu0 0.0
    %2517 = vmatprep.subr.mxu0 0.0
    %2518 = vmatpush2.msra.mxu0 0.0
    %2519 = vmatprep.mubr.f32.mxu0 0.0
    %2520 = vmatmul.mubr.f32.gmra.mxu0 %v2453
    %v2521 = vpop.f32.mrf.mxu0
    %v2522 = vadd.f32 0.0, %v2521
    %v2523 = vpop.f32.mrf.mxu0
    %2524 = vdwg.mxu0
    %v2526 = vsel %vm992, %v2376, 0
    %2528 = vmatprep.subr.mxu0 0.0
    %2529 = vmatpush1.msra.mxu0 0.0
    %2530 = vmatprep.subr.mxu0 0.0
    %2531 = vmatpush1.msra.mxu0 0.0
    %2532 = vmatprep.subr.mxu0 0.0
    %2533 = vmatpush1.msra.mxu0 0.0
    %2534 = vmatprep.subr.mxu0 0.0
    %2535 = vmatpush1.msra.mxu0 0.0
    %2536 = vmatprep.subr.mxu0 0.0
    %2537 = vmatpush1.msra.mxu0 0.0
    %2538 = vmatprep.subr.mxu0 0.0
    %2539 = vmatpush1.msra.mxu0 0.0
    %2540 = vmatprep.subr.mxu0 0.0
    %2541 = vmatpush1.msra.mxu0 0.0
    %2542 = vmatprep.subr.mxu0 0.0
    %2543 = vmatpush1.msra.mxu0 0.0
    %2544 = vmatprep.subr.mxu0 0.0
    %2545 = vmatpush1.msra.mxu0 0.0
    %2546 = vmatprep.subr.mxu0 0.0
    %2547 = vmatpush1.msra.mxu0 0.0
    %2548 = vmatprep.subr.mxu0 0.0
    %2549 = vmatpush1.msra.mxu0 0.0
    %2550 = vmatprep.subr.mxu0 0.0
    %2551 = vmatpush1.msra.mxu0 0.0
    %2552 = vmatprep.subr.mxu0 0.0
    %2553 = vmatpush1.msra.mxu0 0.0
    %2554 = vmatprep.subr.mxu0 0.0
    %2555 = vmatpush1.msra.mxu0 0.0
    %2556 = vmatprep.subr.mxu0 0.0
    %2557 = vmatpush1.msra.mxu0 0.0
    %2558 = vmatprep.subr.mxu0 0.0
    %2559 = vmatpush1.msra.mxu0 %v1786
    %2560 = vmatprep.subr.mxu0 0.0
    %2561 = vmatpush2.msra.mxu0 0.0
    %2562 = vmatprep.subr.mxu0 0.0
    %2563 = vmatpush2.msra.mxu0 0.0
    %2564 = vmatprep.subr.mxu0 0.0
    %2565 = vmatpush2.msra.mxu0 0.0
    %2566 = vmatprep.subr.mxu0 0.0
    %2567 = vmatpush2.msra.mxu0 0.0
    %2568 = vmatprep.subr.mxu0 0.0
    %2569 = vmatpush2.msra.mxu0 0.0
    %2570 = vmatprep.subr.mxu0 0.0
    %2571 = vmatpush2.msra.mxu0 0.0
    %2572 = vmatprep.subr.mxu0 0.0
    %2573 = vmatpush2.msra.mxu0 0.0
    %2574 = vmatprep.subr.mxu0 0.0
    %2575 = vmatpush2.msra.mxu0 0.0
    %2576 = vmatprep.subr.mxu0 0.0
    %2577 = vmatpush2.msra.mxu0 0.0
    %2578 = vmatprep.subr.mxu0 0.0
    %2579 = vmatpush2.msra.mxu0 0.0
    %2580 = vmatprep.subr.mxu0 0.0
    %2581 = vmatpush2.msra.mxu0 0.0
    %2582 = vmatprep.subr.mxu0 0.0
    %2583 = vmatpush2.msra.mxu0 0.0
    %2584 = vmatprep.subr.mxu0 0.0
    %2585 = vmatpush2.msra.mxu0 0.0
    %2586 = vmatprep.subr.mxu0 0.0
    %2587 = vmatpush2.msra.mxu0 0.0
    %2588 = vmatprep.subr.mxu0 0.0
    %2589 = vmatpush2.msra.mxu0 0.0
    %2590 = vmatprep.subr.mxu0 0.0
    %2591 = vmatpush2.msra.mxu0 0.0
    %2592 = vmatprep.mubr.f32.mxu0 0.0
    %2593 = vmatmul.mubr.f32.gmra.mxu0 %v2526
    %v2594 = vpop.f32.mrf.mxu0
    %v2595 = vadd.f32 %v2522, %v2594
    %v2596 = vpop.f32.mrf.mxu0
    %2597 = vdwg.mxu0
    %v2599 = vsel %vm992, %v1703, 0
    %2601 = vmatprep.subr.mxu0 0.0
    %2602 = vmatpush1.msra.mxu0 0.0
    %2603 = vmatprep.subr.mxu0 0.0
    %2604 = vmatpush1.msra.mxu0 0.0
    %2605 = vmatprep.subr.mxu0 0.0
    %2606 = vmatpush1.msra.mxu0 0.0
    %2607 = vmatprep.subr.mxu0 0.0
    %2608 = vmatpush1.msra.mxu0 0.0
    %2609 = vmatprep.subr.mxu0 0.0
    %2610 = vmatpush1.msra.mxu0 0.0
    %2611 = vmatprep.subr.mxu0 0.0
    %2612 = vmatpush1.msra.mxu0 0.0
    %2613 = vmatprep.subr.mxu0 0.0
    %2614 = vmatpush1.msra.mxu0 0.0
    %2615 = vmatprep.subr.mxu0 0.0
    %2616 = vmatpush1.msra.mxu0 0.0
    %2617 = vmatprep.subr.mxu0 0.0
    %2618 = vmatpush1.msra.mxu0 0.0
    %2619 = vmatprep.subr.mxu0 0.0
    %2620 = vmatpush1.msra.mxu0 0.0
    %2621 = vmatprep.subr.mxu0 0.0
    %2622 = vmatpush1.msra.mxu0 0.0
    %2623 = vmatprep.subr.mxu0 0.0
    %2624 = vmatpush1.msra.mxu0 0.0
    %2625 = vmatprep.subr.mxu0 0.0
    %2626 = vmatpush1.msra.mxu0 0.0
    %2627 = vmatprep.subr.mxu0 0.0
    %2628 = vmatpush1.msra.mxu0 0.0
    %2629 = vmatprep.subr.mxu0 0.0
    %2630 = vmatpush1.msra.mxu0 0.0
    %2631 = vmatprep.subr.mxu0 0.0
    %2632 = vmatpush1.msra.mxu0 %v909
    %2633 = vmatprep.subr.mxu0 0.0
    %2634 = vmatpush2.msra.mxu0 0.0
    %2635 = vmatprep.subr.mxu0 0.0
    %2636 = vmatpush2.msra.mxu0 0.0
    %2637 = vmatprep.subr.mxu0 0.0
    %2638 = vmatpush2.msra.mxu0 0.0
    %2639 = vmatprep.subr.mxu0 0.0
    %2640 = vmatpush2.msra.mxu0 0.0
    %2641 = vmatprep.subr.mxu0 0.0
    %2642 = vmatpush2.msra.mxu0 0.0
    %2643 = vmatprep.subr.mxu0 0.0
    %2644 = vmatpush2.msra.mxu0 0.0
    %2645 = vmatprep.subr.mxu0 0.0
    %2646 = vmatpush2.msra.mxu0 0.0
    %2647 = vmatprep.subr.mxu0 0.0
    %2648 = vmatpush2.msra.mxu0 0.0
    %2649 = vmatprep.subr.mxu0 0.0
    %2650 = vmatpush2.msra.mxu0 0.0
    %2651 = vmatprep.subr.mxu0 0.0
    %2652 = vmatpush2.msra.mxu0 0.0
    %2653 = vmatprep.subr.mxu0 0.0
    %2654 = vmatpush2.msra.mxu0 0.0
    %2655 = vmatprep.subr.mxu0 0.0
    %2656 = vmatpush2.msra.mxu0 0.0
    %2657 = vmatprep.subr.mxu0 0.0
    %2658 = vmatpush2.msra.mxu0 0.0
    %2659 = vmatprep.subr.mxu0 0.0
    %2660 = vmatpush2.msra.mxu0 0.0
    %2661 = vmatprep.subr.mxu0 0.0
    %2662 = vmatpush2.msra.mxu0 0.0
    %2663 = vmatprep.subr.mxu0 0.0
    %2664 = vmatpush2.msra.mxu0 0.0
    %2665 = vmatprep.mubr.f32.mxu0 0.0
    %2666 = vmatmul.mubr.f32.gmra.mxu0 %v2599
    %v2667 = vpop.f32.mrf.mxu0
    %v2668 = vadd.f32 0.0, %v2667
    %v2669 = vpop.f32.mrf.mxu0
    %2670 = vdwg.mxu0
    %v2672 = vsel %vm992, %v2668, 0
    %2674 = vmatprep.subr.mxu0 0.0
    %2675 = vmatpush1.msra.mxu0 0.0
    %2676 = vmatprep.subr.mxu0 0.0
    %2677 = vmatpush1.msra.mxu0 0.0
    %2678 = vmatprep.subr.mxu0 0.0
    %2679 = vmatpush1.msra.mxu0 0.0
    %2680 = vmatprep.subr.mxu0 0.0
    %2681 = vmatpush1.msra.mxu0 0.0
    %2682 = vmatprep.subr.mxu0 0.0
    %2683 = vmatpush1.msra.mxu0 0.0
    %2684 = vmatprep.subr.mxu0 0.0
    %2685 = vmatpush1.msra.mxu0 0.0
    %2686 = vmatprep.subr.mxu0 0.0
    %2687 = vmatpush1.msra.mxu0 0.0
    %2688 = vmatprep.subr.mxu0 0.0
    %2689 = vmatpush1.msra.mxu0 0.0
    %2690 = vmatprep.subr.mxu0 0.0
    %2691 = vmatpush1.msra.mxu0 0.0
    %2692 = vmatprep.subr.mxu0 0.0
    %2693 = vmatpush1.msra.mxu0 0.0
    %2694 = vmatprep.subr.mxu0 0.0
    %2695 = vmatpush1.msra.mxu0 0.0
    %2696 = vmatprep.subr.mxu0 0.0
    %2697 = vmatpush1.msra.mxu0 0.0
    %2698 = vmatprep.subr.mxu0 0.0
    %2699 = vmatpush1.msra.mxu0 0.0
    %2700 = vmatprep.subr.mxu0 0.0
    %2701 = vmatpush1.msra.mxu0 0.0
    %2702 = vmatprep.subr.mxu0 0.0
    %2703 = vmatpush1.msra.mxu0 0.0
    %2704 = vmatprep.subr.mxu0 0.0
    %2705 = vmatpush1.msra.mxu0 %v2082
    %2706 = vmatprep.subr.mxu0 0.0
    %2707 = vmatpush2.msra.mxu0 0.0
    %2708 = vmatprep.subr.mxu0 0.0
    %2709 = vmatpush2.msra.mxu0 0.0
    %2710 = vmatprep.subr.mxu0 0.0
    %2711 = vmatpush2.msra.mxu0 0.0
    %2712 = vmatprep.subr.mxu0 0.0
    %2713 = vmatpush2.msra.mxu0 0.0
    %2714 = vmatprep.subr.mxu0 0.0
    %2715 = vmatpush2.msra.mxu0 0.0
    %2716 = vmatprep.subr.mxu0 0.0
    %2717 = vmatpush2.msra.mxu0 0.0
    %2718 = vmatprep.subr.mxu0 0.0
    %2719 = vmatpush2.msra.mxu0 0.0
    %2720 = vmatprep.subr.mxu0 0.0
    %2721 = vmatpush2.msra.mxu0 0.0
    %2722 = vmatprep.subr.mxu0 0.0
    %2723 = vmatpush2.msra.mxu0 0.0
    %2724 = vmatprep.subr.mxu0 0.0
    %2725 = vmatpush2.msra.mxu0 0.0
    %2726 = vmatprep.subr.mxu0 0.0
    %2727 = vmatpush2.msra.mxu0 0.0
    %2728 = vmatprep.subr.mxu0 0.0
    %2729 = vmatpush2.msra.mxu0 0.0
    %2730 = vmatprep.subr.mxu0 0.0
    %2731 = vmatpush2.msra.mxu0 0.0
    %2732 = vmatprep.subr.mxu0 0.0
    %2733 = vmatpush2.msra.mxu0 0.0
    %2734 = vmatprep.subr.mxu0 0.0
    %2735 = vmatpush2.msra.mxu0 0.0
    %2736 = vmatprep.subr.mxu0 0.0
    %2737 = vmatpush2.msra.mxu0 0.0
    %2738 = vmatprep.mubr.f32.mxu0 0.0
    %2739 = vmatmul.mubr.f32.gmra.mxu0 %v2672
    %v2740 = vpop.f32.mrf.mxu0
    %v2741 = vadd.f32 0.0, %v2740
    %v2742 = vpop.f32.mrf.mxu0
    %2743 = vdwg.mxu0
    %v2744 = vadd.f32 %v2595, %v2741
    %v2746 = vsel %vm992, %v1704, 0
    %2748 = vmatprep.subr.mxu0 0.0
    %2749 = vmatpush1.msra.mxu0 0.0
    %2750 = vmatprep.subr.mxu0 0.0
    %2751 = vmatpush1.msra.mxu0 0.0
    %2752 = vmatprep.subr.mxu0 0.0
    %2753 = vmatpush1.msra.mxu0 0.0
    %2754 = vmatprep.subr.mxu0 0.0
    %2755 = vmatpush1.msra.mxu0 0.0
    %2756 = vmatprep.subr.mxu0 0.0
    %2757 = vmatpush1.msra.mxu0 0.0
    %2758 = vmatprep.subr.mxu0 0.0
    %2759 = vmatpush1.msra.mxu0 0.0
    %2760 = vmatprep.subr.mxu0 0.0
    %2761 = vmatpush1.msra.mxu0 0.0
    %2762 = vmatprep.subr.mxu0 0.0
    %2763 = vmatpush1.msra.mxu0 0.0
    %2764 = vmatprep.subr.mxu0 0.0
    %2765 = vmatpush1.msra.mxu0 0.0
    %2766 = vmatprep.subr.mxu0 0.0
    %2767 = vmatpush1.msra.mxu0 0.0
    %2768 = vmatprep.subr.mxu0 0.0
    %2769 = vmatpush1.msra.mxu0 0.0
    %2770 = vmatprep.subr.mxu0 0.0
    %2771 = vmatpush1.msra.mxu0 0.0
    %2772 = vmatprep.subr.mxu0 0.0
    %2773 = vmatpush1.msra.mxu0 0.0
    %2774 = vmatprep.subr.mxu0 0.0
    %2775 = vmatpush1.msra.mxu0 0.0
    %2776 = vmatprep.subr.mxu0 0.0
    %2777 = vmatpush1.msra.mxu0 0.0
    %2778 = vmatprep.subr.mxu0 0.0
    %2779 = vmatpush1.msra.mxu0 %v989
    %2780 = vmatprep.subr.mxu0 0.0
    %2781 = vmatpush2.msra.mxu0 0.0
    %2782 = vmatprep.subr.mxu0 0.0
    %2783 = vmatpush2.msra.mxu0 0.0
    %2784 = vmatprep.subr.mxu0 0.0
    %2785 = vmatpush2.msra.mxu0 0.0
    %2786 = vmatprep.subr.mxu0 0.0
    %2787 = vmatpush2.msra.mxu0 0.0
    %2788 = vmatprep.subr.mxu0 0.0
    %2789 = vmatpush2.msra.mxu0 0.0
    %2790 = vmatprep.subr.mxu0 0.0
    %2791 = vmatpush2.msra.mxu0 0.0
    %2792 = vmatprep.subr.mxu0 0.0
    %2793 = vmatpush2.msra.mxu0 0.0
    %2794 = vmatprep.subr.mxu0 0.0
    %2795 = vmatpush2.msra.mxu0 0.0
    %2796 = vmatprep.subr.mxu0 0.0
    %2797 = vmatpush2.msra.mxu0 0.0
    %2798 = vmatprep.subr.mxu0 0.0
    %2799 = vmatpush2.msra.mxu0 0.0
    %2800 = vmatprep.subr.mxu0 0.0
    %2801 = vmatpush2.msra.mxu0 0.0
    %2802 = vmatprep.subr.mxu0 0.0
    %2803 = vmatpush2.msra.mxu0 0.0
    %2804 = vmatprep.subr.mxu0 0.0
    %2805 = vmatpush2.msra.mxu0 0.0
    %2806 = vmatprep.subr.mxu0 0.0
    %2807 = vmatpush2.msra.mxu0 0.0
    %2808 = vmatprep.subr.mxu0 0.0
    %2809 = vmatpush2.msra.mxu0 0.0
    %2810 = vmatprep.subr.mxu0 0.0
    %2811 = vmatpush2.msra.mxu0 0.0
    %2812 = vmatprep.mubr.f32.mxu0 0.0
    %2813 = vmatmul.mubr.f32.gmra.mxu0 %v2746
    %v2814 = vpop.f32.mrf.mxu0
    %v2815 = vadd.f32 0.0, %v2814
    %v2816 = vpop.f32.mrf.mxu0
    %2817 = vdwg.mxu0
    %v2819 = vsel %vm992, %v2815, 0
    %2821 = vmatprep.subr.mxu0 0.0
    %2822 = vmatpush1.msra.mxu0 0.0
    %2823 = vmatprep.subr.mxu0 0.0
    %2824 = vmatpush1.msra.mxu0 0.0
    %2825 = vmatprep.subr.mxu0 0.0
    %2826 = vmatpush1.msra.mxu0 0.0
    %2827 = vmatprep.subr.mxu0 0.0
    %2828 = vmatpush1.msra.mxu0 0.0
    %2829 = vmatprep.subr.mxu0 0.0
    %2830 = vmatpush1.msra.mxu0 0.0
    %2831 = vmatprep.subr.mxu0 0.0
    %2832 = vmatpush1.msra.mxu0 0.0
    %2833 = vmatprep.subr.mxu0 0.0
    %2834 = vmatpush1.msra.mxu0 0.0
    %2835 = vmatprep.subr.mxu0 0.0
    %2836 = vmatpush1.msra.mxu0 0.0
    %2837 = vmatprep.subr.mxu0 0.0
    %2838 = vmatpush1.msra.mxu0 0.0
    %2839 = vmatprep.subr.mxu0 0.0
    %2840 = vmatpush1.msra.mxu0 0.0
    %2841 = vmatprep.subr.mxu0 0.0
    %2842 = vmatpush1.msra.mxu0 0.0
    %2843 = vmatprep.subr.mxu0 0.0
    %2844 = vmatpush1.msra.mxu0 0.0
    %2845 = vmatprep.subr.mxu0 0.0
    %2846 = vmatpush1.msra.mxu0 0.0
    %2847 = vmatprep.subr.mxu0 0.0
    %2848 = vmatpush1.msra.mxu0 0.0
    %2849 = vmatprep.subr.mxu0 0.0
    %2850 = vmatpush1.msra.mxu0 0.0
    %2851 = vmatprep.subr.mxu0 0.0
    %2852 = vmatpush1.msra.mxu0 %v2231
    %2853 = vmatprep.subr.mxu0 0.0
    %2854 = vmatpush2.msra.mxu0 0.0
    %2855 = vmatprep.subr.mxu0 0.0
    %2856 = vmatpush2.msra.mxu0 0.0
    %2857 = vmatprep.subr.mxu0 0.0
    %2858 = vmatpush2.msra.mxu0 0.0
    %2859 = vmatprep.subr.mxu0 0.0
    %2860 = vmatpush2.msra.mxu0 0.0
    %2861 = vmatprep.subr.mxu0 0.0
    %2862 = vmatpush2.msra.mxu0 0.0
    %2863 = vmatprep.subr.mxu0 0.0
    %2864 = vmatpush2.msra.mxu0 0.0
    %2865 = vmatprep.subr.mxu0 0.0
    %2866 = vmatpush2.msra.mxu0 0.0
    %2867 = vmatprep.subr.mxu0 0.0
    %2868 = vmatpush2.msra.mxu0 0.0
    %2869 = vmatprep.subr.mxu0 0.0
    %2870 = vmatpush2.msra.mxu0 0.0
    %2871 = vmatprep.subr.mxu0 0.0
    %2872 = vmatpush2.msra.mxu0 0.0
    %2873 = vmatprep.subr.mxu0 0.0
    %2874 = vmatpush2.msra.mxu0 0.0
    %2875 = vmatprep.subr.mxu0 0.0
    %2876 = vmatpush2.msra.mxu0 0.0
    %2877 = vmatprep.subr.mxu0 0.0
    %2878 = vmatpush2.msra.mxu0 0.0
    %2879 = vmatprep.subr.mxu0 0.0
    %2880 = vmatpush2.msra.mxu0 0.0
    %2881 = vmatprep.subr.mxu0 0.0
    %2882 = vmatpush2.msra.mxu0 0.0
    %2883 = vmatprep.subr.mxu0 0.0
    %2884 = vmatpush2.msra.mxu0 0.0
    %2885 = vmatprep.mubr.f32.mxu0 0.0
    %2886 = vmatmul.mubr.f32.gmra.mxu0 %v2819
    %v2887 = vpop.f32.mrf.mxu0
    %v2888 = vadd.f32 0.0, %v2887
    %v2889 = vpop.f32.mrf.mxu0
    %2890 = vdwg.mxu0
    %v2891 = vadd.f32 %v2744, %v2888
    %2892 = vst.msk [vmem:[#allocation2] sm:$0xff] %vm32, %v2305
    %2893 = vst.msk [vmem:[#allocation2 + $0x8] sm:$0xff] %vm32, %v2891
    // Predicated region
    $region26: #{tpu_custom_call.1} parent=1 // pred_check
      _
    $region27: #{tpu_custom_call.1} parent=1 // pred_check_branch
      %2895 = sbr.rel (0) target = $region29
    $region28: #{tpu_custom_call.1} parent=1 // pred_region
      %s2897 = ssub.s32 256, 256
      %2898 = vsyncadd [#allocation3], %s2897
      %s2899 = sshll.u32 [#allocation2], 4
      %s2900 = int_to_ptr.vmem [resolvable:$true] %s2899
      %2905 = dma.vmem_to_hbm [thread:$0]  %s2900, 256, %s6, [#allocation3], 128, 128, 8
    $region29: #{tpu_custom_call.1} parent=1 // pred_fallthru
      _
    // Predicated region
    $region30: #{tpu_custom_call.1} parent=1 // pred_check
      _
    $region31: #{tpu_custom_call.1} parent=1 // pred_check_branch
      %2907 = sbr.rel (0) target = $region33
    $region32: #{tpu_custom_call.1} parent=1 // pred_region
      _
    $region33: #{tpu_custom_call.1} parent=1 // pred_fallthru
      _
    // Predicated region
    $region34: #{tpu_custom_call.1} parent=1 // pred_check
      _
    $region35: #{tpu_custom_call.1} parent=1 // pred_check_branch
      %2909 = sbr.rel (0) target = $region37
    $region36: #{tpu_custom_call.1} parent=1 // pred_region
      %2910 = dma.done [#allocation3], 256
    $region37: #{tpu_custom_call.1} parent=1 // pred_fallthru
      _
    // Predicated region
    $region38: #{tpu_custom_call.1} parent=1 // pred_check
      _
    $region39: #{tpu_custom_call.1} parent=1 // pred_check_branch
      %2912 = sbr.rel (0) target = $region41
    $region40: #{tpu_custom_call.1} parent=1 // pred_region
      _
    $region41: #{tpu_custom_call.1} parent=1 // pred_fallthru
      _
    %2913 = vsyncpa [#allocation3], 1

</llo_original>
